<compile_context>
chip_gen: v6e
topology: v6e:2x2x1
jax: 0.10.0
libtpu: 0.0.40
codegen_flags: <defaults>
</compile_context>

<pallas_src>
import functools

import jax
import jax.numpy as jnp
import numpy as np
from jax import lax
from jax.experimental import pallas as pl
from jax.experimental.pallas import tpu as pltpu

LANE = 128  # TPU lane width; every padded N dimension is a multiple of this.

_PACK_ORDER = ("t1", "s1", "b1t", "t2", "s2", "b2t",
               "wf1", "bf1", "wf2", "bf2", "wf3", "bf3")

_VMEM = pl.BlockSpec(memory_space=pltpu.MemorySpace.VMEM)


# ----------------------------------------------------------------------------
# Fused kernel: the whole LeNet forward in one Pallas invocation.
# ----------------------------------------------------------------------------
def _lenet_fused_kernel(
    x_ref,             # (B, H, W*Cin)        f32  input (NHWC rows flattened)
    t1_ref,            # (KH, W*Cin, 2*LANE)  bf16 conv1 Toeplitz, even|odd out cols on N
    s1_ref,            # (2*S1P, OH1)         f32  conv1 H-pool row selectors (stacked)
    b1_ref,            # (1, LANE)            f32  conv1 bias tiled over out columns
    t2_ref,            # (KH*LANE, 2*LANE)    bf16 conv2 Toeplitz, taps folded into K
    s2_ref,            # (2*S2P, OH2)         f32
    b2_ref,            # (1, LANE)            f32
    wf1_ref, bf1_ref,  # (PH2*LANE, LANE) bf16, (1, LANE) f32
    wf2_ref, bf2_ref,  # (LANE, LANE) bf16,     (1, LANE) f32
    wf3_ref, bf3_ref,  # (LANE, LANE) f32,      (1, LANE) f32
    out_ref,           # (B, LANE)            f32  padded logits (lane-dense)
    a1_s,              # VMEM (B, S1P, LANE)  f32  per-image stage-1 activations
):
    f32 = jnp.float32
    bf16 = jnp.bfloat16
    B = x_ref.shape[0]
    kh1 = t1_ref.shape[0]
    s1p2, oh1 = s1_ref.shape
    s1p = s1p2 // 2
    s2p2, oh2 = s2_ref.shape
    s2p = s2p2 // 2
    lane = out_ref.shape[1]
    kh2 = t2_ref.shape[0] // lane          # conv2 kernel rows folded into K
    ph2 = wf1_ref.shape[0] // lane         # pooled conv2 height (fc1 row blocks)

    for b in range(B):  # B tiny & static -> unrolled; per-image chains independent
        # ---------- conv1 (+ W-pool folded via even|odd N-concat) ----------
        acc1 = None
        for i in range(kh1):
            row = x_ref[b, i:i + oh1, :].astype(bf16)                 # (OH1, W*Cin)
            p = jnp.dot(row, t1_ref[i], preferred_element_type=f32)   # (OH1, 2*LANE)
            acc1 = p if acc1 is None else acc1 + p
        m1 = jnp.maximum(acc1[:, :lane], acc1[:, lane:])              # W-pool (pre-bias)
        p1s = jnp.dot(s1_ref[...], m1, preferred_element_type=f32)    # (2*S1P, LANE)
        p1 = jnp.maximum(p1s[:s1p, :], p1s[s1p:, :])                  # H-pool
        # relu(pool(conv)+b) == pool(relu(conv+b)); padded lanes stay exactly 0.
        a1_s[b, :, :] = jnp.maximum(p1 + b1_ref[...], 0.0)            # (S1P, LANE)

        # ---------- conv2: taps folded into K -> ONE (OH2, KH*LANE) matmul ----------
        stg = jnp.concatenate(
            [a1_s[b, i:i + oh2, :] for i in range(kh2)], axis=1)      # (OH2, KH*LANE)
        acc2 = jnp.dot(stg.astype(bf16), t2_ref[...],
                       preferred_element_type=f32)                    # (OH2, 2*LANE)
        m2 = jnp.maximum(acc2[:, :lane], acc2[:, lane:])              # (OH2, LANE)
        p2s = jnp.dot(s2_ref[...], m2, preferred_element_type=f32)    # (2*S2P, LANE)
        p2 = jnp.maximum(p2s[:s2p, :], p2s[s2p:, :])                  # (S2P, LANE)
        a2 = jnp.maximum(p2 + b2_ref[...], 0.0)                       # rows >= PH2 unused

        # ---------- fc1 -> fc2 -> fc3 for this image ----------
        # Flatten the PH2 valid rows into one (1, PH2*LANE) row entirely
        # in-register (lane-aligned concat); no masked VMEM scatter stores.
        x_fc = jnp.concatenate([a2[h:h + 1, :] for h in range(ph2)], axis=1)
        h1 = jnp.maximum(
            jnp.dot(x_fc.astype(bf16), wf1_ref[...],
                    preferred_element_type=f32) + bf1_ref[...], 0.0)  # (1, LANE)
        h2 = jnp.maximum(
            jnp.dot(h1.astype(bf16), wf2_ref[...],
                    preferred_element_type=f32) + bf2_ref[...], 0.0)  # (1, LANE)
        out_ref[b:b + 1, :] = (
            jnp.dot(h2, wf3_ref[...], preferred_element_type=f32)
            + bf3_ref[...]).astype(out_ref.dtype)


# ----------------------------------------------------------------------------
# Forward wrapper (single gridless pallas_call; logits sliced from padded out).
# ----------------------------------------------------------------------------
@functools.partial(jax.jit, static_argnames=("n_classes",))
def lenet_forward(packed, x_nchw, *, n_classes=10):
    B, C, H, W = x_nchw.shape
    # NCHW -> NHWC rows flattened to (B, H, W*C): one cheap layout op in XLA.
    x = jnp.transpose(x_nchw, (0, 2, 3, 1)).reshape(B, H, W * C).astype(jnp.float32)

    s1p = packed["s1"].shape[0] // 2
    lane = packed["b1t"].shape[1]

    operands = (x,) + tuple(packed[k] for k in _PACK_ORDER)
    out_pad = pl.pallas_call(
        _lenet_fused_kernel,
        out_shape=jax.ShapeDtypeStruct((B, lane), jnp.float32),
        in_specs=[_VMEM] * len(operands),
        out_specs=_VMEM,
        scratch_shapes=[
            pltpu.VMEM((B, s1p, lane), jnp.float32),   # per-image stage-1 acts
        ],
    )(*operands)
    # Note (v7x / large batch): add grid=(B_blocks,) with per-image BlockSpecs
    # on x/out, constant index_maps on all weights (keep them VMEM-resident),
    # and dimension_semantics=("parallel",) to shard images across both TCs.
    return out_pad[:, :n_classes]


# ----------------------------------------------------------------------------
# Raw (PyTorch-layout) parameter init — deterministic U(-1/sqrt(fan_in), +..).
# ----------------------------------------------------------------------------
def init_lenet_params(key, in_channel=1, out_channel=10, H=32, W=32):
    kh = 5
    oh1, ow1 = H - kh + 1, W - kh + 1
    ph1, pw1 = oh1 // 2, ow1 // 2
    oh2, ow2 = ph1 - kh + 1, pw1 - kh + 1
    ph2, pw2 = oh2 // 2, ow2 // 2
    fc1_in = 16 * ph2 * pw2                      # LazyLinear in-features

    ks = jax.random.split(key, 10)

    def unif(k, shape, fan_in):
        bound = 1.0 / np.sqrt(fan_in)
        return jax.random.uniform(k, shape, jnp.float32, -bound, bound)

    return {
        "w1": unif(ks[0], (6, in_channel, 5, 5), in_channel * 25),
        "b1": unif(ks[1], (6,), in_channel * 25),
        "w2": unif(ks[2], (16, 6, 5, 5), 6 * 25),
        "b2": unif(ks[3], (16,), 6 * 25),
        "wf1": unif(ks[4], (fc1_in, 120), fc1_in),   # stored as (in, out)
        "bf1": unif(ks[5], (120,), fc1_in),
        "wf2": unif(ks[6], (120, 84), 120),
        "bf2": unif(ks[7], (84,), 120),
        "wf3": unif(ks[8], (84, out_channel), 84),
        "bf3": unif(ks[9], (out_channel,), 84),
    }


# ----------------------------------------------------------------------------
# One-time packing of PyTorch-layout params into the fused kernel's layout.
# ----------------------------------------------------------------------------
def _toeplitz_cat(w_oihw, w_in, in_lanes):
    """Per-kernel-row Toeplitz with even|odd conv-output columns concat on N.

    x_row(lane = w*C + c) @ T[i] gives, in lanes [par*LANE + a*OC + o],
    the conv output at (out channel o, width column 2a+par) for kernel row i;
    summing over i yields the full conv (W-half of the 2x2 pool = lane-half max).
    """
    oc, c_in, kh, kw = w_oihw.shape
    ow = w_in - kw + 1
    wo = ow // 2
    w_np = np.asarray(w_oihw, np.float32)
    t = np.zeros((kh, in_lanes, 2 * LANE), np.float32)
    for par in range(2):
        for i in range(kh):
            for a in range(wo):
                col0 = 2 * a + par
                for j in range(kw):
                    wc = col0 + j
                    t[i, wc * c_in:(wc + 1) * c_in,
                      par * LANE + a * oc: par * LANE + (a + 1) * oc] = \
                        w_np[:, :, i, j].T
    return t


def _pool_row_selector(oh, half_pad):
    """Stacked 0/1 selector: rows [0:oh//2) pick even input rows, rows
    [half_pad:half_pad+oh//2) pick odd rows (H-half of the 2x2 max-pool)."""
    ho = oh // 2
    s = np.zeros((2 * half_pad, oh), np.float32)
    s[np.arange(ho), 2 * np.arange(ho)] = 1.0
    s[half_pad + np.arange(ho), 2 * np.arange(ho) + 1] = 1.0
    return s


def _tiled_bias(b, wo):
    oc = b.shape[0]
    bt = np.zeros((1, LANE), np.float32)
    bt[0, :wo * oc] = np.tile(np.asarray(b, np.float32), wo)
    return bt


def pack_lenet_params(raw, in_channel=1, H=32, W=32):
    kh = raw["w1"].shape[2]
    oh1, ow1 = H - kh + 1, W - kh + 1
    ph1, pw1 = oh1 // 2, ow1 // 2
    oh2, ow2 = ph1 - kh + 1, pw1 - kh + 1
    ph2, pw2 = oh2 // 2, ow2 // 2
    oc1 = raw["w1"].shape[0]
    oc2 = raw["w2"].shape[0]
    assert pw1 * oc1 <= LANE and pw2 * oc2 <= LANE and raw["wf1"].shape[1] <= LANE

    s1p = -(-ph1 // 8) * 8     # pad each selector half to a multiple of 8 rows
    s2p = -(-ph2 // 8) * 8

    t1 = _toeplitz_cat(raw["w1"], W, W * in_channel)        # (KH, W*Cin, 2*LANE)
    s1 = _pool_row_selector(oh1, s1p)
    b1t = _tiled_bias(raw["b1"], pw1)

    t2 = _toeplitz_cat(raw["w2"], pw1, LANE)                # (KH, LANE, 2*LANE)
    t2 = t2.reshape(kh * LANE, 2 * LANE)                    # fold taps into K
    s2 = _pool_row_selector(oh2, s2p)
    b2t = _tiled_bias(raw["b2"], pw2)

    # fc1: permute rows from PyTorch NCHW-flatten order (c*Ph*Pw + h*Pw + w)
    # into the kernel's lane-blocked order (h*LANE + w*OC2 + c); pad N to LANE.
    wf1 = np.asarray(raw["wf1"], np.float32)
    n_h1 = wf1.shape[1]
    wf1p = np.zeros((ph2 * LANE, LANE), np.float32)
    for c in range(oc2):
        for h in range(ph2):
            for w_ in range(pw2):
                src = c * (ph2 * pw2) + h * pw2 + w_
                dst = h * LANE + w_ * oc2 + c
                wf1p[dst, :n_h1] = wf1[src]
    bf1p = np.zeros((1, LANE), np.float32)
    bf1p[0, :n_h1] = np.asarray(raw["bf1"], np.float32)

    def fc_pad(wf, bf):
        wf = np.asarray(wf, np.float32)
        bf = np.asarray(bf, np.float32)
        wp = np.zeros((LANE, LANE), np.float32)
        wp[:wf.shape[0], :wf.shape[1]] = wf
        bp = np.zeros((1, LANE), np.float32)
        bp[0, :bf.shape[0]] = bf
        return wp, bp

    wf2p, bf2p = fc_pad(raw["wf2"], raw["bf2"])
    wf3p, bf3p = fc_pad(raw["wf3"], raw["bf3"])

    # bf16 weights halve the per-call weight DMA (dominant HBM traffic at B=2)
    # and hit the native bf16 MXU path; selectors / biases / fc3 stay f32.
    bf = lambda a: jnp.asarray(a, jnp.bfloat16)
    f32 = lambda a: jnp.asarray(a, jnp.float32)
    return dict(
        t1=bf(t1), s1=f32(s1), b1t=f32(b1t),
        t2=bf(t2), s2=f32(s2), b2t=f32(b2t),
        wf1=bf(wf1p), bf1=f32(bf1p),
        wf2=bf(wf2p), bf2=f32(bf2p),
        wf3=f32(wf3p), bf3=f32(bf3p),
    )


# ----------------------------------------------------------------------------
# Pure-JAX reference (same math as the PyTorch module) for a correctness check.
# ----------------------------------------------------------------------------
def lenet_reference(raw, x_nchw):
    hp = lax.Precision.HIGHEST
    y = lax.conv_general_dilated(x_nchw, raw["w1"], (1, 1), "VALID",
                                 dimension_numbers=("NCHW", "OIHW", "NCHW"),
                                 precision=hp)
    y = jax.nn.relu(y + raw["b1"][None, :, None, None])
    y = lax.reduce_window(y, -jnp.inf, lax.max, (1, 1, 2, 2), (1, 1, 2, 2), "VALID")
    y = lax.conv_general_dilated(y, raw["w2"], (1, 1), "VALID",
                                 dimension_numbers=("NCHW", "OIHW", "NCHW"),
                                 precision=hp)
    y = jax.nn.relu(y + raw["b2"][None, :, None, None])
    y = lax.reduce_window(y, -jnp.inf, lax.max, (1, 1, 2, 2), (1, 1, 2, 2), "VALID")
    y = y.reshape(y.shape[0], -1)                 # PyTorch x.view(B, -1) (NCHW)
    y = jax.nn.relu(jnp.dot(y, raw["wf1"], precision=hp) + raw["bf1"])
    y = jax.nn.relu(jnp.dot(y, raw["wf2"], precision=hp) + raw["bf2"])
    return jnp.dot(y, raw["wf3"], precision=hp) + raw["bf3"]


if __name__ == "__main__":
    key = jax.random.PRNGKey(0)
    k_param, k_x = jax.random.split(key)

    # Classic LeNet geometry: 1x32x32 input -> conv2 output 16x5x5 -> fc1_in 400.
    B, C, H, W = 2, 1, 32, 32
    x = jax.random.normal(k_x, (B, C, H, W), jnp.float32)

    raw = init_lenet_params(k_param, in_channel=C, out_channel=10, H=H, W=W)
    packed = pack_lenet_params(raw, in_channel=C, H=H, W=W)

    out = lenet_forward(packed, x, n_classes=10)
    out = jax.block_until_ready(out)
    assert out.shape == (B, 10), out.shape

    ref = jax.block_until_ready(jax.jit(lenet_reference)(raw, x))
    # Tolerance widened vs. the all-f32 version: conv/fc1/fc2 weights and their
    # matmul LHS operands are bf16 (f32 accumulation, f32 elementwise, f32 fc3).
    np.testing.assert_allclose(np.asarray(out), np.asarray(ref), rtol=3e-2, atol=3e-2)

    print("KERNEL_OK")
</pallas_src>

<mosaic_0001>
module attributes {stable_mosaic.version = 11 : i64} {
  func.func @_lenet_fused_kernel(%arg0: memref<2x32x32xf32, #tpu.memory_space<vmem>>, %arg1: memref<5x32x256xbf16, #tpu.memory_space<vmem>>, %arg2: memref<32x28xf32, #tpu.memory_space<vmem>>, %arg3: memref<1x128xf32, #tpu.memory_space<vmem>>, %arg4: memref<640x256xbf16, #tpu.memory_space<vmem>>, %arg5: memref<16x10xf32, #tpu.memory_space<vmem>>, %arg6: memref<1x128xf32, #tpu.memory_space<vmem>>, %arg7: memref<640x128xbf16, #tpu.memory_space<vmem>>, %arg8: memref<1x128xf32, #tpu.memory_space<vmem>>, %arg9: memref<128x128xbf16, #tpu.memory_space<vmem>>, %arg10: memref<1x128xf32, #tpu.memory_space<vmem>>, %arg11: memref<128x128xf32, #tpu.memory_space<vmem>>, %arg12: memref<1x128xf32, #tpu.memory_space<vmem>>, %arg13: memref<2x128xf32, #tpu.memory_space<vmem>>, %arg14: memref<2x16x128xf32, #tpu.memory_space<vmem>>) attributes {dimension_semantics = [], scalar_prefetch = 0 : i64, scratch_operands = 1 : i64, tpu.core_type = #tpu.core_type<tc>} {
    %c0 = arith.constant 0 : index
    %c0_0 = arith.constant 0 : index
    %c0_1 = arith.constant 0 : index
    %0 = vector.load %arg0[%c0, %c0_0, %c0_1] : memref<2x32x32xf32, #tpu.memory_space<vmem>>, vector<1x28x32xf32>
    %1 = vector.shape_cast %0 : vector<1x28x32xf32> to vector<28x32xf32>
    %2 = arith.truncf %1 : vector<28x32xf32> to vector<28x32xbf16>
    %c0_2 = arith.constant 0 : index
    %c0_3 = arith.constant 0 : index
    %c0_4 = arith.constant 0 : index
    %3 = vector.load %arg1[%c0_2, %c0_3, %c0_4] : memref<5x32x256xbf16, #tpu.memory_space<vmem>>, vector<1x32x256xbf16>
    %4 = vector.shape_cast %3 : vector<1x32x256xbf16> to vector<32x256xbf16>
    %cst = arith.constant dense<0.000000e+00> : vector<28x256xf32>
    %5 = tpu.matmul %2, %4, %cst {dimension_numbers = #tpu.dot_dimension_numbers<[1], [0], [0], [1], [0, 0, 1, 1], [], []>} : vector<28x32xbf16>, vector<32x256xbf16>, vector<28x256xf32> -> vector<28x256xf32>
    %c0_5 = arith.constant 0 : index
    %c1 = arith.constant 1 : index
    %c0_6 = arith.constant 0 : index
    %6 = vector.load %arg0[%c0_5, %c1, %c0_6] : memref<2x32x32xf32, #tpu.memory_space<vmem>>, vector<1x28x32xf32>
    %7 = vector.shape_cast %6 : vector<1x28x32xf32> to vector<28x32xf32>
    %8 = arith.truncf %7 : vector<28x32xf32> to vector<28x32xbf16>
    %c1_7 = arith.constant 1 : index
    %c0_8 = arith.constant 0 : index
    %c0_9 = arith.constant 0 : index
    %9 = vector.load %arg1[%c1_7, %c0_8, %c0_9] : memref<5x32x256xbf16, #tpu.memory_space<vmem>>, vector<1x32x256xbf16>
    %10 = vector.shape_cast %9 : vector<1x32x256xbf16> to vector<32x256xbf16>
    %cst_10 = arith.constant dense<0.000000e+00> : vector<28x256xf32>
    %11 = tpu.matmul %8, %10, %cst_10 {dimension_numbers = #tpu.dot_dimension_numbers<[1], [0], [0], [1], [0, 0, 1, 1], [], []>} : vector<28x32xbf16>, vector<32x256xbf16>, vector<28x256xf32> -> vector<28x256xf32>
    %12 = arith.addf %5, %11 : vector<28x256xf32>
    %c0_11 = arith.constant 0 : index
    %c2 = arith.constant 2 : index
    %c0_12 = arith.constant 0 : index
    %13 = vector.load %arg0[%c0_11, %c2, %c0_12] : memref<2x32x32xf32, #tpu.memory_space<vmem>>, vector<1x28x32xf32>
    %14 = vector.shape_cast %13 : vector<1x28x32xf32> to vector<28x32xf32>
    %15 = arith.truncf %14 : vector<28x32xf32> to vector<28x32xbf16>
    %c2_13 = arith.constant 2 : index
    %c0_14 = arith.constant 0 : index
    %c0_15 = arith.constant 0 : index
    %16 = vector.load %arg1[%c2_13, %c0_14, %c0_15] : memref<5x32x256xbf16, #tpu.memory_space<vmem>>, vector<1x32x256xbf16>
    %17 = vector.shape_cast %16 : vector<1x32x256xbf16> to vector<32x256xbf16>
    %cst_16 = arith.constant dense<0.000000e+00> : vector<28x256xf32>
    %18 = tpu.matmul %15, %17, %cst_16 {dimension_numbers = #tpu.dot_dimension_numbers<[1], [0], [0], [1], [0, 0, 1, 1], [], []>} : vector<28x32xbf16>, vector<32x256xbf16>, vector<28x256xf32> -> vector<28x256xf32>
    %19 = arith.addf %12, %18 : vector<28x256xf32>
    %c0_17 = arith.constant 0 : index
    %c3 = arith.constant 3 : index
    %c0_18 = arith.constant 0 : index
    %20 = vector.load %arg0[%c0_17, %c3, %c0_18] : memref<2x32x32xf32, #tpu.memory_space<vmem>>, vector<1x28x32xf32>
    %21 = vector.shape_cast %20 : vector<1x28x32xf32> to vector<28x32xf32>
    %22 = arith.truncf %21 : vector<28x32xf32> to vector<28x32xbf16>
    %c3_19 = arith.constant 3 : index
    %c0_20 = arith.constant 0 : index
    %c0_21 = arith.constant 0 : index
    %23 = vector.load %arg1[%c3_19, %c0_20, %c0_21] : memref<5x32x256xbf16, #tpu.memory_space<vmem>>, vector<1x32x256xbf16>
    %24 = vector.shape_cast %23 : vector<1x32x256xbf16> to vector<32x256xbf16>
    %cst_22 = arith.constant dense<0.000000e+00> : vector<28x256xf32>
    %25 = tpu.matmul %22, %24, %cst_22 {dimension_numbers = #tpu.dot_dimension_numbers<[1], [0], [0], [1], [0, 0, 1, 1], [], []>} : vector<28x32xbf16>, vector<32x256xbf16>, vector<28x256xf32> -> vector<28x256xf32>
    %26 = arith.addf %19, %25 : vector<28x256xf32>
    %c0_23 = arith.constant 0 : index
    %c4 = arith.constant 4 : index
    %c0_24 = arith.constant 0 : index
    %27 = vector.load %arg0[%c0_23, %c4, %c0_24] : memref<2x32x32xf32, #tpu.memory_space<vmem>>, vector<1x28x32xf32>
    %28 = vector.shape_cast %27 : vector<1x28x32xf32> to vector<28x32xf32>
    %29 = arith.truncf %28 : vector<28x32xf32> to vector<28x32xbf16>
    %c4_25 = arith.constant 4 : index
    %c0_26 = arith.constant 0 : index
    %c0_27 = arith.constant 0 : index
    %30 = vector.load %arg1[%c4_25, %c0_26, %c0_27] : memref<5x32x256xbf16, #tpu.memory_space<vmem>>, vector<1x32x256xbf16>
    %31 = vector.shape_cast %30 : vector<1x32x256xbf16> to vector<32x256xbf16>
    %cst_28 = arith.constant dense<0.000000e+00> : vector<28x256xf32>
    %32 = tpu.matmul %29, %31, %cst_28 {dimension_numbers = #tpu.dot_dimension_numbers<[1], [0], [0], [1], [0, 0, 1, 1], [], []>} : vector<28x32xbf16>, vector<32x256xbf16>, vector<28x256xf32> -> vector<28x256xf32>
    %33 = arith.addf %26, %32 : vector<28x256xf32>
    %34 = vector.extract_strided_slice %33 {offsets = [0, 0], sizes = [28, 128], strides = [1, 1]} : vector<28x256xf32> to vector<28x128xf32>
    %35 = vector.extract_strided_slice %33 {offsets = [0, 128], sizes = [28, 128], strides = [1, 1]} : vector<28x256xf32> to vector<28x128xf32>
    %36 = arith.maximumf %34, %35 : vector<28x128xf32>
    %c0_29 = arith.constant 0 : index
    %c0_30 = arith.constant 0 : index
    %37 = vector.load %arg2[%c0_29, %c0_30] : memref<32x28xf32, #tpu.memory_space<vmem>>, vector<32x28xf32>
    %cst_31 = arith.constant dense<0.000000e+00> : vector<32x128xf32>
    %38 = tpu.matmul %37, %36, %cst_31 {dimension_numbers = #tpu.dot_dimension_numbers<[1], [0], [0], [1], [0, 0, 1, 1], [], []>} : vector<32x28xf32>, vector<28x128xf32>, vector<32x128xf32> -> vector<32x128xf32>
    %39 = vector.extract_strided_slice %38 {offsets = [0, 0], sizes = [16, 128], strides = [1, 1]} : vector<32x128xf32> to vector<16x128xf32>
    %40 = vector.extract_strided_slice %38 {offsets = [16, 0], sizes = [16, 128], strides = [1, 1]} : vector<32x128xf32> to vector<16x128xf32>
    %41 = arith.maximumf %39, %40 : vector<16x128xf32>
    %c0_32 = arith.constant 0 : index
    %c0_33 = arith.constant 0 : index
    %42 = vector.load %arg3[%c0_32, %c0_33] : memref<1x128xf32, #tpu.memory_space<vmem>>, vector<1x128xf32>
    %43 = vector.broadcast %42 : vector<1x128xf32> to vector<16x128xf32>
    %44 = arith.addf %41, %43 : vector<16x128xf32>
    %cst_34 = arith.constant 0.000000e+00 : f32
    %45 = vector.broadcast %cst_34 : f32 to vector<16x128xf32>
    %46 = arith.maximumf %44, %45 : vector<16x128xf32>
    %c0_35 = arith.constant 0 : index
    %c0_36 = arith.constant 0 : index
    %c0_37 = arith.constant 0 : index
    %47 = vector.load %arg14[%c0_35, %c0_36, %c0_37] : memref<2x16x128xf32, #tpu.memory_space<vmem>>, vector<1x16x128xf32>
    %48 = vector.shape_cast %47 : vector<1x16x128xf32> to vector<16x128xf32>
    %49 = vector.shape_cast %46 : vector<16x128xf32> to vector<1x16x128xf32>
    tpu.vector_store %arg14[%c0_35, %c0_36, %c0_37], %49 {strides = array<i32>} : memref<2x16x128xf32, #tpu.memory_space<vmem>>, vector<1x16x128xf32>,
    %c0_38 = arith.constant 0 : index
    %c0_39 = arith.constant 0 : index
    %c0_40 = arith.constant 0 : index
    %50 = vector.load %arg14[%c0_38, %c0_39, %c0_40] : memref<2x16x128xf32, #tpu.memory_space<vmem>>, vector<1x10x128xf32>
    %51 = vector.shape_cast %50 : vector<1x10x128xf32> to vector<10x128xf32>
    %c0_41 = arith.constant 0 : index
    %c1_42 = arith.constant 1 : index
    %c0_43 = arith.constant 0 : index
    %52 = vector.load %arg14[%c0_41, %c1_42, %c0_43] : memref<2x16x128xf32, #tpu.memory_space<vmem>>, vector<1x10x128xf32>
    %53 = vector.shape_cast %52 : vector<1x10x128xf32> to vector<10x128xf32>
    %c0_44 = arith.constant 0 : index
    %c2_45 = arith.constant 2 : index
    %c0_46 = arith.constant 0 : index
    %54 = vector.load %arg14[%c0_44, %c2_45, %c0_46] : memref<2x16x128xf32, #tpu.memory_space<vmem>>, vector<1x10x128xf32>
    %55 = vector.shape_cast %54 : vector<1x10x128xf32> to vector<10x128xf32>
    %c0_47 = arith.constant 0 : index
    %c3_48 = arith.constant 3 : index
    %c0_49 = arith.constant 0 : index
    %56 = vector.load %arg14[%c0_47, %c3_48, %c0_49] : memref<2x16x128xf32, #tpu.memory_space<vmem>>, vector<1x10x128xf32>
    %57 = vector.shape_cast %56 : vector<1x10x128xf32> to vector<10x128xf32>
    %c0_50 = arith.constant 0 : index
    %c4_51 = arith.constant 4 : index
    %c0_52 = arith.constant 0 : index
    %58 = vector.load %arg14[%c0_50, %c4_51, %c0_52] : memref<2x16x128xf32, #tpu.memory_space<vmem>>, vector<1x10x128xf32>
    %59 = vector.shape_cast %58 : vector<1x10x128xf32> to vector<10x128xf32>
    %60 = tpu.concatenate %51, %53, %55, %57, %59 in 1 : vector<10x128xf32>, vector<10x128xf32>, vector<10x128xf32>, vector<10x128xf32>, vector<10x128xf32> -> vector<10x640xf32>
    %61 = arith.truncf %60 : vector<10x640xf32> to vector<10x640xbf16>
    %c0_53 = arith.constant 0 : index
    %c0_54 = arith.constant 0 : index
    %62 = vector.load %arg4[%c0_53, %c0_54] : memref<640x256xbf16, #tpu.memory_space<vmem>>, vector<640x256xbf16>
    %cst_55 = arith.constant dense<0.000000e+00> : vector<10x256xf32>
    %63 = tpu.matmul %61, %62, %cst_55 {dimension_numbers = #tpu.dot_dimension_numbers<[1], [0], [0], [1], [0, 0, 1, 1], [], []>} : vector<10x640xbf16>, vector<640x256xbf16>, vector<10x256xf32> -> vector<10x256xf32>
    %64 = vector.extract_strided_slice %63 {offsets = [0, 0], sizes = [10, 128], strides = [1, 1]} : vector<10x256xf32> to vector<10x128xf32>
    %65 = vector.extract_strided_slice %63 {offsets = [0, 128], sizes = [10, 128], strides = [1, 1]} : vector<10x256xf32> to vector<10x128xf32>
    %66 = arith.maximumf %64, %65 : vector<10x128xf32>
    %c0_56 = arith.constant 0 : index
    %c0_57 = arith.constant 0 : index
    %67 = vector.load %arg5[%c0_56, %c0_57] : memref<16x10xf32, #tpu.memory_space<vmem>>, vector<16x10xf32>
    %cst_58 = arith.constant dense<0.000000e+00> : vector<16x128xf32>
    %68 = tpu.matmul %67, %66, %cst_58 {dimension_numbers = #tpu.dot_dimension_numbers<[1], [0], [0], [1], [0, 0, 1, 1], [], []>} : vector<16x10xf32>, vector<10x128xf32>, vector<16x128xf32> -> vector<16x128xf32>
    %69 = vector.extract_strided_slice %68 {offsets = [0, 0], sizes = [8, 128], strides = [1, 1]} : vector<16x128xf32> to vector<8x128xf32>
    %70 = vector.extract_strided_slice %68 {offsets = [8, 0], sizes = [8, 128], strides = [1, 1]} : vector<16x128xf32> to vector<8x128xf32>
    %71 = arith.maximumf %69, %70 : vector<8x128xf32>
    %c0_59 = arith.constant 0 : index
    %c0_60 = arith.constant 0 : index
    %72 = vector.load %arg6[%c0_59, %c0_60] : memref<1x128xf32, #tpu.memory_space<vmem>>, vector<1x128xf32>
    %73 = vector.broadcast %72 : vector<1x128xf32> to vector<8x128xf32>
    %74 = arith.addf %71, %73 : vector<8x128xf32>
    %cst_61 = arith.constant 0.000000e+00 : f32
    %75 = vector.broadcast %cst_61 : f32 to vector<8x128xf32>
    %76 = arith.maximumf %74, %75 : vector<8x128xf32>
    %77 = vector.extract_strided_slice %76 {offsets = [0, 0], sizes = [1, 128], strides = [1, 1]} : vector<8x128xf32> to vector<1x128xf32>
    %78 = vector.extract_strided_slice %76 {offsets = [1, 0], sizes = [1, 128], strides = [1, 1]} : vector<8x128xf32> to vector<1x128xf32>
    %79 = vector.extract_strided_slice %76 {offsets = [2, 0], sizes = [1, 128], strides = [1, 1]} : vector<8x128xf32> to vector<1x128xf32>
    %80 = vector.extract_strided_slice %76 {offsets = [3, 0], sizes = [1, 128], strides = [1, 1]} : vector<8x128xf32> to vector<1x128xf32>
    %81 = vector.extract_strided_slice %76 {offsets = [4, 0], sizes = [1, 128], strides = [1, 1]} : vector<8x128xf32> to vector<1x128xf32>
    %82 = tpu.concatenate %77, %78, %79, %80, %81 in 1 : vector<1x128xf32>, vector<1x128xf32>, vector<1x128xf32>, vector<1x128xf32>, vector<1x128xf32> -> vector<1x640xf32>
    %83 = arith.truncf %82 : vector<1x640xf32> to vector<1x640xbf16>
    %c0_62 = arith.constant 0 : index
    %c0_63 = arith.constant 0 : index
    %84 = vector.load %arg7[%c0_62, %c0_63] : memref<640x128xbf16, #tpu.memory_space<vmem>>, vector<640x128xbf16>
    %cst_64 = arith.constant dense<0.000000e+00> : vector<1x128xf32>
    %85 = tpu.matmul %83, %84, %cst_64 {dimension_numbers = #tpu.dot_dimension_numbers<[1], [0], [0], [1], [0, 0, 1, 1], [], []>} : vector<1x640xbf16>, vector<640x128xbf16>, vector<1x128xf32> -> vector<1x128xf32>
    %c0_65 = arith.constant 0 : index
    %c0_66 = arith.constant 0 : index
    %86 = vector.load %arg8[%c0_65, %c0_66] : memref<1x128xf32, #tpu.memory_space<vmem>>, vector<1x128xf32>
    %87 = arith.addf %85, %86 : vector<1x128xf32>
    %cst_67 = arith.constant 0.000000e+00 : f32
    %88 = vector.broadcast %cst_67 : f32 to vector<1x128xf32>
    %89 = arith.maximumf %87, %88 : vector<1x128xf32>
    %90 = arith.truncf %89 : vector<1x128xf32> to vector<1x128xbf16>
    %c0_68 = arith.constant 0 : index
    %c0_69 = arith.constant 0 : index
    %91 = vector.load %arg9[%c0_68, %c0_69] : memref<128x128xbf16, #tpu.memory_space<vmem>>, vector<128x128xbf16>
    %cst_70 = arith.constant dense<0.000000e+00> : vector<1x128xf32>
    %92 = tpu.matmul %90, %91, %cst_70 {dimension_numbers = #tpu.dot_dimension_numbers<[1], [0], [0], [1], [0, 0, 1, 1], [], []>} : vector<1x128xbf16>, vector<128x128xbf16>, vector<1x128xf32> -> vector<1x128xf32>
    %c0_71 = arith.constant 0 : index
    %c0_72 = arith.constant 0 : index
    %93 = vector.load %arg10[%c0_71, %c0_72] : memref<1x128xf32, #tpu.memory_space<vmem>>, vector<1x128xf32>
    %94 = arith.addf %92, %93 : vector<1x128xf32>
    %cst_73 = arith.constant 0.000000e+00 : f32
    %95 = vector.broadcast %cst_73 : f32 to vector<1x128xf32>
    %96 = arith.maximumf %94, %95 : vector<1x128xf32>
    %c0_74 = arith.constant 0 : index
    %c0_75 = arith.constant 0 : index
    %97 = vector.load %arg11[%c0_74, %c0_75] : memref<128x128xf32, #tpu.memory_space<vmem>>, vector<128x128xf32>
    %cst_76 = arith.constant dense<0.000000e+00> : vector<1x128xf32>
    %98 = tpu.matmul %96, %97, %cst_76 {dimension_numbers = #tpu.dot_dimension_numbers<[1], [0], [0], [1], [0, 0, 1, 1], [], []>} : vector<1x128xf32>, vector<128x128xf32>, vector<1x128xf32> -> vector<1x128xf32>
    %c0_77 = arith.constant 0 : index
    %c0_78 = arith.constant 0 : index
    %99 = vector.load %arg12[%c0_77, %c0_78] : memref<1x128xf32, #tpu.memory_space<vmem>>, vector<1x128xf32>
    %100 = arith.addf %98, %99 : vector<1x128xf32>
    %c0_79 = arith.constant 0 : index
    %c0_80 = arith.constant 0 : index
    %101 = vector.load %arg13[%c0_79, %c0_80] : memref<2x128xf32, #tpu.memory_space<vmem>>, vector<1x128xf32>
    tpu.vector_store %arg13[%c0_79, %c0_80], %100 {strides = array<i32>} : memref<2x128xf32, #tpu.memory_space<vmem>>, vector<1x128xf32>,
    %c1_81 = arith.constant 1 : index
    %c0_82 = arith.constant 0 : index
    %c0_83 = arith.constant 0 : index
    %102 = vector.load %arg0[%c1_81, %c0_82, %c0_83] : memref<2x32x32xf32, #tpu.memory_space<vmem>>, vector<1x28x32xf32>
    %103 = vector.shape_cast %102 : vector<1x28x32xf32> to vector<28x32xf32>
    %104 = arith.truncf %103 : vector<28x32xf32> to vector<28x32xbf16>
    %c0_84 = arith.constant 0 : index
    %c0_85 = arith.constant 0 : index
    %c0_86 = arith.constant 0 : index
    %105 = vector.load %arg1[%c0_84, %c0_85, %c0_86] : memref<5x32x256xbf16, #tpu.memory_space<vmem>>, vector<1x32x256xbf16>
    %106 = vector.shape_cast %105 : vector<1x32x256xbf16> to vector<32x256xbf16>
    %cst_87 = arith.constant dense<0.000000e+00> : vector<28x256xf32>
    %107 = tpu.matmul %104, %106, %cst_87 {dimension_numbers = #tpu.dot_dimension_numbers<[1], [0], [0], [1], [0, 0, 1, 1], [], []>} : vector<28x32xbf16>, vector<32x256xbf16>, vector<28x256xf32> -> vector<28x256xf32>
    %c1_88 = arith.constant 1 : index
    %c1_89 = arith.constant 1 : index
    %c0_90 = arith.constant 0 : index
    %108 = vector.load %arg0[%c1_88, %c1_89, %c0_90] : memref<2x32x32xf32, #tpu.memory_space<vmem>>, vector<1x28x32xf32>
    %109 = vector.shape_cast %108 : vector<1x28x32xf32> to vector<28x32xf32>
    %110 = arith.truncf %109 : vector<28x32xf32> to vector<28x32xbf16>
    %c1_91 = arith.constant 1 : index
    %c0_92 = arith.constant 0 : index
    %c0_93 = arith.constant 0 : index
    %111 = vector.load %arg1[%c1_91, %c0_92, %c0_93] : memref<5x32x256xbf16, #tpu.memory_space<vmem>>, vector<1x32x256xbf16>
    %112 = vector.shape_cast %111 : vector<1x32x256xbf16> to vector<32x256xbf16>
    %cst_94 = arith.constant dense<0.000000e+00> : vector<28x256xf32>
    %113 = tpu.matmul %110, %112, %cst_94 {dimension_numbers = #tpu.dot_dimension_numbers<[1], [0], [0], [1], [0, 0, 1, 1], [], []>} : vector<28x32xbf16>, vector<32x256xbf16>, vector<28x256xf32> -> vector<28x256xf32>
    %114 = arith.addf %107, %113 : vector<28x256xf32>
    %c1_95 = arith.constant 1 : index
    %c2_96 = arith.constant 2 : index
    %c0_97 = arith.constant 0 : index
    %115 = vector.load %arg0[%c1_95, %c2_96, %c0_97] : memref<2x32x32xf32, #tpu.memory_space<vmem>>, vector<1x28x32xf32>
    %116 = vector.shape_cast %115 : vector<1x28x32xf32> to vector<28x32xf32>
    %117 = arith.truncf %116 : vector<28x32xf32> to vector<28x32xbf16>
    %c2_98 = arith.constant 2 : index
    %c0_99 = arith.constant 0 : index
    %c0_100 = arith.constant 0 : index
    %118 = vector.load %arg1[%c2_98, %c0_99, %c0_100] : memref<5x32x256xbf16, #tpu.memory_space<vmem>>, vector<1x32x256xbf16>
    %119 = vector.shape_cast %118 : vector<1x32x256xbf16> to vector<32x256xbf16>
    %cst_101 = arith.constant dense<0.000000e+00> : vector<28x256xf32>
    %120 = tpu.matmul %117, %119, %cst_101 {dimension_numbers = #tpu.dot_dimension_numbers<[1], [0], [0], [1], [0, 0, 1, 1], [], []>} : vector<28x32xbf16>, vector<32x256xbf16>, vector<28x256xf32> -> vector<28x256xf32>
    %121 = arith.addf %114, %120 : vector<28x256xf32>
    %c1_102 = arith.constant 1 : index
    %c3_103 = arith.constant 3 : index
    %c0_104 = arith.constant 0 : index
    %122 = vector.load %arg0[%c1_102, %c3_103, %c0_104] : memref<2x32x32xf32, #tpu.memory_space<vmem>>, vector<1x28x32xf32>
    %123 = vector.shape_cast %122 : vector<1x28x32xf32> to vector<28x32xf32>
    %124 = arith.truncf %123 : vector<28x32xf32> to vector<28x32xbf16>
    %c3_105 = arith.constant 3 : index
    %c0_106 = arith.constant 0 : index
    %c0_107 = arith.constant 0 : index
    %125 = vector.load %arg1[%c3_105, %c0_106, %c0_107] : memref<5x32x256xbf16, #tpu.memory_space<vmem>>, vector<1x32x256xbf16>
    %126 = vector.shape_cast %125 : vector<1x32x256xbf16> to vector<32x256xbf16>
    %cst_108 = arith.constant dense<0.000000e+00> : vector<28x256xf32>
    %127 = tpu.matmul %124, %126, %cst_108 {dimension_numbers = #tpu.dot_dimension_numbers<[1], [0], [0], [1], [0, 0, 1, 1], [], []>} : vector<28x32xbf16>, vector<32x256xbf16>, vector<28x256xf32> -> vector<28x256xf32>
    %128 = arith.addf %121, %127 : vector<28x256xf32>
    %c1_109 = arith.constant 1 : index
    %c4_110 = arith.constant 4 : index
    %c0_111 = arith.constant 0 : index
    %129 = vector.load %arg0[%c1_109, %c4_110, %c0_111] : memref<2x32x32xf32, #tpu.memory_space<vmem>>, vector<1x28x32xf32>
    %130 = vector.shape_cast %129 : vector<1x28x32xf32> to vector<28x32xf32>
    %131 = arith.truncf %130 : vector<28x32xf32> to vector<28x32xbf16>
    %c4_112 = arith.constant 4 : index
    %c0_113 = arith.constant 0 : index
    %c0_114 = arith.constant 0 : index
    %132 = vector.load %arg1[%c4_112, %c0_113, %c0_114] : memref<5x32x256xbf16, #tpu.memory_space<vmem>>, vector<1x32x256xbf16>
    %133 = vector.shape_cast %132 : vector<1x32x256xbf16> to vector<32x256xbf16>
    %cst_115 = arith.constant dense<0.000000e+00> : vector<28x256xf32>
    %134 = tpu.matmul %131, %133, %cst_115 {dimension_numbers = #tpu.dot_dimension_numbers<[1], [0], [0], [1], [0, 0, 1, 1], [], []>} : vector<28x32xbf16>, vector<32x256xbf16>, vector<28x256xf32> -> vector<28x256xf32>
    %135 = arith.addf %128, %134 : vector<28x256xf32>
    %136 = vector.extract_strided_slice %135 {offsets = [0, 0], sizes = [28, 128], strides = [1, 1]} : vector<28x256xf32> to vector<28x128xf32>
    %137 = vector.extract_strided_slice %135 {offsets = [0, 128], sizes = [28, 128], strides = [1, 1]} : vector<28x256xf32> to vector<28x128xf32>
    %138 = arith.maximumf %136, %137 : vector<28x128xf32>
    %c0_116 = arith.constant 0 : index
    %c0_117 = arith.constant 0 : index
    %139 = vector.load %arg2[%c0_116, %c0_117] : memref<32x28xf32, #tpu.memory_space<vmem>>, vector<32x28xf32>
    %cst_118 = arith.constant dense<0.000000e+00> : vector<32x128xf32>
    %140 = tpu.matmul %139, %138, %cst_118 {dimension_numbers = #tpu.dot_dimension_numbers<[1], [0], [0], [1], [0, 0, 1, 1], [], []>} : vector<32x28xf32>, vector<28x128xf32>, vector<32x128xf32> -> vector<32x128xf32>
    %141 = vector.extract_strided_slice %140 {offsets = [0, 0], sizes = [16, 128], strides = [1, 1]} : vector<32x128xf32> to vector<16x128xf32>
    %142 = vector.extract_strided_slice %140 {offsets = [16, 0], sizes = [16, 128], strides = [1, 1]} : vector<32x128xf32> to vector<16x128xf32>
    %143 = arith.maximumf %141, %142 : vector<16x128xf32>
    %c0_119 = arith.constant 0 : index
    %c0_120 = arith.constant 0 : index
    %144 = vector.load %arg3[%c0_119, %c0_120] : memref<1x128xf32, #tpu.memory_space<vmem>>, vector<1x128xf32>
    %145 = vector.broadcast %144 : vector<1x128xf32> to vector<16x128xf32>
    %146 = arith.addf %143, %145 : vector<16x128xf32>
    %cst_121 = arith.constant 0.000000e+00 : f32
    %147 = vector.broadcast %cst_121 : f32 to vector<16x128xf32>
    %148 = arith.maximumf %146, %147 : vector<16x128xf32>
    %c1_122 = arith.constant 1 : index
    %c0_123 = arith.constant 0 : index
    %c0_124 = arith.constant 0 : index
    %149 = vector.load %arg14[%c1_122, %c0_123, %c0_124] : memref<2x16x128xf32, #tpu.memory_space<vmem>>, vector<1x16x128xf32>
    %150 = vector.shape_cast %149 : vector<1x16x128xf32> to vector<16x128xf32>
    %151 = vector.shape_cast %148 : vector<16x128xf32> to vector<1x16x128xf32>
    tpu.vector_store %arg14[%c1_122, %c0_123, %c0_124], %151 {strides = array<i32>} : memref<2x16x128xf32, #tpu.memory_space<vmem>>, vector<1x16x128xf32>,
    %c1_125 = arith.constant 1 : index
    %c0_126 = arith.constant 0 : index
    %c0_127 = arith.constant 0 : index
    %152 = vector.load %arg14[%c1_125, %c0_126, %c0_127] : memref<2x16x128xf32, #tpu.memory_space<vmem>>, vector<1x10x128xf32>
    %153 = vector.shape_cast %152 : vector<1x10x128xf32> to vector<10x128xf32>
    %c1_128 = arith.constant 1 : index
    %c1_129 = arith.constant 1 : index
    %c0_130 = arith.constant 0 : index
    %154 = vector.load %arg14[%c1_128, %c1_129, %c0_130] : memref<2x16x128xf32, #tpu.memory_space<vmem>>, vector<1x10x128xf32>
    %155 = vector.shape_cast %154 : vector<1x10x128xf32> to vector<10x128xf32>
    %c1_131 = arith.constant 1 : index
    %c2_132 = arith.constant 2 : index
    %c0_133 = arith.constant 0 : index
    %156 = vector.load %arg14[%c1_131, %c2_132, %c0_133] : memref<2x16x128xf32, #tpu.memory_space<vmem>>, vector<1x10x128xf32>
    %157 = vector.shape_cast %156 : vector<1x10x128xf32> to vector<10x128xf32>
    %c1_134 = arith.constant 1 : index
    %c3_135 = arith.constant 3 : index
    %c0_136 = arith.constant 0 : index
    %158 = vector.load %arg14[%c1_134, %c3_135, %c0_136] : memref<2x16x128xf32, #tpu.memory_space<vmem>>, vector<1x10x128xf32>
    %159 = vector.shape_cast %158 : vector<1x10x128xf32> to vector<10x128xf32>
    %c1_137 = arith.constant 1 : index
    %c4_138 = arith.constant 4 : index
    %c0_139 = arith.constant 0 : index
    %160 = vector.load %arg14[%c1_137, %c4_138, %c0_139] : memref<2x16x128xf32, #tpu.memory_space<vmem>>, vector<1x10x128xf32>
    %161 = vector.shape_cast %160 : vector<1x10x128xf32> to vector<10x128xf32>
    %162 = tpu.concatenate %153, %155, %157, %159, %161 in 1 : vector<10x128xf32>, vector<10x128xf32>, vector<10x128xf32>, vector<10x128xf32>, vector<10x128xf32> -> vector<10x640xf32>
    %163 = arith.truncf %162 : vector<10x640xf32> to vector<10x640xbf16>
    %c0_140 = arith.constant 0 : index
    %c0_141 = arith.constant 0 : index
    %164 = vector.load %arg4[%c0_140, %c0_141] : memref<640x256xbf16, #tpu.memory_space<vmem>>, vector<640x256xbf16>
    %cst_142 = arith.constant dense<0.000000e+00> : vector<10x256xf32>
    %165 = tpu.matmul %163, %164, %cst_142 {dimension_numbers = #tpu.dot_dimension_numbers<[1], [0], [0], [1], [0, 0, 1, 1], [], []>} : vector<10x640xbf16>, vector<640x256xbf16>, vector<10x256xf32> -> vector<10x256xf32>
    %166 = vector.extract_strided_slice %165 {offsets = [0, 0], sizes = [10, 128], strides = [1, 1]} : vector<10x256xf32> to vector<10x128xf32>
    %167 = vector.extract_strided_slice %165 {offsets = [0, 128], sizes = [10, 128], strides = [1, 1]} : vector<10x256xf32> to vector<10x128xf32>
    %168 = arith.maximumf %166, %167 : vector<10x128xf32>
    %c0_143 = arith.constant 0 : index
    %c0_144 = arith.constant 0 : index
    %169 = vector.load %arg5[%c0_143, %c0_144] : memref<16x10xf32, #tpu.memory_space<vmem>>, vector<16x10xf32>
    %cst_145 = arith.constant dense<0.000000e+00> : vector<16x128xf32>
    %170 = tpu.matmul %169, %168, %cst_145 {dimension_numbers = #tpu.dot_dimension_numbers<[1], [0], [0], [1], [0, 0, 1, 1], [], []>} : vector<16x10xf32>, vector<10x128xf32>, vector<16x128xf32> -> vector<16x128xf32>
    %171 = vector.extract_strided_slice %170 {offsets = [0, 0], sizes = [8, 128], strides = [1, 1]} : vector<16x128xf32> to vector<8x128xf32>
    %172 = vector.extract_strided_slice %170 {offsets = [8, 0], sizes = [8, 128], strides = [1, 1]} : vector<16x128xf32> to vector<8x128xf32>
    %173 = arith.maximumf %171, %172 : vector<8x128xf32>
    %c0_146 = arith.constant 0 : index
    %c0_147 = arith.constant 0 : index
    %174 = vector.load %arg6[%c0_146, %c0_147] : memref<1x128xf32, #tpu.memory_space<vmem>>, vector<1x128xf32>
    %175 = vector.broadcast %174 : vector<1x128xf32> to vector<8x128xf32>
    %176 = arith.addf %173, %175 : vector<8x128xf32>
    %cst_148 = arith.constant 0.000000e+00 : f32
    %177 = vector.broadcast %cst_148 : f32 to vector<8x128xf32>
    %178 = arith.maximumf %176, %177 : vector<8x128xf32>
    %179 = vector.extract_strided_slice %178 {offsets = [0, 0], sizes = [1, 128], strides = [1, 1]} : vector<8x128xf32> to vector<1x128xf32>
    %180 = vector.extract_strided_slice %178 {offsets = [1, 0], sizes = [1, 128], strides = [1, 1]} : vector<8x128xf32> to vector<1x128xf32>
    %181 = vector.extract_strided_slice %178 {offsets = [2, 0], sizes = [1, 128], strides = [1, 1]} : vector<8x128xf32> to vector<1x128xf32>
    %182 = vector.extract_strided_slice %178 {offsets = [3, 0], sizes = [1, 128], strides = [1, 1]} : vector<8x128xf32> to vector<1x128xf32>
    %183 = vector.extract_strided_slice %178 {offsets = [4, 0], sizes = [1, 128], strides = [1, 1]} : vector<8x128xf32> to vector<1x128xf32>
    %184 = tpu.concatenate %179, %180, %181, %182, %183 in 1 : vector<1x128xf32>, vector<1x128xf32>, vector<1x128xf32>, vector<1x128xf32>, vector<1x128xf32> -> vector<1x640xf32>
    %185 = arith.truncf %184 : vector<1x640xf32> to vector<1x640xbf16>
    %c0_149 = arith.constant 0 : index
    %c0_150 = arith.constant 0 : index
    %186 = vector.load %arg7[%c0_149, %c0_150] : memref<640x128xbf16, #tpu.memory_space<vmem>>, vector<640x128xbf16>
    %cst_151 = arith.constant dense<0.000000e+00> : vector<1x128xf32>
    %187 = tpu.matmul %185, %186, %cst_151 {dimension_numbers = #tpu.dot_dimension_numbers<[1], [0], [0], [1], [0, 0, 1, 1], [], []>} : vector<1x640xbf16>, vector<640x128xbf16>, vector<1x128xf32> -> vector<1x128xf32>
    %c0_152 = arith.constant 0 : index
    %c0_153 = arith.constant 0 : index
    %188 = vector.load %arg8[%c0_152, %c0_153] : memref<1x128xf32, #tpu.memory_space<vmem>>, vector<1x128xf32>
    %189 = arith.addf %187, %188 : vector<1x128xf32>
    %cst_154 = arith.constant 0.000000e+00 : f32
    %190 = vector.broadcast %cst_154 : f32 to vector<1x128xf32>
    %191 = arith.maximumf %189, %190 : vector<1x128xf32>
    %192 = arith.truncf %191 : vector<1x128xf32> to vector<1x128xbf16>
    %c0_155 = arith.constant 0 : index
    %c0_156 = arith.constant 0 : index
    %193 = vector.load %arg9[%c0_155, %c0_156] : memref<128x128xbf16, #tpu.memory_space<vmem>>, vector<128x128xbf16>
    %cst_157 = arith.constant dense<0.000000e+00> : vector<1x128xf32>
    %194 = tpu.matmul %192, %193, %cst_157 {dimension_numbers = #tpu.dot_dimension_numbers<[1], [0], [0], [1], [0, 0, 1, 1], [], []>} : vector<1x128xbf16>, vector<128x128xbf16>, vector<1x128xf32> -> vector<1x128xf32>
    %c0_158 = arith.constant 0 : index
    %c0_159 = arith.constant 0 : index
    %195 = vector.load %arg10[%c0_158, %c0_159] : memref<1x128xf32, #tpu.memory_space<vmem>>, vector<1x128xf32>
    %196 = arith.addf %194, %195 : vector<1x128xf32>
    %cst_160 = arith.constant 0.000000e+00 : f32
    %197 = vector.broadcast %cst_160 : f32 to vector<1x128xf32>
    %198 = arith.maximumf %196, %197 : vector<1x128xf32>
    %c0_161 = arith.constant 0 : index
    %c0_162 = arith.constant 0 : index
    %199 = vector.load %arg11[%c0_161, %c0_162] : memref<128x128xf32, #tpu.memory_space<vmem>>, vector<128x128xf32>
    %cst_163 = arith.constant dense<0.000000e+00> : vector<1x128xf32>
    %200 = tpu.matmul %198, %199, %cst_163 {dimension_numbers = #tpu.dot_dimension_numbers<[1], [0], [0], [1], [0, 0, 1, 1], [], []>} : vector<1x128xf32>, vector<128x128xf32>, vector<1x128xf32> -> vector<1x128xf32>
    %c0_164 = arith.constant 0 : index
    %c0_165 = arith.constant 0 : index
    %201 = vector.load %arg12[%c0_164, %c0_165] : memref<1x128xf32, #tpu.memory_space<vmem>>, vector<1x128xf32>
    %202 = arith.addf %200, %201 : vector<1x128xf32>
    %c1_166 = arith.constant 1 : index
    %c0_167 = arith.constant 0 : index
    %203 = vector.load %arg13[%c1_166, %c0_167] : memref<2x128xf32, #tpu.memory_space<vmem>>, vector<1x128xf32>
    tpu.vector_store %arg13[%c1_166, %c0_167], %202 {strides = array<i32>} : memref<2x128xf32, #tpu.memory_space<vmem>>, vector<1x128xf32>,
    return
  }
}

</mosaic_0001>

<llo_original>
// kernel: lenet_forward.1
$region0: #{lenet_forward.1}
  #allocation0 [shape = 'u32[]', space=smem, size = 0x4, offset = 0x4, fixed_abs, tag = 'smem constant byte address 0x4 - core index']
  #allocation1 [shape = 'u32[144,128]{1,0:T(1,128)}', space=vmem, size = 0x12000, scoped, tag = 'internal scratch']
  #allocation2 [shape = 'f32[2,16,128]{2,1,0:T(8,128)}', space=vmem, size = 0x4000, scoped, tag = 'scratch operand']
  %s0 = inlined_call_operand.hbm [shape: f32[2,32,32], index: 0, kind: input, shape index: {}]
  %s1 = inlined_call_operand.hbm [shape: bf16[5,32,256], index: 1, kind: input, shape index: {}]
  %s2 = inlined_call_operand.hbm [shape: f32[32,28], index: 2, kind: input, shape index: {}]
  %s3 = inlined_call_operand.vmem [shape: f32[1,128], index: 3, kind: input, shape index: {}]
  %s4 = inlined_call_operand.hbm [shape: bf16[640,256], index: 4, kind: input, shape index: {}]
  %s5 = inlined_call_operand.hbm [shape: f32[16,10], index: 5, kind: input, shape index: {}]
  %s6 = inlined_call_operand.vmem [shape: f32[1,128], index: 6, kind: input, shape index: {}]
  %s7 = inlined_call_operand.hbm [shape: bf16[640,128], index: 7, kind: input, shape index: {}]
  %s8 = inlined_call_operand.vmem [shape: f32[1,128], index: 8, kind: input, shape index: {}]
  %s9 = inlined_call_operand.hbm [shape: bf16[128,128], index: 9, kind: input, shape index: {}]
  %s10 = inlined_call_operand.vmem [shape: f32[1,128], index: 10, kind: input, shape index: {}]
  %s11 = inlined_call_operand.hbm [shape: f32[128,128], index: 11, kind: input, shape index: {}]
  %s12 = inlined_call_operand.vmem [shape: f32[1,128], index: 12, kind: input, shape index: {}]
  %s13 = inlined_call_operand.hbm [shape: f32[2,128], index: 13, kind: output, shape index: {}]
  %s14 = sld [smem:[#allocation0]]
  $region94: #{lenet_forward.1} parent=0
    _
  %s16 = ssub.s32 1, %s14
  %s17 = scalar_select 0, %s16, %s14
  $region1: #{lenet_forward.1} parent=0
    #allocation3 [shape = 'u8[32768]{0}', space=vmem, size = 0x8000, scoped, tag = 'input window, operand 0, single buffered']
    #allocation4 [shape = 's32[1]{0}', space=sflag, size = 0x4, scoped, tag = 'scoped memory for lenet_forward.1']
    #allocation5 [shape = 's32[1]{0}', space=sflag, size = 0x4, scoped, tag = 'scoped memory for lenet_forward.1']
    #allocation6 [shape = 'u8[81920]{0}', space=vmem, size = 0x14000, scoped, tag = 'input window, operand 1, single buffered']
    #allocation7 [shape = 's32[1]{0}', space=sflag, size = 0x4, scoped, tag = 'scoped memory for lenet_forward.1']
    #allocation8 [shape = 'u8[16384]{0}', space=vmem, size = 0x4000, scoped, tag = 'input window, operand 2, single buffered']
    #allocation9 [shape = 'u8[327680]{0}', space=vmem, size = 0x50000, scoped, tag = 'input window, operand 4, single buffered']
    #allocation10 [shape = 's32[1]{0}', space=sflag, size = 0x4, scoped, tag = 'scoped memory for lenet_forward.1']
    #allocation11 [shape = 'u8[8192]{0}', space=vmem, size = 0x2000, scoped, tag = 'input window, operand 5, single buffered']
    #allocation12 [shape = 'u8[163840]{0}', space=vmem, size = 0x28000, scoped, tag = 'input window, operand 7, single buffered']
    #allocation13 [shape = 's32[1]{0}', space=sflag, size = 0x4, scoped, tag = 'scoped memory for lenet_forward.1']
    #allocation14 [shape = 'u8[32768]{0}', space=vmem, size = 0x8000, scoped, tag = 'input window, operand 9, single buffered']
    #allocation15 [shape = 'u8[65536]{0}', space=vmem, size = 0x10000, scoped, tag = 'input window, operand 11, single buffered']
    #allocation16 [shape = 's32[1]{0}', space=sflag, size = 0x4, scoped, tag = 'scoped memory for lenet_forward.1']
    #allocation17 [shape = 'u8[1024]{0}', space=vmem, size = 0x400, scoped, tag = 'output window, operand 0, single buffered']
    %18 = vsyncpa [#allocation4], 0
    %19 = vsyncpa [#allocation7], 0
    %20 = vsyncpa [#allocation10], 0
    %21 = vsyncpa [#allocation13], 0
    %22 = vsyncpa [#allocation16], 0
    %23 = vsyncpa [#allocation5], 0
    // Predicated region
    $region2: #{lenet_forward.1} parent=1 // pred_check
      _
    $region3: #{lenet_forward.1} parent=1 // pred_check_branch
      %25 = sbr.rel (0) target = $region5
    $region4: #{lenet_forward.1} parent=1 // pred_region
      %s27 = ssub.s32 1024, 1024
      %28 = vsyncadd [#allocation4], %s27
      %s29 = sshll.u32 [#allocation3], 4
      %s30 = int_to_ptr.vmem [resolvable:$true] %s29
      %35 = dma.hbm_to_vmem [thread:$0]  %s0, 1024, %s30, [#allocation4], 128, 128, 8
    $region5: #{lenet_forward.1} parent=1 // pred_fallthru
      _
    // Predicated region
    $region6: #{lenet_forward.1} parent=1 // pred_check
      _
    $region7: #{lenet_forward.1} parent=1 // pred_check_branch
      %37 = sbr.rel (0) target = $region9
    $region8: #{lenet_forward.1} parent=1 // pred_region
      %s39 = ssub.s32 2560, 2560
      %40 = vsyncadd [#allocation7], %s39
      %s41 = sshll.u32 [#allocation6], 4
      %s42 = int_to_ptr.vmem [resolvable:$true] %s41
      %47 = dma.hbm_to_vmem [thread:$0]  %s1, 2560, %s42, [#allocation7], 128, 128, 8
    $region9: #{lenet_forward.1} parent=1 // pred_fallthru
      _
    // Predicated region
    $region10: #{lenet_forward.1} parent=1 // pred_check
      _
    $region11: #{lenet_forward.1} parent=1 // pred_check_branch
      %49 = sbr.rel (0) target = $region13
    $region12: #{lenet_forward.1} parent=1 // pred_region
      %s51 = ssub.s32 512, 512
      %52 = vsyncadd [#allocation7], %s51
      %s53 = sshll.u32 [#allocation8], 4
      %s54 = int_to_ptr.vmem [resolvable:$true] %s53
      %59 = dma.hbm_to_vmem [thread:$0]  %s2, 512, %s54, [#allocation7], 128, 128, 8
    $region13: #{lenet_forward.1} parent=1 // pred_fallthru
      _
    // Predicated region
    $region14: #{lenet_forward.1} parent=1 // pred_check
      _
    $region15: #{lenet_forward.1} parent=1 // pred_check_branch
      %61 = sbr.rel (0) target = $region17
    $region16: #{lenet_forward.1} parent=1 // pred_region
      _
    $region17: #{lenet_forward.1} parent=1 // pred_fallthru
      _
    // Predicated region
    $region18: #{lenet_forward.1} parent=1 // pred_check
      _
    $region19: #{lenet_forward.1} parent=1 // pred_check_branch
      %63 = sbr.rel (0) target = $region21
    $region20: #{lenet_forward.1} parent=1 // pred_region
      %s65 = ssub.s32 10240, 10240
      %66 = vsyncadd [#allocation10], %s65
      %s67 = sshll.u32 [#allocation9], 4
      %s68 = int_to_ptr.vmem [resolvable:$true] %s67
      %73 = dma.hbm_to_vmem [thread:$0]  %s4, 10240, %s68, [#allocation10], 128, 128, 8
    $region21: #{lenet_forward.1} parent=1 // pred_fallthru
      _
    // Predicated region
    $region22: #{lenet_forward.1} parent=1 // pred_check
      _
    $region23: #{lenet_forward.1} parent=1 // pred_check_branch
      %75 = sbr.rel (0) target = $region25
    $region24: #{lenet_forward.1} parent=1 // pred_region
      %s77 = ssub.s32 256, 256
      %78 = vsyncadd [#allocation10], %s77
      %s79 = sshll.u32 [#allocation11], 4
      %s80 = int_to_ptr.vmem [resolvable:$true] %s79
      %85 = dma.hbm_to_vmem [thread:$0]  %s5, 256, %s80, [#allocation10], 128, 128, 8
    $region25: #{lenet_forward.1} parent=1 // pred_fallthru
      _
    // Predicated region
    $region26: #{lenet_forward.1} parent=1 // pred_check
      _
    $region27: #{lenet_forward.1} parent=1 // pred_check_branch
      %87 = sbr.rel (0) target = $region29
    $region28: #{lenet_forward.1} parent=1 // pred_region
      _
    $region29: #{lenet_forward.1} parent=1 // pred_fallthru
      _
    // Predicated region
    $region30: #{lenet_forward.1} parent=1 // pred_check
      _
    $region31: #{lenet_forward.1} parent=1 // pred_check_branch
      %89 = sbr.rel (0) target = $region33
    $region32: #{lenet_forward.1} parent=1 // pred_region
      %s91 = ssub.s32 5120, 5120
      %92 = vsyncadd [#allocation13], %s91
      %s93 = sshll.u32 [#allocation12], 4
      %s94 = int_to_ptr.vmem [resolvable:$true] %s93
      %99 = dma.hbm_to_vmem [thread:$0]  %s7, 5120, %s94, [#allocation13], 64, 64, 4
    $region33: #{lenet_forward.1} parent=1 // pred_fallthru
      _
    // Predicated region
    $region34: #{lenet_forward.1} parent=1 // pred_check
      _
    $region35: #{lenet_forward.1} parent=1 // pred_check_branch
      %101 = sbr.rel (0) target = $region37
    $region36: #{lenet_forward.1} parent=1 // pred_region
      _
    $region37: #{lenet_forward.1} parent=1 // pred_fallthru
      _
    // Predicated region
    $region38: #{lenet_forward.1} parent=1 // pred_check
      _
    $region39: #{lenet_forward.1} parent=1 // pred_check_branch
      %103 = sbr.rel (0) target = $region41
    $region40: #{lenet_forward.1} parent=1 // pred_region
      %s105 = ssub.s32 1024, 1024
      %106 = vsyncadd [#allocation13], %s105
      %s107 = sshll.u32 [#allocation14], 4
      %s108 = int_to_ptr.vmem [resolvable:$true] %s107
      %113 = dma.hbm_to_vmem [thread:$0]  %s9, 1024, %s108, [#allocation13], 64, 64, 4
    $region41: #{lenet_forward.1} parent=1 // pred_fallthru
      _
    // Predicated region
    $region42: #{lenet_forward.1} parent=1 // pred_check
      _
    $region43: #{lenet_forward.1} parent=1 // pred_check_branch
      %115 = sbr.rel (0) target = $region45
    $region44: #{lenet_forward.1} parent=1 // pred_region
      _
    $region45: #{lenet_forward.1} parent=1 // pred_fallthru
      _
    // Predicated region
    $region46: #{lenet_forward.1} parent=1 // pred_check
      _
    $region47: #{lenet_forward.1} parent=1 // pred_check_branch
      %117 = sbr.rel (0) target = $region49
    $region48: #{lenet_forward.1} parent=1 // pred_region
      %s119 = ssub.s32 2048, 2048
      %120 = vsyncadd [#allocation16], %s119
      %s121 = sshll.u32 [#allocation15], 4
      %s122 = int_to_ptr.vmem [resolvable:$true] %s121
      %127 = dma.hbm_to_vmem [thread:$0]  %s11, 2048, %s122, [#allocation16], 128, 128, 8
    $region49: #{lenet_forward.1} parent=1 // pred_fallthru
      _
    // Predicated region
    $region50: #{lenet_forward.1} parent=1 // pred_check
      _
    $region51: #{lenet_forward.1} parent=1 // pred_check_branch
      %129 = sbr.rel (0) target = $region53
    $region52: #{lenet_forward.1} parent=1 // pred_region
      _
    $region53: #{lenet_forward.1} parent=1 // pred_fallthru
      _
    // Predicated region
    $region54: #{lenet_forward.1} parent=1 // pred_check
      _
    $region55: #{lenet_forward.1} parent=1 // pred_check_branch
      %131 = sbr.rel (0) target = $region57
    $region56: #{lenet_forward.1} parent=1 // pred_region
      %132 = dma.done [#allocation4], 1024
    $region57: #{lenet_forward.1} parent=1 // pred_fallthru
      _
    // Predicated region
    $region58: #{lenet_forward.1} parent=1 // pred_check
      _
    $region59: #{lenet_forward.1} parent=1 // pred_check_branch
      %134 = sbr.rel (0) target = $region61
    $region60: #{lenet_forward.1} parent=1 // pred_region
      %135 = dma.done [#allocation7], 2560
    $region61: #{lenet_forward.1} parent=1 // pred_fallthru
      _
    // Predicated region
    $region62: #{lenet_forward.1} parent=1 // pred_check
      _
    $region63: #{lenet_forward.1} parent=1 // pred_check_branch
      %137 = sbr.rel (0) target = $region65
    $region64: #{lenet_forward.1} parent=1 // pred_region
      %138 = dma.done [#allocation7], 512
    $region65: #{lenet_forward.1} parent=1 // pred_fallthru
      _
    // Predicated region
    $region66: #{lenet_forward.1} parent=1 // pred_check
      _
    $region67: #{lenet_forward.1} parent=1 // pred_check_branch
      %140 = sbr.rel (0) target = $region69
    $region68: #{lenet_forward.1} parent=1 // pred_region
      %141 = dma.done [#allocation10], 10240
    $region69: #{lenet_forward.1} parent=1 // pred_fallthru
      _
    // Predicated region
    $region70: #{lenet_forward.1} parent=1 // pred_check
      _
    $region71: #{lenet_forward.1} parent=1 // pred_check_branch
      %143 = sbr.rel (0) target = $region73
    $region72: #{lenet_forward.1} parent=1 // pred_region
      %144 = dma.done [#allocation10], 256
    $region73: #{lenet_forward.1} parent=1 // pred_fallthru
      _
    // Predicated region
    $region74: #{lenet_forward.1} parent=1 // pred_check
      _
    $region75: #{lenet_forward.1} parent=1 // pred_check_branch
      %146 = sbr.rel (0) target = $region77
    $region76: #{lenet_forward.1} parent=1 // pred_region
      %147 = dma.done [#allocation13], 5120
    $region77: #{lenet_forward.1} parent=1 // pred_fallthru
      _
    // Predicated region
    $region78: #{lenet_forward.1} parent=1 // pred_check
      _
    $region79: #{lenet_forward.1} parent=1 // pred_check_branch
      %149 = sbr.rel (0) target = $region81
    $region80: #{lenet_forward.1} parent=1 // pred_region
      %150 = dma.done [#allocation13], 1024
    $region81: #{lenet_forward.1} parent=1 // pred_fallthru
      _
    // Predicated region
    $region82: #{lenet_forward.1} parent=1 // pred_check
      _
    $region83: #{lenet_forward.1} parent=1 // pred_check_branch
      %152 = sbr.rel (0) target = $region85
    $region84: #{lenet_forward.1} parent=1 // pred_region
      %153 = dma.done [#allocation16], 2048
    $region85: #{lenet_forward.1} parent=1 // pred_fallthru
      _
    %v155 = vld [vmem:[#allocation3] sm:$0xff]
    %v156 = vld [vmem:[#allocation3 + $0x8] sm:$0xff]
    %v157 = vld [vmem:[#allocation3 + $0x10] sm:$0xff]
    %v158 = vld [vmem:[#allocation3 + $0x18] sm:$0xf]
    %v159 = vpack.c.bf16 %v156, %v155
    %v160 = vpack.c.bf16 %v158, %v157
    %v161 = vld [vmem:[#allocation6] sm:$0xff]
    %v162 = vld [vmem:[#allocation6 + $0x8] sm:$0xff]
    %v163 = vld [vmem:[#allocation6 + $0x10] sm:$0xff]
    %v164 = vld [vmem:[#allocation6 + $0x18] sm:$0xff]
    %v165 = vld [vmem:[#allocation3 + $0x1] sm:$0xff]
    %v166 = vld [vmem:[#allocation3 + $0x9] sm:$0xff]
    %v167 = vld [vmem:[#allocation3 + $0x11] sm:$0xff]
    %v168 = vld [vmem:[#allocation3 + $0x19] sm:$0xf]
    %v169 = vpack.c.bf16 %v166, %v165
    %v170 = vpack.c.bf16 %v168, %v167
    %s171 = scalar_lea.vmem [#allocation6], 32
    %v172 = vld [vmem:[%s171] sm:$0xff]
    %v173 = vld [vmem:[%s171 + $0x8] sm:$0xff]
    %v174 = vld [vmem:[%s171 + $0x10] sm:$0xff]
    %v175 = vld [vmem:[%s171 + $0x18] sm:$0xff]
    %v180 = vunpack.c.l.b16 %v172
    %v181 = vunpack.c.h.b16 %v172
    %v182 = vunpack.c.l.b16 %v173
    %v183 = vunpack.c.h.b16 %v173
    %v184 = vunpack.c.l.b16 %v174
    %v185 = vunpack.c.h.b16 %v174
    %v186 = vunpack.c.l.b16 %v175
    %v187 = vunpack.c.h.b16 %v175
    %v188 = vpack.c.b16 %v182, %v180
    %v189 = vpack.c.b16 %v183, %v181
    %v190 = vpack.c.b16 %v186, %v184
    %v191 = vpack.c.b16 %v187, %v185
    %vm196 = vcmask 261120
    %v198 = vsel %vm196, %v169, 0
    %v201 = vsel %vm196, %v170, 0
    %203 = vmatprep.subr.bf16.mxu0 0
    %204 = vmatpush1.bf16.msra.mxu0 0
    %205 = vmatprep.subr.bf16.mxu0 0
    %206 = vmatpush1.bf16.msra.mxu0 0
    %207 = vmatprep.subr.bf16.mxu0 0
    %208 = vmatpush1.bf16.msra.mxu0 0
    %209 = vmatprep.subr.bf16.mxu0 0
    %210 = vmatpush1.bf16.msra.mxu0 0
    %211 = vmatprep.subr.bf16.mxu0 0
    %212 = vmatpush1.bf16.msra.mxu0 0
    %213 = vmatprep.subr.bf16.mxu0 0
    %214 = vmatpush1.bf16.msra.mxu0 0
    %215 = vmatprep.subr.bf16.mxu0 %v191
    %216 = vmatpush1.bf16.msra.mxu0 %v190
    %217 = vmatprep.subr.bf16.mxu0 %v189
    %218 = vmatpush1.bf16.msra.mxu0 %v188
    %219 = vmatprep.subr.bf16.mxu0 0
    %220 = vmatpush2.bf16.msra.mxu0 0
    %221 = vmatprep.subr.bf16.mxu0 0
    %222 = vmatpush2.bf16.msra.mxu0 0
    %223 = vmatprep.subr.bf16.mxu0 0
    %224 = vmatpush2.bf16.msra.mxu0 0
    %225 = vmatprep.subr.bf16.mxu0 0
    %226 = vmatpush2.bf16.msra.mxu0 0
    %227 = vmatprep.subr.bf16.mxu0 0
    %228 = vmatpush2.bf16.msra.mxu0 0
    %229 = vmatprep.subr.bf16.mxu0 0
    %230 = vmatpush2.bf16.msra.mxu0 0
    %231 = vmatprep.subr.bf16.mxu0 0
    %232 = vmatpush2.bf16.msra.mxu0 0
    %233 = vmatprep.subr.bf16.mxu0 0
    %234 = vmatpush2.bf16.msra.mxu0 0
    %235 = vmatprep.mubr.bf16.mxu0 0
    %236 = vmatmul.mubr.bf16.gmra.mxu0 %v198
    %v237 = vpop.f32.mrf.mxu0
    %v238 = vadd.f32 0.0, %v237
    %v239 = vpop.f32.mrf.mxu0
    %v240 = vadd.f32 0.0, %v239
    %v241 = vpop.f32.mrf.mxu0
    %v242 = vadd.f32 0.0, %v241
    %v243 = vpop.f32.mrf.mxu0
    %v244 = vadd.f32 0.0, %v243
    %245 = vmatprep.mubr.bf16.mxu0 0
    %246 = vmatmul.mubr.bf16.gmra.mxu0 %v201
    %v247 = vpop.f32.mrf.mxu0
    %v248 = vadd.f32 0.0, %v247
    %v249 = vpop.f32.mrf.mxu0
    %v250 = vadd.f32 0.0, %v249
    %v251 = vpop.f32.mrf.mxu0
    %v252 = vadd.f32 0.0, %v251
    %v253 = vpop.f32.mrf.mxu0
    %v254 = vadd.f32 0.0, %v253
    %255 = vdwg.mxu0
    %v260 = vunpack.c.l.b16 %v161
    %v261 = vunpack.c.h.b16 %v161
    %v262 = vunpack.c.l.b16 %v162
    %v263 = vunpack.c.h.b16 %v162
    %v264 = vunpack.c.l.b16 %v163
    %v265 = vunpack.c.h.b16 %v163
    %v266 = vunpack.c.l.b16 %v164
    %v267 = vunpack.c.h.b16 %v164
    %v268 = vpack.c.b16 %v262, %v260
    %v269 = vpack.c.b16 %v263, %v261
    %v270 = vpack.c.b16 %v266, %v264
    %v271 = vpack.c.b16 %v267, %v265
    %v277 = vsel %vm196, %v159, 0
    %v280 = vsel %vm196, %v160, 0
    %282 = vmatprep.subr.bf16.mxu0 0
    %283 = vmatpush1.bf16.msra.mxu0 0
    %284 = vmatprep.subr.bf16.mxu0 0
    %285 = vmatpush1.bf16.msra.mxu0 0
    %286 = vmatprep.subr.bf16.mxu0 0
    %287 = vmatpush1.bf16.msra.mxu0 0
    %288 = vmatprep.subr.bf16.mxu0 0
    %289 = vmatpush1.bf16.msra.mxu0 0
    %290 = vmatprep.subr.bf16.mxu0 0
    %291 = vmatpush1.bf16.msra.mxu0 0
    %292 = vmatprep.subr.bf16.mxu0 0
    %293 = vmatpush1.bf16.msra.mxu0 0
    %294 = vmatprep.subr.bf16.mxu0 %v271
    %295 = vmatpush1.bf16.msra.mxu0 %v270
    %296 = vmatprep.subr.bf16.mxu0 %v269
    %297 = vmatpush1.bf16.msra.mxu0 %v268
    %298 = vmatprep.subr.bf16.mxu0 0
    %299 = vmatpush2.bf16.msra.mxu0 0
    %300 = vmatprep.subr.bf16.mxu0 0
    %301 = vmatpush2.bf16.msra.mxu0 0
    %302 = vmatprep.subr.bf16.mxu0 0
    %303 = vmatpush2.bf16.msra.mxu0 0
    %304 = vmatprep.subr.bf16.mxu0 0
    %305 = vmatpush2.bf16.msra.mxu0 0
    %306 = vmatprep.subr.bf16.mxu0 0
    %307 = vmatpush2.bf16.msra.mxu0 0
    %308 = vmatprep.subr.bf16.mxu0 0
    %309 = vmatpush2.bf16.msra.mxu0 0
    %310 = vmatprep.subr.bf16.mxu0 0
    %311 = vmatpush2.bf16.msra.mxu0 0
    %312 = vmatprep.subr.bf16.mxu0 0
    %313 = vmatpush2.bf16.msra.mxu0 0
    %314 = vmatprep.mubr.bf16.mxu0 0
    %315 = vmatmul.mubr.bf16.gmra.mxu0 %v277
    %v316 = vpop.f32.mrf.mxu0
    %v317 = vadd.f32 %v238, %v316
    %v318 = vpop.f32.mrf.mxu0
    %v319 = vadd.f32 %v240, %v318
    %v320 = vpop.f32.mrf.mxu0
    %v321 = vadd.f32 %v242, %v320
    %v322 = vpop.f32.mrf.mxu0
    %v323 = vadd.f32 %v244, %v322
    %324 = vmatprep.mubr.bf16.mxu0 0
    %325 = vmatmul.mubr.bf16.gmra.mxu0 %v280
    %v326 = vpop.f32.mrf.mxu0
    %v327 = vadd.f32 %v248, %v326
    %v328 = vpop.f32.mrf.mxu0
    %v329 = vadd.f32 %v250, %v328
    %v330 = vpop.f32.mrf.mxu0
    %v331 = vadd.f32 %v252, %v330
    %v332 = vpop.f32.mrf.mxu0
    %v333 = vadd.f32 %v254, %v332
    %334 = vdwg.mxu0
    %v335 = vld [vmem:[#allocation3 + $0x2] sm:$0xff]
    %v336 = vld [vmem:[#allocation3 + $0xa] sm:$0xff]
    %v337 = vld [vmem:[#allocation3 + $0x12] sm:$0xff]
    %v338 = vld [vmem:[#allocation3 + $0x1a] sm:$0xf]
    %v339 = vpack.c.bf16 %v336, %v335
    %v340 = vpack.c.bf16 %v338, %v337
    %s341 = scalar_lea.vmem [#allocation6], 64
    %v342 = vld [vmem:[%s341] sm:$0xff]
    %v343 = vld [vmem:[%s341 + $0x8] sm:$0xff]
    %v344 = vld [vmem:[%s341 + $0x10] sm:$0xff]
    %v345 = vld [vmem:[%s341 + $0x18] sm:$0xff]
    %v350 = vunpack.c.l.b16 %v342
    %v351 = vunpack.c.h.b16 %v342
    %v352 = vunpack.c.l.b16 %v343
    %v353 = vunpack.c.h.b16 %v343
    %v354 = vunpack.c.l.b16 %v344
    %v355 = vunpack.c.h.b16 %v344
    %v356 = vunpack.c.l.b16 %v345
    %v357 = vunpack.c.h.b16 %v345
    %v358 = vpack.c.b16 %v352, %v350
    %v359 = vpack.c.b16 %v353, %v351
    %v360 = vpack.c.b16 %v356, %v354
    %v361 = vpack.c.b16 %v357, %v355
    %v367 = vsel %vm196, %v339, 0
    %v370 = vsel %vm196, %v340, 0
    %372 = vmatprep.subr.bf16.mxu0 0
    %373 = vmatpush1.bf16.msra.mxu0 0
    %374 = vmatprep.subr.bf16.mxu0 0
    %375 = vmatpush1.bf16.msra.mxu0 0
    %376 = vmatprep.subr.bf16.mxu0 0
    %377 = vmatpush1.bf16.msra.mxu0 0
    %378 = vmatprep.subr.bf16.mxu0 0
    %379 = vmatpush1.bf16.msra.mxu0 0
    %380 = vmatprep.subr.bf16.mxu0 0
    %381 = vmatpush1.bf16.msra.mxu0 0
    %382 = vmatprep.subr.bf16.mxu0 0
    %383 = vmatpush1.bf16.msra.mxu0 0
    %384 = vmatprep.subr.bf16.mxu0 %v361
    %385 = vmatpush1.bf16.msra.mxu0 %v360
    %386 = vmatprep.subr.bf16.mxu0 %v359
    %387 = vmatpush1.bf16.msra.mxu0 %v358
    %388 = vmatprep.subr.bf16.mxu0 0
    %389 = vmatpush2.bf16.msra.mxu0 0
    %390 = vmatprep.subr.bf16.mxu0 0
    %391 = vmatpush2.bf16.msra.mxu0 0
    %392 = vmatprep.subr.bf16.mxu0 0
    %393 = vmatpush2.bf16.msra.mxu0 0
    %394 = vmatprep.subr.bf16.mxu0 0
    %395 = vmatpush2.bf16.msra.mxu0 0
    %396 = vmatprep.subr.bf16.mxu0 0
    %397 = vmatpush2.bf16.msra.mxu0 0
    %398 = vmatprep.subr.bf16.mxu0 0
    %399 = vmatpush2.bf16.msra.mxu0 0
    %400 = vmatprep.subr.bf16.mxu0 0
    %401 = vmatpush2.bf16.msra.mxu0 0
    %402 = vmatprep.subr.bf16.mxu0 0
    %403 = vmatpush2.bf16.msra.mxu0 0
    %404 = vmatprep.mubr.bf16.mxu0 0
    %405 = vmatmul.mubr.bf16.gmra.mxu0 %v367
    %v406 = vpop.f32.mrf.mxu0
    %v407 = vadd.f32 0.0, %v406
    %v408 = vpop.f32.mrf.mxu0
    %v409 = vadd.f32 0.0, %v408
    %v410 = vpop.f32.mrf.mxu0
    %v411 = vadd.f32 0.0, %v410
    %v412 = vpop.f32.mrf.mxu0
    %v413 = vadd.f32 0.0, %v412
    %414 = vmatprep.mubr.bf16.mxu0 0
    %415 = vmatmul.mubr.bf16.gmra.mxu0 %v370
    %v416 = vpop.f32.mrf.mxu0
    %v417 = vadd.f32 0.0, %v416
    %v418 = vpop.f32.mrf.mxu0
    %v419 = vadd.f32 0.0, %v418
    %v420 = vpop.f32.mrf.mxu0
    %v421 = vadd.f32 0.0, %v420
    %v422 = vpop.f32.mrf.mxu0
    %v423 = vadd.f32 0.0, %v422
    %424 = vdwg.mxu0
    %v425 = vadd.f32 %v317, %v407
    %v426 = vadd.f32 %v319, %v409
    %v427 = vadd.f32 %v321, %v411
    %v428 = vadd.f32 %v323, %v413
    %v429 = vadd.f32 %v327, %v417
    %v430 = vadd.f32 %v329, %v419
    %v431 = vadd.f32 %v331, %v421
    %v432 = vadd.f32 %v333, %v423
    %v433 = vld [vmem:[#allocation3 + $0x3] sm:$0xff]
    %v434 = vld [vmem:[#allocation3 + $0xb] sm:$0xff]
    %v435 = vld [vmem:[#allocation3 + $0x13] sm:$0xff]
    %v436 = vld [vmem:[#allocation3 + $0x1b] sm:$0xf]
    %v437 = vpack.c.bf16 %v434, %v433
    %v438 = vpack.c.bf16 %v436, %v435
    %s439 = scalar_lea.vmem [#allocation6], 96
    %v440 = vld [vmem:[%s439] sm:$0xff]
    %v441 = vld [vmem:[%s439 + $0x8] sm:$0xff]
    %v442 = vld [vmem:[%s439 + $0x10] sm:$0xff]
    %v443 = vld [vmem:[%s439 + $0x18] sm:$0xff]
    %v448 = vunpack.c.l.b16 %v440
    %v449 = vunpack.c.h.b16 %v440
    %v450 = vunpack.c.l.b16 %v441
    %v451 = vunpack.c.h.b16 %v441
    %v452 = vunpack.c.l.b16 %v442
    %v453 = vunpack.c.h.b16 %v442
    %v454 = vunpack.c.l.b16 %v443
    %v455 = vunpack.c.h.b16 %v443
    %v456 = vpack.c.b16 %v450, %v448
    %v457 = vpack.c.b16 %v451, %v449
    %v458 = vpack.c.b16 %v454, %v452
    %v459 = vpack.c.b16 %v455, %v453
    %v465 = vsel %vm196, %v437, 0
    %v468 = vsel %vm196, %v438, 0
    %470 = vmatprep.subr.bf16.mxu0 0
    %471 = vmatpush1.bf16.msra.mxu0 0
    %472 = vmatprep.subr.bf16.mxu0 0
    %473 = vmatpush1.bf16.msra.mxu0 0
    %474 = vmatprep.subr.bf16.mxu0 0
    %475 = vmatpush1.bf16.msra.mxu0 0
    %476 = vmatprep.subr.bf16.mxu0 0
    %477 = vmatpush1.bf16.msra.mxu0 0
    %478 = vmatprep.subr.bf16.mxu0 0
    %479 = vmatpush1.bf16.msra.mxu0 0
    %480 = vmatprep.subr.bf16.mxu0 0
    %481 = vmatpush1.bf16.msra.mxu0 0
    %482 = vmatprep.subr.bf16.mxu0 %v459
    %483 = vmatpush1.bf16.msra.mxu0 %v458
    %484 = vmatprep.subr.bf16.mxu0 %v457
    %485 = vmatpush1.bf16.msra.mxu0 %v456
    %486 = vmatprep.subr.bf16.mxu0 0
    %487 = vmatpush2.bf16.msra.mxu0 0
    %488 = vmatprep.subr.bf16.mxu0 0
    %489 = vmatpush2.bf16.msra.mxu0 0
    %490 = vmatprep.subr.bf16.mxu0 0
    %491 = vmatpush2.bf16.msra.mxu0 0
    %492 = vmatprep.subr.bf16.mxu0 0
    %493 = vmatpush2.bf16.msra.mxu0 0
    %494 = vmatprep.subr.bf16.mxu0 0
    %495 = vmatpush2.bf16.msra.mxu0 0
    %496 = vmatprep.subr.bf16.mxu0 0
    %497 = vmatpush2.bf16.msra.mxu0 0
    %498 = vmatprep.subr.bf16.mxu0 0
    %499 = vmatpush2.bf16.msra.mxu0 0
    %500 = vmatprep.subr.bf16.mxu0 0
    %501 = vmatpush2.bf16.msra.mxu0 0
    %502 = vmatprep.mubr.bf16.mxu0 0
    %503 = vmatmul.mubr.bf16.gmra.mxu0 %v465
    %v504 = vpop.f32.mrf.mxu0
    %v505 = vadd.f32 0.0, %v504
    %v506 = vpop.f32.mrf.mxu0
    %v507 = vadd.f32 0.0, %v506
    %v508 = vpop.f32.mrf.mxu0
    %v509 = vadd.f32 0.0, %v508
    %v510 = vpop.f32.mrf.mxu0
    %v511 = vadd.f32 0.0, %v510
    %512 = vmatprep.mubr.bf16.mxu0 0
    %513 = vmatmul.mubr.bf16.gmra.mxu0 %v468
    %v514 = vpop.f32.mrf.mxu0
    %v515 = vadd.f32 0.0, %v514
    %v516 = vpop.f32.mrf.mxu0
    %v517 = vadd.f32 0.0, %v516
    %v518 = vpop.f32.mrf.mxu0
    %v519 = vadd.f32 0.0, %v518
    %v520 = vpop.f32.mrf.mxu0
    %v521 = vadd.f32 0.0, %v520
    %522 = vdwg.mxu0
    %v523 = vadd.f32 %v425, %v505
    %v524 = vadd.f32 %v426, %v507
    %v525 = vadd.f32 %v427, %v509
    %v526 = vadd.f32 %v428, %v511
    %v527 = vadd.f32 %v429, %v515
    %v528 = vadd.f32 %v430, %v517
    %v529 = vadd.f32 %v431, %v519
    %v530 = vadd.f32 %v432, %v521
    %v531 = vld [vmem:[#allocation3 + $0x4] sm:$0xff]
    %v532 = vld [vmem:[#allocation3 + $0xc] sm:$0xff]
    %v533 = vld [vmem:[#allocation3 + $0x14] sm:$0xff]
    %v534 = vld [vmem:[#allocation3 + $0x1c] sm:$0xf]
    %v535 = vpack.c.bf16 %v532, %v531
    %v536 = vpack.c.bf16 %v534, %v533
    %s537 = scalar_lea.vmem [#allocation6], 128
    %v538 = vld [vmem:[%s537] sm:$0xff]
    %v539 = vld [vmem:[%s537 + $0x8] sm:$0xff]
    %v540 = vld [vmem:[%s537 + $0x10] sm:$0xff]
    %v541 = vld [vmem:[%s537 + $0x18] sm:$0xff]
    %v546 = vunpack.c.l.b16 %v538
    %v547 = vunpack.c.h.b16 %v538
    %v548 = vunpack.c.l.b16 %v539
    %v549 = vunpack.c.h.b16 %v539
    %v550 = vunpack.c.l.b16 %v540
    %v551 = vunpack.c.h.b16 %v540
    %v552 = vunpack.c.l.b16 %v541
    %v553 = vunpack.c.h.b16 %v541
    %v554 = vpack.c.b16 %v548, %v546
    %v555 = vpack.c.b16 %v549, %v547
    %v556 = vpack.c.b16 %v552, %v550
    %v557 = vpack.c.b16 %v553, %v551
    %v563 = vsel %vm196, %v535, 0
    %v566 = vsel %vm196, %v536, 0
    %568 = vmatprep.subr.bf16.mxu0 0
    %569 = vmatpush1.bf16.msra.mxu0 0
    %570 = vmatprep.subr.bf16.mxu0 0
    %571 = vmatpush1.bf16.msra.mxu0 0
    %572 = vmatprep.subr.bf16.mxu0 0
    %573 = vmatpush1.bf16.msra.mxu0 0
    %574 = vmatprep.subr.bf16.mxu0 0
    %575 = vmatpush1.bf16.msra.mxu0 0
    %576 = vmatprep.subr.bf16.mxu0 0
    %577 = vmatpush1.bf16.msra.mxu0 0
    %578 = vmatprep.subr.bf16.mxu0 0
    %579 = vmatpush1.bf16.msra.mxu0 0
    %580 = vmatprep.subr.bf16.mxu0 %v557
    %581 = vmatpush1.bf16.msra.mxu0 %v556
    %582 = vmatprep.subr.bf16.mxu0 %v555
    %583 = vmatpush1.bf16.msra.mxu0 %v554
    %584 = vmatprep.subr.bf16.mxu0 0
    %585 = vmatpush2.bf16.msra.mxu0 0
    %586 = vmatprep.subr.bf16.mxu0 0
    %587 = vmatpush2.bf16.msra.mxu0 0
    %588 = vmatprep.subr.bf16.mxu0 0
    %589 = vmatpush2.bf16.msra.mxu0 0
    %590 = vmatprep.subr.bf16.mxu0 0
    %591 = vmatpush2.bf16.msra.mxu0 0
    %592 = vmatprep.subr.bf16.mxu0 0
    %593 = vmatpush2.bf16.msra.mxu0 0
    %594 = vmatprep.subr.bf16.mxu0 0
    %595 = vmatpush2.bf16.msra.mxu0 0
    %596 = vmatprep.subr.bf16.mxu0 0
    %597 = vmatpush2.bf16.msra.mxu0 0
    %598 = vmatprep.subr.bf16.mxu0 0
    %599 = vmatpush2.bf16.msra.mxu0 0
    %600 = vmatprep.mubr.bf16.mxu0 0
    %601 = vmatmul.mubr.bf16.gmra.mxu0 %v563
    %v602 = vpop.f32.mrf.mxu0
    %v603 = vadd.f32 0.0, %v602
    %v604 = vpop.f32.mrf.mxu0
    %v605 = vadd.f32 0.0, %v604
    %v606 = vpop.f32.mrf.mxu0
    %v607 = vadd.f32 0.0, %v606
    %v608 = vpop.f32.mrf.mxu0
    %v609 = vadd.f32 0.0, %v608
    %610 = vmatprep.mubr.bf16.mxu0 0
    %611 = vmatmul.mubr.bf16.gmra.mxu0 %v566
    %v612 = vpop.f32.mrf.mxu0
    %v613 = vadd.f32 0.0, %v612
    %v614 = vpop.f32.mrf.mxu0
    %v615 = vadd.f32 0.0, %v614
    %v616 = vpop.f32.mrf.mxu0
    %v617 = vadd.f32 0.0, %v616
    %v618 = vpop.f32.mrf.mxu0
    %v619 = vadd.f32 0.0, %v618
    %620 = vdwg.mxu0
    %v621 = vadd.f32 %v523, %v603
    %v622 = vadd.f32 %v524, %v605
    %v623 = vadd.f32 %v525, %v607
    %v624 = vadd.f32 %v526, %v609
    %v625 = vadd.f32 %v527, %v613
    %v626 = vadd.f32 %v528, %v615
    %v627 = vadd.f32 %v529, %v617
    %v628 = vadd.f32 %v530, %v619
    %v629 = vmax.f32 %v621, %v622
    %v630 = vmax.f32 %v623, %v624
    %v631 = vmax.f32 %v625, %v626
    %v632 = vmax.f32 %v627, %v628
    %v633 = vld [vmem:[#allocation8] sm:$0xff]
    %v634 = vld [vmem:[#allocation8 + $0x8] sm:$0xff]
    %v635 = vld [vmem:[#allocation8 + $0x10] sm:$0xff]
    %v636 = vld [vmem:[#allocation8 + $0x18] sm:$0xff]
    %vm637 = vcmask 228352
    %v639 = vsel %vm637, %v633, 0
    %v642 = vsel %vm637, %v634, 0
    %v645 = vsel %vm637, %v635, 0
    %v648 = vsel %vm637, %v636, 0
    %vm650 = vcmask 1043456
    %v652 = vsel %vm650, %v632, 0
    %654 = vmatprep.subr.mxu0 0.0
    %655 = vmatpush1.msra.mxu0 0.0
    %656 = vmatprep.subr.mxu0 0.0
    %657 = vmatpush1.msra.mxu0 0.0
    %658 = vmatprep.subr.mxu0 0.0
    %659 = vmatpush1.msra.mxu0 0.0
    %660 = vmatprep.subr.mxu0 0.0
    %661 = vmatpush1.msra.mxu0 0.0
    %662 = vmatprep.subr.mxu0 0.0
    %663 = vmatpush1.msra.mxu0 0.0
    %664 = vmatprep.subr.mxu0 0.0
    %665 = vmatpush1.msra.mxu0 0.0
    %666 = vmatprep.subr.mxu0 0.0
    %667 = vmatpush1.msra.mxu0 0.0
    %668 = vmatprep.subr.mxu0 0.0
    %669 = vmatpush1.msra.mxu0 0.0
    %670 = vmatprep.subr.mxu0 0.0
    %671 = vmatpush1.msra.mxu0 0.0
    %672 = vmatprep.subr.mxu0 0.0
    %673 = vmatpush1.msra.mxu0 0.0
    %674 = vmatprep.subr.mxu0 0.0
    %675 = vmatpush1.msra.mxu0 0.0
    %676 = vmatprep.subr.mxu0 0.0
    %677 = vmatpush1.msra.mxu0 0.0
    %678 = vmatprep.subr.mxu0 0.0
    %679 = vmatpush1.msra.mxu0 %v652
    %680 = vmatprep.subr.mxu0 0.0
    %681 = vmatpush1.msra.mxu0 %v631
    %682 = vmatprep.subr.mxu0 0.0
    %683 = vmatpush1.msra.mxu0 %v630
    %684 = vmatprep.subr.mxu0 0.0
    %685 = vmatpush1.msra.mxu0 %v629
    %686 = vmatprep.subr.mxu0 0.0
    %687 = vmatpush2.msra.mxu0 0.0
    %688 = vmatprep.subr.mxu0 0.0
    %689 = vmatpush2.msra.mxu0 0.0
    %690 = vmatprep.subr.mxu0 0.0
    %691 = vmatpush2.msra.mxu0 0.0
    %692 = vmatprep.subr.mxu0 0.0
    %693 = vmatpush2.msra.mxu0 0.0
    %694 = vmatprep.subr.mxu0 0.0
    %695 = vmatpush2.msra.mxu0 0.0
    %696 = vmatprep.subr.mxu0 0.0
    %697 = vmatpush2.msra.mxu0 0.0
    %698 = vmatprep.subr.mxu0 0.0
    %699 = vmatpush2.msra.mxu0 0.0
    %700 = vmatprep.subr.mxu0 0.0
    %701 = vmatpush2.msra.mxu0 0.0
    %702 = vmatprep.subr.mxu0 0.0
    %703 = vmatpush2.msra.mxu0 0.0
    %704 = vmatprep.subr.mxu0 0.0
    %705 = vmatpush2.msra.mxu0 0.0
    %706 = vmatprep.subr.mxu0 0.0
    %707 = vmatpush2.msra.mxu0 0.0
    %708 = vmatprep.subr.mxu0 0.0
    %709 = vmatpush2.msra.mxu0 0.0
    %710 = vmatprep.subr.mxu0 0.0
    %711 = vmatpush2.msra.mxu0 0.0
    %712 = vmatprep.subr.mxu0 0.0
    %713 = vmatpush2.msra.mxu0 0.0
    %714 = vmatprep.subr.mxu0 0.0
    %715 = vmatpush2.msra.mxu0 0.0
    %716 = vmatprep.subr.mxu0 0.0
    %717 = vmatpush2.msra.mxu0 0.0
    %718 = vmatprep.mubr.f32.mxu0 0.0
    %719 = vmatmul.mubr.f32.gmra.mxu0 %v639
    %v720 = vpop.f32.mrf.mxu0
    %v721 = vadd.f32 0.0, %v720
    %v722 = vpop.f32.mrf.mxu0
    %723 = vmatprep.mubr.f32.mxu0 0.0
    %724 = vmatmul.mubr.f32.gmra.mxu0 %v642
    %v725 = vpop.f32.mrf.mxu0
    %v726 = vadd.f32 0.0, %v725
    %v727 = vpop.f32.mrf.mxu0
    %728 = vmatprep.mubr.f32.mxu0 0.0
    %729 = vmatmul.mubr.f32.gmra.mxu0 %v645
    %v730 = vpop.f32.mrf.mxu0
    %v731 = vadd.f32 0.0, %v730
    %v732 = vpop.f32.mrf.mxu0
    %733 = vmatprep.mubr.f32.mxu0 0.0
    %734 = vmatmul.mubr.f32.gmra.mxu0 %v648
    %v735 = vpop.f32.mrf.mxu0
    %v736 = vadd.f32 0.0, %v735
    %v737 = vpop.f32.mrf.mxu0
    %738 = vdwg.mxu0
    %v739 = vmax.f32 %v721, %v731
    %v740 = vmax.f32 %v726, %v736
    %v741 = vld [vmem:[%s3] sm:$0x1]
    %v743 = vlaneseq
    %v744 = vshrl.u32 %v743, 7
    %v745 = vsub.s32 0, %v744
    %v746 = vrot.slane %v741, %v745
    %v748 = vadd.f32 %v739, %v746
    %v749 = vadd.f32 %v740, %v746
    %v750 = vmax.f32 %v748, 0.0
    %v751 = vmax.f32 %v749, 0.0
    %752 = vst [vmem:[#allocation2] sm:$0xff] %v750
    %753 = vst [vmem:[#allocation2 + $0x8] sm:$0xff] %v751
    %v754 = vld [vmem:[#allocation2] sm:$0xff]
    %v755 = vld [vmem:[#allocation2 + $0x8] sm:$0x3]
    %v756 = vld [vmem:[#allocation2 + $0x1] sm:$0xff]
    %v757 = vld [vmem:[#allocation2 + $0x9] sm:$0x3]
    %v758 = vld [vmem:[#allocation2 + $0x2] sm:$0xff]
    %v759 = vld [vmem:[#allocation2 + $0xa] sm:$0x3]
    %v760 = vld [vmem:[#allocation2 + $0x3] sm:$0xff]
    %v761 = vld [vmem:[#allocation2 + $0xb] sm:$0x3]
    %v762 = vld [vmem:[#allocation2 + $0x4] sm:$0xff]
    %v763 = vld [vmem:[#allocation2 + $0xc] sm:$0x3]
    %v764 = vpack.c.bf16 %v755, %v754
    %v765 = vpack.c.bf16 %v757, %v756
    %v766 = vpack.c.bf16 %v759, %v758
    %v767 = vpack.c.bf16 %v761, %v760
    %v768 = vpack.c.bf16 %v763, %v762
    %v769 = vld [vmem:[#allocation9] sm:$0xff]
    %v770 = vld [vmem:[#allocation9 + $0x8] sm:$0xff]
    %v771 = vld [vmem:[#allocation9 + $0x10] sm:$0xff]
    %v772 = vld [vmem:[#allocation9 + $0x18] sm:$0xff]
    %v773 = vld [vmem:[#allocation9 + $0x20] sm:$0xff]
    %v774 = vld [vmem:[#allocation9 + $0x28] sm:$0xff]
    %v775 = vld [vmem:[#allocation9 + $0x30] sm:$0xff]
    %v776 = vld [vmem:[#allocation9 + $0x38] sm:$0xff]
    %v777 = vld [vmem:[#allocation9 + $0x40] sm:$0xff]
    %v778 = vld [vmem:[#allocation9 + $0x48] sm:$0xff]
    %v779 = vld [vmem:[#allocation9 + $0x50] sm:$0xff]
    %v780 = vld [vmem:[#allocation9 + $0x58] sm:$0xff]
    %v781 = vld [vmem:[#allocation9 + $0x60] sm:$0xff]
    %v782 = vld [vmem:[#allocation9 + $0x68] sm:$0xff]
    %v783 = vld [vmem:[#allocation9 + $0x70] sm:$0xff]
    %v784 = vld [vmem:[#allocation9 + $0x78] sm:$0xff]
    %v785 = vld [vmem:[#allocation9 + $0x80] sm:$0xff]
    %v786 = vld [vmem:[#allocation9 + $0x88] sm:$0xff]
    %v787 = vld [vmem:[#allocation9 + $0x90] sm:$0xff]
    %v788 = vld [vmem:[#allocation9 + $0x98] sm:$0xff]
    %v789 = vld [vmem:[#allocation9 + $0xa0] sm:$0xff]
    %v790 = vld [vmem:[#allocation9 + $0xa8] sm:$0xff]
    %v791 = vld [vmem:[#allocation9 + $0xb0] sm:$0xff]
    %v792 = vld [vmem:[#allocation9 + $0xb8] sm:$0xff]
    %v793 = vld [vmem:[#allocation9 + $0xc0] sm:$0xff]
    %v794 = vld [vmem:[#allocation9 + $0xc8] sm:$0xff]
    %v795 = vld [vmem:[#allocation9 + $0xd0] sm:$0xff]
    %v796 = vld [vmem:[#allocation9 + $0xd8] sm:$0xff]
    %v797 = vld [vmem:[#allocation9 + $0xe0] sm:$0xff]
    %v798 = vld [vmem:[#allocation9 + $0xe8] sm:$0xff]
    %v799 = vld [vmem:[#allocation9 + $0xf0] sm:$0xff]
    %v800 = vld [vmem:[#allocation9 + $0xf8] sm:$0xff]
    %v801 = vld [vmem:[#allocation9 + $0x100] sm:$0xff]
    %v802 = vld [vmem:[#allocation9 + $0x108] sm:$0xff]
    %v803 = vld [vmem:[#allocation9 + $0x110] sm:$0xff]
    %v804 = vld [vmem:[#allocation9 + $0x118] sm:$0xff]
    %v805 = vld [vmem:[#allocation9 + $0x120] sm:$0xff]
    %v806 = vld [vmem:[#allocation9 + $0x128] sm:$0xff]
    %v807 = vld [vmem:[#allocation9 + $0x130] sm:$0xff]
    %v808 = vld [vmem:[#allocation9 + $0x138] sm:$0xff]
    %v809 = vld [vmem:[#allocation9 + $0x140] sm:$0xff]
    %v810 = vld [vmem:[#allocation9 + $0x148] sm:$0xff]
    %v811 = vld [vmem:[#allocation9 + $0x150] sm:$0xff]
    %v812 = vld [vmem:[#allocation9 + $0x158] sm:$0xff]
    %v813 = vld [vmem:[#allocation9 + $0x160] sm:$0xff]
    %v814 = vld [vmem:[#allocation9 + $0x168] sm:$0xff]
    %v815 = vld [vmem:[#allocation9 + $0x170] sm:$0xff]
    %v816 = vld [vmem:[#allocation9 + $0x178] sm:$0xff]
    %v817 = vld [vmem:[#allocation9 + $0x180] sm:$0xff]
    %v818 = vld [vmem:[#allocation9 + $0x188] sm:$0xff]
    %v819 = vld [vmem:[#allocation9 + $0x190] sm:$0xff]
    %v820 = vld [vmem:[#allocation9 + $0x198] sm:$0xff]
    %v821 = vld [vmem:[#allocation9 + $0x1a0] sm:$0xff]
    %v822 = vld [vmem:[#allocation9 + $0x1a8] sm:$0xff]
    %v823 = vld [vmem:[#allocation9 + $0x1b0] sm:$0xff]
    %v824 = vld [vmem:[#allocation9 + $0x1b8] sm:$0xff]
    %v825 = vld [vmem:[#allocation9 + $0x1c0] sm:$0xff]
    %v826 = vld [vmem:[#allocation9 + $0x1c8] sm:$0xff]
    %v827 = vld [vmem:[#allocation9 + $0x1d0] sm:$0xff]
    %v828 = vld [vmem:[#allocation9 + $0x1d8] sm:$0xff]
    %v829 = vld [vmem:[#allocation9 + $0x1e0] sm:$0xff]
    %v830 = vld [vmem:[#allocation9 + $0x1e8] sm:$0xff]
    %v831 = vld [vmem:[#allocation9 + $0x1f0] sm:$0xff]
    %v832 = vld [vmem:[#allocation9 + $0x1f8] sm:$0xff]
    %v833 = vld [vmem:[#allocation9 + $0x200] sm:$0xff]
    %v834 = vld [vmem:[#allocation9 + $0x208] sm:$0xff]
    %v835 = vld [vmem:[#allocation9 + $0x210] sm:$0xff]
    %v836 = vld [vmem:[#allocation9 + $0x218] sm:$0xff]
    %v837 = vld [vmem:[#allocation9 + $0x220] sm:$0xff]
    %v838 = vld [vmem:[#allocation9 + $0x228] sm:$0xff]
    %v839 = vld [vmem:[#allocation9 + $0x230] sm:$0xff]
    %v840 = vld [vmem:[#allocation9 + $0x238] sm:$0xff]
    %v841 = vld [vmem:[#allocation9 + $0x240] sm:$0xff]
    %v842 = vld [vmem:[#allocation9 + $0x248] sm:$0xff]
    %v843 = vld [vmem:[#allocation9 + $0x250] sm:$0xff]
    %v844 = vld [vmem:[#allocation9 + $0x258] sm:$0xff]
    %v845 = vld [vmem:[#allocation9 + $0x260] sm:$0xff]
    %v846 = vld [vmem:[#allocation9 + $0x268] sm:$0xff]
    %v847 = vld [vmem:[#allocation9 + $0x270] sm:$0xff]
    %v848 = vld [vmem:[#allocation9 + $0x278] sm:$0xff]
    %v929 = vunpack.c.l.b16 %v769
    %v930 = vunpack.c.h.b16 %v769
    %v931 = vunpack.c.l.b16 %v770
    %v932 = vunpack.c.h.b16 %v770
    %v933 = vunpack.c.l.b16 %v771
    %v934 = vunpack.c.h.b16 %v771
    %v935 = vunpack.c.l.b16 %v772
    %v936 = vunpack.c.h.b16 %v772
    %v937 = vunpack.c.l.b16 %v773
    %v938 = vunpack.c.h.b16 %v773
    %v939 = vunpack.c.l.b16 %v774
    %v940 = vunpack.c.h.b16 %v774
    %v941 = vunpack.c.l.b16 %v775
    %v942 = vunpack.c.h.b16 %v775
    %v943 = vunpack.c.l.b16 %v776
    %v944 = vunpack.c.h.b16 %v776
    %v945 = vunpack.c.l.b16 %v777
    %v946 = vunpack.c.h.b16 %v777
    %v947 = vunpack.c.l.b16 %v778
    %v948 = vunpack.c.h.b16 %v778
    %v949 = vunpack.c.l.b16 %v779
    %v950 = vunpack.c.h.b16 %v779
    %v951 = vunpack.c.l.b16 %v780
    %v952 = vunpack.c.h.b16 %v780
    %v953 = vunpack.c.l.b16 %v781
    %v954 = vunpack.c.h.b16 %v781
    %v955 = vunpack.c.l.b16 %v782
    %v956 = vunpack.c.h.b16 %v782
    %v957 = vunpack.c.l.b16 %v783
    %v958 = vunpack.c.h.b16 %v783
    %v959 = vunpack.c.l.b16 %v784
    %v960 = vunpack.c.h.b16 %v784
    %v961 = vunpack.c.l.b16 %v785
    %v962 = vunpack.c.h.b16 %v785
    %v963 = vunpack.c.l.b16 %v786
    %v964 = vunpack.c.h.b16 %v786
    %v965 = vunpack.c.l.b16 %v787
    %v966 = vunpack.c.h.b16 %v787
    %v967 = vunpack.c.l.b16 %v788
    %v968 = vunpack.c.h.b16 %v788
    %v969 = vunpack.c.l.b16 %v789
    %v970 = vunpack.c.h.b16 %v789
    %v971 = vunpack.c.l.b16 %v790
    %v972 = vunpack.c.h.b16 %v790
    %v973 = vunpack.c.l.b16 %v791
    %v974 = vunpack.c.h.b16 %v791
    %v975 = vunpack.c.l.b16 %v792
    %v976 = vunpack.c.h.b16 %v792
    %v977 = vunpack.c.l.b16 %v793
    %v978 = vunpack.c.h.b16 %v793
    %v979 = vunpack.c.l.b16 %v794
    %v980 = vunpack.c.h.b16 %v794
    %v981 = vunpack.c.l.b16 %v795
    %v982 = vunpack.c.h.b16 %v795
    %v983 = vunpack.c.l.b16 %v796
    %v984 = vunpack.c.h.b16 %v796
    %v985 = vunpack.c.l.b16 %v797
    %v986 = vunpack.c.h.b16 %v797
    %v987 = vunpack.c.l.b16 %v798
    %v988 = vunpack.c.h.b16 %v798
    %v989 = vunpack.c.l.b16 %v799
    %v990 = vunpack.c.h.b16 %v799
    %v991 = vunpack.c.l.b16 %v800
    %v992 = vunpack.c.h.b16 %v800
    %v993 = vunpack.c.l.b16 %v801
    %v994 = vunpack.c.h.b16 %v801
    %v995 = vunpack.c.l.b16 %v802
    %v996 = vunpack.c.h.b16 %v802
    %v997 = vunpack.c.l.b16 %v803
    %v998 = vunpack.c.h.b16 %v803
    %v999 = vunpack.c.l.b16 %v804
    %v1000 = vunpack.c.h.b16 %v804
    %v1001 = vunpack.c.l.b16 %v805
    %v1002 = vunpack.c.h.b16 %v805
    %v1003 = vunpack.c.l.b16 %v806
    %v1004 = vunpack.c.h.b16 %v806
    %v1005 = vunpack.c.l.b16 %v807
    %v1006 = vunpack.c.h.b16 %v807
    %v1007 = vunpack.c.l.b16 %v808
    %v1008 = vunpack.c.h.b16 %v808
    %v1009 = vunpack.c.l.b16 %v809
    %v1010 = vunpack.c.h.b16 %v809
    %v1011 = vunpack.c.l.b16 %v810
    %v1012 = vunpack.c.h.b16 %v810
    %v1013 = vunpack.c.l.b16 %v811
    %v1014 = vunpack.c.h.b16 %v811
    %v1015 = vunpack.c.l.b16 %v812
    %v1016 = vunpack.c.h.b16 %v812
    %v1017 = vunpack.c.l.b16 %v813
    %v1018 = vunpack.c.h.b16 %v813
    %v1019 = vunpack.c.l.b16 %v814
    %v1020 = vunpack.c.h.b16 %v814
    %v1021 = vunpack.c.l.b16 %v815
    %v1022 = vunpack.c.h.b16 %v815
    %v1023 = vunpack.c.l.b16 %v816
    %v1024 = vunpack.c.h.b16 %v816
    %v1025 = vunpack.c.l.b16 %v817
    %v1026 = vunpack.c.h.b16 %v817
    %v1027 = vunpack.c.l.b16 %v818
    %v1028 = vunpack.c.h.b16 %v818
    %v1029 = vunpack.c.l.b16 %v819
    %v1030 = vunpack.c.h.b16 %v819
    %v1031 = vunpack.c.l.b16 %v820
    %v1032 = vunpack.c.h.b16 %v820
    %v1033 = vunpack.c.l.b16 %v821
    %v1034 = vunpack.c.h.b16 %v821
    %v1035 = vunpack.c.l.b16 %v822
    %v1036 = vunpack.c.h.b16 %v822
    %v1037 = vunpack.c.l.b16 %v823
    %v1038 = vunpack.c.h.b16 %v823
    %v1039 = vunpack.c.l.b16 %v824
    %v1040 = vunpack.c.h.b16 %v824
    %v1041 = vunpack.c.l.b16 %v825
    %v1042 = vunpack.c.h.b16 %v825
    %v1043 = vunpack.c.l.b16 %v826
    %v1044 = vunpack.c.h.b16 %v826
    %v1045 = vunpack.c.l.b16 %v827
    %v1046 = vunpack.c.h.b16 %v827
    %v1047 = vunpack.c.l.b16 %v828
    %v1048 = vunpack.c.h.b16 %v828
    %v1049 = vunpack.c.l.b16 %v829
    %v1050 = vunpack.c.h.b16 %v829
    %v1051 = vunpack.c.l.b16 %v830
    %v1052 = vunpack.c.h.b16 %v830
    %v1053 = vunpack.c.l.b16 %v831
    %v1054 = vunpack.c.h.b16 %v831
    %v1055 = vunpack.c.l.b16 %v832
    %v1056 = vunpack.c.h.b16 %v832
    %v1057 = vunpack.c.l.b16 %v833
    %v1058 = vunpack.c.h.b16 %v833
    %v1059 = vunpack.c.l.b16 %v834
    %v1060 = vunpack.c.h.b16 %v834
    %v1061 = vunpack.c.l.b16 %v835
    %v1062 = vunpack.c.h.b16 %v835
    %v1063 = vunpack.c.l.b16 %v836
    %v1064 = vunpack.c.h.b16 %v836
    %v1065 = vunpack.c.l.b16 %v837
    %v1066 = vunpack.c.h.b16 %v837
    %v1067 = vunpack.c.l.b16 %v838
    %v1068 = vunpack.c.h.b16 %v838
    %v1069 = vunpack.c.l.b16 %v839
    %v1070 = vunpack.c.h.b16 %v839
    %v1071 = vunpack.c.l.b16 %v840
    %v1072 = vunpack.c.h.b16 %v840
    %v1073 = vunpack.c.l.b16 %v841
    %v1074 = vunpack.c.h.b16 %v841
    %v1075 = vunpack.c.l.b16 %v842
    %v1076 = vunpack.c.h.b16 %v842
    %v1077 = vunpack.c.l.b16 %v843
    %v1078 = vunpack.c.h.b16 %v843
    %v1079 = vunpack.c.l.b16 %v844
    %v1080 = vunpack.c.h.b16 %v844
    %v1081 = vunpack.c.l.b16 %v845
    %v1082 = vunpack.c.h.b16 %v845
    %v1083 = vunpack.c.l.b16 %v846
    %v1084 = vunpack.c.h.b16 %v846
    %v1085 = vunpack.c.l.b16 %v847
    %v1086 = vunpack.c.h.b16 %v847
    %v1087 = vunpack.c.l.b16 %v848
    %v1088 = vunpack.c.h.b16 %v848
    %v1089 = vpack.c.b16 %v931, %v929
    %v1090 = vpack.c.b16 %v932, %v930
    %v1091 = vpack.c.b16 %v935, %v933
    %v1092 = vpack.c.b16 %v936, %v934
    %v1093 = vpack.c.b16 %v939, %v937
    %v1094 = vpack.c.b16 %v940, %v938
    %v1095 = vpack.c.b16 %v943, %v941
    %v1096 = vpack.c.b16 %v944, %v942
    %v1097 = vpack.c.b16 %v947, %v945
    %v1098 = vpack.c.b16 %v948, %v946
    %v1099 = vpack.c.b16 %v951, %v949
    %v1100 = vpack.c.b16 %v952, %v950
    %v1101 = vpack.c.b16 %v955, %v953
    %v1102 = vpack.c.b16 %v956, %v954
    %v1103 = vpack.c.b16 %v959, %v957
    %v1104 = vpack.c.b16 %v960, %v958
    %v1105 = vpack.c.b16 %v963, %v961
    %v1106 = vpack.c.b16 %v964, %v962
    %v1107 = vpack.c.b16 %v967, %v965
    %v1108 = vpack.c.b16 %v968, %v966
    %v1109 = vpack.c.b16 %v971, %v969
    %v1110 = vpack.c.b16 %v972, %v970
    %v1111 = vpack.c.b16 %v975, %v973
    %v1112 = vpack.c.b16 %v976, %v974
    %v1113 = vpack.c.b16 %v979, %v977
    %v1114 = vpack.c.b16 %v980, %v978
    %v1115 = vpack.c.b16 %v983, %v981
    %v1116 = vpack.c.b16 %v984, %v982
    %v1117 = vpack.c.b16 %v987, %v985
    %v1118 = vpack.c.b16 %v988, %v986
    %v1119 = vpack.c.b16 %v991, %v989
    %v1120 = vpack.c.b16 %v992, %v990
    %v1121 = vpack.c.b16 %v995, %v993
    %v1122 = vpack.c.b16 %v996, %v994
    %v1123 = vpack.c.b16 %v999, %v997
    %v1124 = vpack.c.b16 %v1000, %v998
    %v1125 = vpack.c.b16 %v1003, %v1001
    %v1126 = vpack.c.b16 %v1004, %v1002
    %v1127 = vpack.c.b16 %v1007, %v1005
    %v1128 = vpack.c.b16 %v1008, %v1006
    %v1129 = vpack.c.b16 %v1011, %v1009
    %v1130 = vpack.c.b16 %v1012, %v1010
    %v1131 = vpack.c.b16 %v1015, %v1013
    %v1132 = vpack.c.b16 %v1016, %v1014
    %v1133 = vpack.c.b16 %v1019, %v1017
    %v1134 = vpack.c.b16 %v1020, %v1018
    %v1135 = vpack.c.b16 %v1023, %v1021
    %v1136 = vpack.c.b16 %v1024, %v1022
    %v1137 = vpack.c.b16 %v1027, %v1025
    %v1138 = vpack.c.b16 %v1028, %v1026
    %v1139 = vpack.c.b16 %v1031, %v1029
    %v1140 = vpack.c.b16 %v1032, %v1030
    %v1141 = vpack.c.b16 %v1035, %v1033
    %v1142 = vpack.c.b16 %v1036, %v1034
    %v1143 = vpack.c.b16 %v1039, %v1037
    %v1144 = vpack.c.b16 %v1040, %v1038
    %v1145 = vpack.c.b16 %v1043, %v1041
    %v1146 = vpack.c.b16 %v1044, %v1042
    %v1147 = vpack.c.b16 %v1047, %v1045
    %v1148 = vpack.c.b16 %v1048, %v1046
    %v1149 = vpack.c.b16 %v1051, %v1049
    %v1150 = vpack.c.b16 %v1052, %v1050
    %v1151 = vpack.c.b16 %v1055, %v1053
    %v1152 = vpack.c.b16 %v1056, %v1054
    %v1153 = vpack.c.b16 %v1059, %v1057
    %v1154 = vpack.c.b16 %v1060, %v1058
    %v1155 = vpack.c.b16 %v1063, %v1061
    %v1156 = vpack.c.b16 %v1064, %v1062
    %v1157 = vpack.c.b16 %v1067, %v1065
    %v1158 = vpack.c.b16 %v1068, %v1066
    %v1159 = vpack.c.b16 %v1071, %v1069
    %v1160 = vpack.c.b16 %v1072, %v1070
    %v1161 = vpack.c.b16 %v1075, %v1073
    %v1162 = vpack.c.b16 %v1076, %v1074
    %v1163 = vpack.c.b16 %v1079, %v1077
    %v1164 = vpack.c.b16 %v1080, %v1078
    %v1165 = vpack.c.b16 %v1083, %v1081
    %v1166 = vpack.c.b16 %v1084, %v1082
    %v1167 = vpack.c.b16 %v1087, %v1085
    %v1168 = vpack.c.b16 %v1088, %v1086
    %1249 = vmatprep.subr.bf16.mxu0 %v1104
    %1250 = vmatpush1.bf16.msra.mxu0 %v1103
    %1251 = vmatprep.subr.bf16.mxu0 %v1102
    %1252 = vmatpush1.bf16.msra.mxu0 %v1101
    %1253 = vmatprep.subr.bf16.mxu0 %v1100
    %1254 = vmatpush1.bf16.msra.mxu0 %v1099
    %1255 = vmatprep.subr.bf16.mxu0 %v1098
    %1256 = vmatpush1.bf16.msra.mxu0 %v1097
    %1257 = vmatprep.subr.bf16.mxu0 %v1096
    %1258 = vmatpush1.bf16.msra.mxu0 %v1095
    %1259 = vmatprep.subr.bf16.mxu0 %v1094
    %1260 = vmatpush1.bf16.msra.mxu0 %v1093
    %1261 = vmatprep.subr.bf16.mxu0 %v1092
    %1262 = vmatpush1.bf16.msra.mxu0 %v1091
    %1263 = vmatprep.subr.bf16.mxu0 %v1090
    %1264 = vmatpush1.bf16.msra.mxu0 %v1089
    %1265 = vmatprep.subr.bf16.mxu0 %v1120
    %1266 = vmatpush2.bf16.msra.mxu0 %v1119
    %1267 = vmatprep.subr.bf16.mxu0 %v1118
    %1268 = vmatpush2.bf16.msra.mxu0 %v1117
    %1269 = vmatprep.subr.bf16.mxu0 %v1116
    %1270 = vmatpush2.bf16.msra.mxu0 %v1115
    %1271 = vmatprep.subr.bf16.mxu0 %v1114
    %1272 = vmatpush2.bf16.msra.mxu0 %v1113
    %1273 = vmatprep.subr.bf16.mxu0 %v1112
    %1274 = vmatpush2.bf16.msra.mxu0 %v1111
    %1275 = vmatprep.subr.bf16.mxu0 %v1110
    %1276 = vmatpush2.bf16.msra.mxu0 %v1109
    %1277 = vmatprep.subr.bf16.mxu0 %v1108
    %1278 = vmatpush2.bf16.msra.mxu0 %v1107
    %1279 = vmatprep.subr.bf16.mxu0 %v1106
    %1280 = vmatpush2.bf16.msra.mxu0 %v1105
    %1281 = vmatprep.mubr.bf16.mxu0 %v765
    %1282 = vmatmul.mubr.bf16.gmra.mxu0 %v764
    %v1283 = vpop.f32.mrf.mxu0
    %v1284 = vadd.f32 0.0, %v1283
    %v1285 = vpop.f32.mrf.mxu0
    %v1286 = vadd.f32 0.0, %v1285
    %v1287 = vpop.f32.mrf.mxu0
    %v1288 = vadd.f32 0.0, %v1287
    %v1289 = vpop.f32.mrf.mxu0
    %v1290 = vadd.f32 0.0, %v1289
    %1291 = vdwg.mxu0
    %1292 = vmatprep.subr.bf16.mxu0 %v1136
    %1293 = vmatpush1.bf16.msra.mxu0 %v1135
    %1294 = vmatprep.subr.bf16.mxu0 %v1134
    %1295 = vmatpush1.bf16.msra.mxu0 %v1133
    %1296 = vmatprep.subr.bf16.mxu0 %v1132
    %1297 = vmatpush1.bf16.msra.mxu0 %v1131
    %1298 = vmatprep.subr.bf16.mxu0 %v1130
    %1299 = vmatpush1.bf16.msra.mxu0 %v1129
    %1300 = vmatprep.subr.bf16.mxu0 %v1128
    %1301 = vmatpush1.bf16.msra.mxu0 %v1127
    %1302 = vmatprep.subr.bf16.mxu0 %v1126
    %1303 = vmatpush1.bf16.msra.mxu0 %v1125
    %1304 = vmatprep.subr.bf16.mxu0 %v1124
    %1305 = vmatpush1.bf16.msra.mxu0 %v1123
    %1306 = vmatprep.subr.bf16.mxu0 %v1122
    %1307 = vmatpush1.bf16.msra.mxu0 %v1121
    %1308 = vmatprep.subr.bf16.mxu0 %v1152
    %1309 = vmatpush2.bf16.msra.mxu0 %v1151
    %1310 = vmatprep.subr.bf16.mxu0 %v1150
    %1311 = vmatpush2.bf16.msra.mxu0 %v1149
    %1312 = vmatprep.subr.bf16.mxu0 %v1148
    %1313 = vmatpush2.bf16.msra.mxu0 %v1147
    %1314 = vmatprep.subr.bf16.mxu0 %v1146
    %1315 = vmatpush2.bf16.msra.mxu0 %v1145
    %1316 = vmatprep.subr.bf16.mxu0 %v1144
    %1317 = vmatpush2.bf16.msra.mxu0 %v1143
    %1318 = vmatprep.subr.bf16.mxu0 %v1142
    %1319 = vmatpush2.bf16.msra.mxu0 %v1141
    %1320 = vmatprep.subr.bf16.mxu0 %v1140
    %1321 = vmatpush2.bf16.msra.mxu0 %v1139
    %1322 = vmatprep.subr.bf16.mxu0 %v1138
    %1323 = vmatpush2.bf16.msra.mxu0 %v1137
    %1324 = vmatprep.mubr.bf16.mxu0 %v767
    %1325 = vmatmul.mubr.bf16.gmra.mxu0 %v766
    %v1326 = vpop.f32.mrf.mxu0
    %v1327 = vadd.f32 %v1284, %v1326
    %v1328 = vpop.f32.mrf.mxu0
    %v1329 = vadd.f32 %v1286, %v1328
    %v1330 = vpop.f32.mrf.mxu0
    %v1331 = vadd.f32 %v1288, %v1330
    %v1332 = vpop.f32.mrf.mxu0
    %v1333 = vadd.f32 %v1290, %v1332
    %1334 = vdwg.mxu0
    %1335 = vmatprep.subr.bf16.mxu0 %v1168
    %1336 = vmatpush1.bf16.msra.mxu0 %v1167
    %1337 = vmatprep.subr.bf16.mxu0 %v1166
    %1338 = vmatpush1.bf16.msra.mxu0 %v1165
    %1339 = vmatprep.subr.bf16.mxu0 %v1164
    %1340 = vmatpush1.bf16.msra.mxu0 %v1163
    %1341 = vmatprep.subr.bf16.mxu0 %v1162
    %1342 = vmatpush1.bf16.msra.mxu0 %v1161
    %1343 = vmatprep.subr.bf16.mxu0 %v1160
    %1344 = vmatpush1.bf16.msra.mxu0 %v1159
    %1345 = vmatprep.subr.bf16.mxu0 %v1158
    %1346 = vmatpush1.bf16.msra.mxu0 %v1157
    %1347 = vmatprep.subr.bf16.mxu0 %v1156
    %1348 = vmatpush1.bf16.msra.mxu0 %v1155
    %1349 = vmatprep.subr.bf16.mxu0 %v1154
    %1350 = vmatpush1.bf16.msra.mxu0 %v1153
    %1351 = vmatprep.subr.bf16.mxu0 0
    %1352 = vmatpush2.bf16.msra.mxu0 0
    %1353 = vmatprep.subr.bf16.mxu0 0
    %1354 = vmatpush2.bf16.msra.mxu0 0
    %1355 = vmatprep.subr.bf16.mxu0 0
    %1356 = vmatpush2.bf16.msra.mxu0 0
    %1357 = vmatprep.subr.bf16.mxu0 0
    %1358 = vmatpush2.bf16.msra.mxu0 0
    %1359 = vmatprep.subr.bf16.mxu0 0
    %1360 = vmatpush2.bf16.msra.mxu0 0
    %1361 = vmatprep.subr.bf16.mxu0 0
    %1362 = vmatpush2.bf16.msra.mxu0 0
    %1363 = vmatprep.subr.bf16.mxu0 0
    %1364 = vmatpush2.bf16.msra.mxu0 0
    %1365 = vmatprep.subr.bf16.mxu0 0
    %1366 = vmatpush2.bf16.msra.mxu0 0
    %1367 = vmatprep.mubr.bf16.mxu0 0
    %1368 = vmatmul.mubr.bf16.gmra.mxu0 %v768
    %v1369 = vpop.f32.mrf.mxu0
    %v1370 = vadd.f32 %v1327, %v1369
    %v1371 = vpop.f32.mrf.mxu0
    %v1372 = vadd.f32 %v1329, %v1371
    %v1373 = vpop.f32.mrf.mxu0
    %v1374 = vadd.f32 %v1331, %v1373
    %v1375 = vpop.f32.mrf.mxu0
    %v1376 = vadd.f32 %v1333, %v1375
    %1377 = vdwg.mxu0
    %v1378 = vmax.f32 %v1370, %v1372
    %v1379 = vmax.f32 %v1374, %v1376
    %v1380 = vld [vmem:[#allocation11] sm:$0xff]
    %v1381 = vld [vmem:[#allocation11 + $0x8] sm:$0xff]
    %vm1382 = vcmask 80896
    %v1384 = vsel %vm1382, %v1380, 0
    %v1387 = vsel %vm1382, %v1381, 0
    %vm1389 = vcmask 1041408
    %v1391 = vsel %vm1389, %v1379, 0
    %1393 = vmatprep.subr.mxu0 0.0
    %1394 = vmatpush1.msra.mxu0 0.0
    %1395 = vmatprep.subr.mxu0 0.0
    %1396 = vmatpush1.msra.mxu0 0.0
    %1397 = vmatprep.subr.mxu0 0.0
    %1398 = vmatpush1.msra.mxu0 0.0
    %1399 = vmatprep.subr.mxu0 0.0
    %1400 = vmatpush1.msra.mxu0 0.0
    %1401 = vmatprep.subr.mxu0 0.0
    %1402 = vmatpush1.msra.mxu0 0.0
    %1403 = vmatprep.subr.mxu0 0.0
    %1404 = vmatpush1.msra.mxu0 0.0
    %1405 = vmatprep.subr.mxu0 0.0
    %1406 = vmatpush1.msra.mxu0 0.0
    %1407 = vmatprep.subr.mxu0 0.0
    %1408 = vmatpush1.msra.mxu0 0.0
    %1409 = vmatprep.subr.mxu0 0.0
    %1410 = vmatpush1.msra.mxu0 0.0
    %1411 = vmatprep.subr.mxu0 0.0
    %1412 = vmatpush1.msra.mxu0 0.0
    %1413 = vmatprep.subr.mxu0 0.0
    %1414 = vmatpush1.msra.mxu0 0.0
    %1415 = vmatprep.subr.mxu0 0.0
    %1416 = vmatpush1.msra.mxu0 0.0
    %1417 = vmatprep.subr.mxu0 0.0
    %1418 = vmatpush1.msra.mxu0 0.0
    %1419 = vmatprep.subr.mxu0 0.0
    %1420 = vmatpush1.msra.mxu0 0.0
    %1421 = vmatprep.subr.mxu0 0.0
    %1422 = vmatpush1.msra.mxu0 %v1391
    %1423 = vmatprep.subr.mxu0 0.0
    %1424 = vmatpush1.msra.mxu0 %v1378
    %1425 = vmatprep.subr.mxu0 0.0
    %1426 = vmatpush2.msra.mxu0 0.0
    %1427 = vmatprep.subr.mxu0 0.0
    %1428 = vmatpush2.msra.mxu0 0.0
    %1429 = vmatprep.subr.mxu0 0.0
    %1430 = vmatpush2.msra.mxu0 0.0
    %1431 = vmatprep.subr.mxu0 0.0
    %1432 = vmatpush2.msra.mxu0 0.0
    %1433 = vmatprep.subr.mxu0 0.0
    %1434 = vmatpush2.msra.mxu0 0.0
    %1435 = vmatprep.subr.mxu0 0.0
    %1436 = vmatpush2.msra.mxu0 0.0
    %1437 = vmatprep.subr.mxu0 0.0
    %1438 = vmatpush2.msra.mxu0 0.0
    %1439 = vmatprep.subr.mxu0 0.0
    %1440 = vmatpush2.msra.mxu0 0.0
    %1441 = vmatprep.subr.mxu0 0.0
    %1442 = vmatpush2.msra.mxu0 0.0
    %1443 = vmatprep.subr.mxu0 0.0
    %1444 = vmatpush2.msra.mxu0 0.0
    %1445 = vmatprep.subr.mxu0 0.0
    %1446 = vmatpush2.msra.mxu0 0.0
    %1447 = vmatprep.subr.mxu0 0.0
    %1448 = vmatpush2.msra.mxu0 0.0
    %1449 = vmatprep.subr.mxu0 0.0
    %1450 = vmatpush2.msra.mxu0 0.0
    %1451 = vmatprep.subr.mxu0 0.0
    %1452 = vmatpush2.msra.mxu0 0.0
    %1453 = vmatprep.subr.mxu0 0.0
    %1454 = vmatpush2.msra.mxu0 0.0
    %1455 = vmatprep.subr.mxu0 0.0
    %1456 = vmatpush2.msra.mxu0 0.0
    %1457 = vmatprep.mubr.f32.mxu0 0.0
    %1458 = vmatmul.mubr.f32.gmra.mxu0 %v1384
    %v1459 = vpop.f32.mrf.mxu0
    %v1460 = vadd.f32 0.0, %v1459
    %v1461 = vpop.f32.mrf.mxu0
    %1462 = vmatprep.mubr.f32.mxu0 0.0
    %1463 = vmatmul.mubr.f32.gmra.mxu0 %v1387
    %v1464 = vpop.f32.mrf.mxu0
    %v1465 = vadd.f32 0.0, %v1464
    %v1466 = vpop.f32.mrf.mxu0
    %1467 = vdwg.mxu0
    %v1468 = vmax.f32 %v1460, %v1465
    %v1469 = vld [vmem:[%s6] sm:$0x1]
    %v1471 = vlaneseq
    %v1472 = vshrl.u32 %v1471, 7
    %v1473 = vsub.s32 0, %v1472
    %v1474 = vrot.slane %v1469, %v1473
    %v1476 = vadd.f32 %v1468, %v1474
    %v1477 = vmax.f32 %v1476, 0.0
    %v1479 = vrot.slane %v1477, 1
    %v1481 = vrot.slane %v1477, 2
    %v1483 = vrot.slane %v1477, 3
    %v1485 = vrot.slane %v1477, 4
    %v1487 = vpack.c.bf16 %v1477, %v1477
    %v1488 = vpack.c.bf16 %v1479, %v1479
    %v1489 = vpack.c.bf16 %v1481, %v1481
    %v1490 = vpack.c.bf16 %v1483, %v1483
    %v1491 = vpack.c.bf16 %v1485, %v1485
    %v1492 = vld [vmem:[#allocation12] sm:$0xf]
    %v1493 = vld [vmem:[#allocation12 + $0x4] sm:$0xf]
    %v1494 = vld [vmem:[#allocation12 + $0x8] sm:$0xf]
    %v1495 = vld [vmem:[#allocation12 + $0xc] sm:$0xf]
    %v1496 = vld [vmem:[#allocation12 + $0x10] sm:$0xf]
    %v1497 = vld [vmem:[#allocation12 + $0x14] sm:$0xf]
    %v1498 = vld [vmem:[#allocation12 + $0x18] sm:$0xf]
    %v1499 = vld [vmem:[#allocation12 + $0x1c] sm:$0xf]
    %v1500 = vld [vmem:[#allocation12 + $0x20] sm:$0xf]
    %v1501 = vld [vmem:[#allocation12 + $0x24] sm:$0xf]
    %v1502 = vld [vmem:[#allocation12 + $0x28] sm:$0xf]
    %v1503 = vld [vmem:[#allocation12 + $0x2c] sm:$0xf]
    %v1504 = vld [vmem:[#allocation12 + $0x30] sm:$0xf]
    %v1505 = vld [vmem:[#allocation12 + $0x34] sm:$0xf]
    %v1506 = vld [vmem:[#allocation12 + $0x38] sm:$0xf]
    %v1507 = vld [vmem:[#allocation12 + $0x3c] sm:$0xf]
    %v1508 = vld [vmem:[#allocation12 + $0x40] sm:$0xf]
    %v1509 = vld [vmem:[#allocation12 + $0x44] sm:$0xf]
    %v1510 = vld [vmem:[#allocation12 + $0x48] sm:$0xf]
    %v1511 = vld [vmem:[#allocation12 + $0x4c] sm:$0xf]
    %v1512 = vld [vmem:[#allocation12 + $0x50] sm:$0xf]
    %v1513 = vld [vmem:[#allocation12 + $0x54] sm:$0xf]
    %v1514 = vld [vmem:[#allocation12 + $0x58] sm:$0xf]
    %v1515 = vld [vmem:[#allocation12 + $0x5c] sm:$0xf]
    %v1516 = vld [vmem:[#allocation12 + $0x60] sm:$0xf]
    %v1517 = vld [vmem:[#allocation12 + $0x64] sm:$0xf]
    %v1518 = vld [vmem:[#allocation12 + $0x68] sm:$0xf]
    %v1519 = vld [vmem:[#allocation12 + $0x6c] sm:$0xf]
    %v1520 = vld [vmem:[#allocation12 + $0x70] sm:$0xf]
    %v1521 = vld [vmem:[#allocation12 + $0x74] sm:$0xf]
    %v1522 = vld [vmem:[#allocation12 + $0x78] sm:$0xf]
    %v1523 = vld [vmem:[#allocation12 + $0x7c] sm:$0xf]
    %v1524 = vld [vmem:[#allocation12 + $0x80] sm:$0xf]
    %v1525 = vld [vmem:[#allocation12 + $0x84] sm:$0xf]
    %v1526 = vld [vmem:[#allocation12 + $0x88] sm:$0xf]
    %v1527 = vld [vmem:[#allocation12 + $0x8c] sm:$0xf]
    %v1528 = vld [vmem:[#allocation12 + $0x90] sm:$0xf]
    %v1529 = vld [vmem:[#allocation12 + $0x94] sm:$0xf]
    %v1530 = vld [vmem:[#allocation12 + $0x98] sm:$0xf]
    %v1531 = vld [vmem:[#allocation12 + $0x9c] sm:$0xf]
    %v1532 = vld [vmem:[#allocation12 + $0xa0] sm:$0xf]
    %v1533 = vld [vmem:[#allocation12 + $0xa4] sm:$0xf]
    %v1534 = vld [vmem:[#allocation12 + $0xa8] sm:$0xf]
    %v1535 = vld [vmem:[#allocation12 + $0xac] sm:$0xf]
    %v1536 = vld [vmem:[#allocation12 + $0xb0] sm:$0xf]
    %v1537 = vld [vmem:[#allocation12 + $0xb4] sm:$0xf]
    %v1538 = vld [vmem:[#allocation12 + $0xb8] sm:$0xf]
    %v1539 = vld [vmem:[#allocation12 + $0xbc] sm:$0xf]
    %v1540 = vld [vmem:[#allocation12 + $0xc0] sm:$0xf]
    %v1541 = vld [vmem:[#allocation12 + $0xc4] sm:$0xf]
    %v1542 = vld [vmem:[#allocation12 + $0xc8] sm:$0xf]
    %v1543 = vld [vmem:[#allocation12 + $0xcc] sm:$0xf]
    %v1544 = vld [vmem:[#allocation12 + $0xd0] sm:$0xf]
    %v1545 = vld [vmem:[#allocation12 + $0xd4] sm:$0xf]
    %v1546 = vld [vmem:[#allocation12 + $0xd8] sm:$0xf]
    %v1547 = vld [vmem:[#allocation12 + $0xdc] sm:$0xf]
    %v1548 = vld [vmem:[#allocation12 + $0xe0] sm:$0xf]
    %v1549 = vld [vmem:[#allocation12 + $0xe4] sm:$0xf]
    %v1550 = vld [vmem:[#allocation12 + $0xe8] sm:$0xf]
    %v1551 = vld [vmem:[#allocation12 + $0xec] sm:$0xf]
    %v1552 = vld [vmem:[#allocation12 + $0xf0] sm:$0xf]
    %v1553 = vld [vmem:[#allocation12 + $0xf4] sm:$0xf]
    %v1554 = vld [vmem:[#allocation12 + $0xf8] sm:$0xf]
    %v1555 = vld [vmem:[#allocation12 + $0xfc] sm:$0xf]
    %v1556 = vld [vmem:[#allocation12 + $0x100] sm:$0xf]
    %v1557 = vld [vmem:[#allocation12 + $0x104] sm:$0xf]
    %v1558 = vld [vmem:[#allocation12 + $0x108] sm:$0xf]
    %v1559 = vld [vmem:[#allocation12 + $0x10c] sm:$0xf]
    %v1560 = vld [vmem:[#allocation12 + $0x110] sm:$0xf]
    %v1561 = vld [vmem:[#allocation12 + $0x114] sm:$0xf]
    %v1562 = vld [vmem:[#allocation12 + $0x118] sm:$0xf]
    %v1563 = vld [vmem:[#allocation12 + $0x11c] sm:$0xf]
    %v1564 = vld [vmem:[#allocation12 + $0x120] sm:$0xf]
    %v1565 = vld [vmem:[#allocation12 + $0x124] sm:$0xf]
    %v1566 = vld [vmem:[#allocation12 + $0x128] sm:$0xf]
    %v1567 = vld [vmem:[#allocation12 + $0x12c] sm:$0xf]
    %v1568 = vld [vmem:[#allocation12 + $0x130] sm:$0xf]
    %v1569 = vld [vmem:[#allocation12 + $0x134] sm:$0xf]
    %v1570 = vld [vmem:[#allocation12 + $0x138] sm:$0xf]
    %v1571 = vld [vmem:[#allocation12 + $0x13c] sm:$0xf]
    %v1572 = vld [vmem:[%s8] sm:$0x1]
    %v1653 = vunpack.c.l.b16 %v1492
    %v1654 = vunpack.c.l.b16 %v1493
    %v1655 = vunpack.c.l.b16 %v1494
    %v1656 = vunpack.c.l.b16 %v1495
    %v1657 = vunpack.c.l.b16 %v1496
    %v1658 = vunpack.c.l.b16 %v1497
    %v1659 = vunpack.c.l.b16 %v1498
    %v1660 = vunpack.c.l.b16 %v1499
    %v1661 = vunpack.c.l.b16 %v1500
    %v1662 = vunpack.c.l.b16 %v1501
    %v1663 = vunpack.c.l.b16 %v1502
    %v1664 = vunpack.c.l.b16 %v1503
    %v1665 = vunpack.c.l.b16 %v1504
    %v1666 = vunpack.c.l.b16 %v1505
    %v1667 = vunpack.c.l.b16 %v1506
    %v1668 = vunpack.c.l.b16 %v1507
    %v1669 = vunpack.c.l.b16 %v1508
    %v1670 = vunpack.c.l.b16 %v1509
    %v1671 = vunpack.c.l.b16 %v1510
    %v1672 = vunpack.c.l.b16 %v1511
    %v1673 = vunpack.c.l.b16 %v1512
    %v1674 = vunpack.c.l.b16 %v1513
    %v1675 = vunpack.c.l.b16 %v1514
    %v1676 = vunpack.c.l.b16 %v1515
    %v1677 = vunpack.c.l.b16 %v1516
    %v1678 = vunpack.c.l.b16 %v1517
    %v1679 = vunpack.c.l.b16 %v1518
    %v1680 = vunpack.c.l.b16 %v1519
    %v1681 = vunpack.c.l.b16 %v1520
    %v1682 = vunpack.c.l.b16 %v1521
    %v1683 = vunpack.c.l.b16 %v1522
    %v1684 = vunpack.c.l.b16 %v1523
    %v1685 = vunpack.c.l.b16 %v1524
    %v1686 = vunpack.c.l.b16 %v1525
    %v1687 = vunpack.c.l.b16 %v1526
    %v1688 = vunpack.c.l.b16 %v1527
    %v1689 = vunpack.c.l.b16 %v1528
    %v1690 = vunpack.c.l.b16 %v1529
    %v1691 = vunpack.c.l.b16 %v1530
    %v1692 = vunpack.c.l.b16 %v1531
    %v1693 = vunpack.c.l.b16 %v1532
    %v1694 = vunpack.c.l.b16 %v1533
    %v1695 = vunpack.c.l.b16 %v1534
    %v1696 = vunpack.c.l.b16 %v1535
    %v1697 = vunpack.c.l.b16 %v1536
    %v1698 = vunpack.c.l.b16 %v1537
    %v1699 = vunpack.c.l.b16 %v1538
    %v1700 = vunpack.c.l.b16 %v1539
    %v1701 = vunpack.c.l.b16 %v1540
    %v1702 = vunpack.c.l.b16 %v1541
    %v1703 = vunpack.c.l.b16 %v1542
    %v1704 = vunpack.c.l.b16 %v1543
    %v1705 = vunpack.c.l.b16 %v1544
    %v1706 = vunpack.c.l.b16 %v1545
    %v1707 = vunpack.c.l.b16 %v1546
    %v1708 = vunpack.c.l.b16 %v1547
    %v1709 = vunpack.c.l.b16 %v1548
    %v1710 = vunpack.c.l.b16 %v1549
    %v1711 = vunpack.c.l.b16 %v1550
    %v1712 = vunpack.c.l.b16 %v1551
    %v1713 = vunpack.c.l.b16 %v1552
    %v1714 = vunpack.c.l.b16 %v1553
    %v1715 = vunpack.c.l.b16 %v1554
    %v1716 = vunpack.c.l.b16 %v1555
    %v1717 = vunpack.c.l.b16 %v1556
    %v1718 = vunpack.c.l.b16 %v1557
    %v1719 = vunpack.c.l.b16 %v1558
    %v1720 = vunpack.c.l.b16 %v1559
    %v1721 = vunpack.c.l.b16 %v1560
    %v1722 = vunpack.c.l.b16 %v1561
    %v1723 = vunpack.c.l.b16 %v1562
    %v1724 = vunpack.c.l.b16 %v1563
    %v1725 = vunpack.c.l.b16 %v1564
    %v1726 = vunpack.c.l.b16 %v1565
    %v1727 = vunpack.c.l.b16 %v1566
    %v1728 = vunpack.c.l.b16 %v1567
    %v1729 = vunpack.c.l.b16 %v1568
    %v1730 = vunpack.c.l.b16 %v1569
    %v1731 = vunpack.c.l.b16 %v1570
    %v1732 = vunpack.c.l.b16 %v1571
    %v1733 = vpack.c.b16 %v1654, %v1653
    %v1734 = vpack.c.b16 %v1656, %v1655
    %v1735 = vpack.c.b16 %v1658, %v1657
    %v1736 = vpack.c.b16 %v1660, %v1659
    %v1737 = vpack.c.b16 %v1662, %v1661
    %v1738 = vpack.c.b16 %v1664, %v1663
    %v1739 = vpack.c.b16 %v1666, %v1665
    %v1740 = vpack.c.b16 %v1668, %v1667
    %v1741 = vpack.c.b16 %v1670, %v1669
    %v1742 = vpack.c.b16 %v1672, %v1671
    %v1743 = vpack.c.b16 %v1674, %v1673
    %v1744 = vpack.c.b16 %v1676, %v1675
    %v1745 = vpack.c.b16 %v1678, %v1677
    %v1746 = vpack.c.b16 %v1680, %v1679
    %v1747 = vpack.c.b16 %v1682, %v1681
    %v1748 = vpack.c.b16 %v1684, %v1683
    %v1749 = vpack.c.b16 %v1686, %v1685
    %v1750 = vpack.c.b16 %v1688, %v1687
    %v1751 = vpack.c.b16 %v1690, %v1689
    %v1752 = vpack.c.b16 %v1692, %v1691
    %v1753 = vpack.c.b16 %v1694, %v1693
    %v1754 = vpack.c.b16 %v1696, %v1695
    %v1755 = vpack.c.b16 %v1698, %v1697
    %v1756 = vpack.c.b16 %v1700, %v1699
    %v1757 = vpack.c.b16 %v1702, %v1701
    %v1758 = vpack.c.b16 %v1704, %v1703
    %v1759 = vpack.c.b16 %v1706, %v1705
    %v1760 = vpack.c.b16 %v1708, %v1707
    %v1761 = vpack.c.b16 %v1710, %v1709
    %v1762 = vpack.c.b16 %v1712, %v1711
    %v1763 = vpack.c.b16 %v1714, %v1713
    %v1764 = vpack.c.b16 %v1716, %v1715
    %v1765 = vpack.c.b16 %v1718, %v1717
    %v1766 = vpack.c.b16 %v1720, %v1719
    %v1767 = vpack.c.b16 %v1722, %v1721
    %v1768 = vpack.c.b16 %v1724, %v1723
    %v1769 = vpack.c.b16 %v1726, %v1725
    %v1770 = vpack.c.b16 %v1728, %v1727
    %v1771 = vpack.c.b16 %v1730, %v1729
    %v1772 = vpack.c.b16 %v1732, %v1731
    %1813 = vmatprep.subr.bf16.mxu0 0
    %1814 = vmatpush1.bf16.msra.mxu0 %v1740
    %1815 = vmatprep.subr.bf16.mxu0 0
    %1816 = vmatpush1.bf16.msra.mxu0 %v1739
    %1817 = vmatprep.subr.bf16.mxu0 0
    %1818 = vmatpush1.bf16.msra.mxu0 %v1738
    %1819 = vmatprep.subr.bf16.mxu0 0
    %1820 = vmatpush1.bf16.msra.mxu0 %v1737
    %1821 = vmatprep.subr.bf16.mxu0 0
    %1822 = vmatpush1.bf16.msra.mxu0 %v1736
    %1823 = vmatprep.subr.bf16.mxu0 0
    %1824 = vmatpush1.bf16.msra.mxu0 %v1735
    %1825 = vmatprep.subr.bf16.mxu0 0
    %1826 = vmatpush1.bf16.msra.mxu0 %v1734
    %1827 = vmatprep.subr.bf16.mxu0 0
    %1828 = vmatpush1.bf16.msra.mxu0 %v1733
    %1829 = vmatprep.subr.bf16.mxu0 0
    %1830 = vmatpush2.bf16.msra.mxu0 %v1748
    %1831 = vmatprep.subr.bf16.mxu0 0
    %1832 = vmatpush2.bf16.msra.mxu0 %v1747
    %1833 = vmatprep.subr.bf16.mxu0 0
    %1834 = vmatpush2.bf16.msra.mxu0 %v1746
    %1835 = vmatprep.subr.bf16.mxu0 0
    %1836 = vmatpush2.bf16.msra.mxu0 %v1745
    %1837 = vmatprep.subr.bf16.mxu0 0
    %1838 = vmatpush2.bf16.msra.mxu0 %v1744
    %1839 = vmatprep.subr.bf16.mxu0 0
    %1840 = vmatpush2.bf16.msra.mxu0 %v1743
    %1841 = vmatprep.subr.bf16.mxu0 0
    %1842 = vmatpush2.bf16.msra.mxu0 %v1742
    %1843 = vmatprep.subr.bf16.mxu0 0
    %1844 = vmatpush2.bf16.msra.mxu0 %v1741
    %1845 = vmatprep.mubr.bf16.mxu0 %v1488
    %1846 = vmatmul.mubr.bf16.gmra.mxu0 %v1487
    %v1847 = vpop.f32.mrf.mxu0
    %v1848 = vadd.f32 %v1572, %v1847
    %v1849 = vpop.f32.mrf.mxu0
    %v1850 = vpop.f32.mrf.mxu0
    %v1851 = vpop.f32.mrf.mxu0
    %1852 = vdwg.mxu0
    %1853 = vmatprep.subr.bf16.mxu0 0
    %1854 = vmatpush1.bf16.msra.mxu0 %v1756
    %1855 = vmatprep.subr.bf16.mxu0 0
    %1856 = vmatpush1.bf16.msra.mxu0 %v1755
    %1857 = vmatprep.subr.bf16.mxu0 0
    %1858 = vmatpush1.bf16.msra.mxu0 %v1754
    %1859 = vmatprep.subr.bf16.mxu0 0
    %1860 = vmatpush1.bf16.msra.mxu0 %v1753
    %1861 = vmatprep.subr.bf16.mxu0 0
    %1862 = vmatpush1.bf16.msra.mxu0 %v1752
    %1863 = vmatprep.subr.bf16.mxu0 0
    %1864 = vmatpush1.bf16.msra.mxu0 %v1751
    %1865 = vmatprep.subr.bf16.mxu0 0
    %1866 = vmatpush1.bf16.msra.mxu0 %v1750
    %1867 = vmatprep.subr.bf16.mxu0 0
    %1868 = vmatpush1.bf16.msra.mxu0 %v1749
    %1869 = vmatprep.subr.bf16.mxu0 0
    %1870 = vmatpush2.bf16.msra.mxu0 %v1764
    %1871 = vmatprep.subr.bf16.mxu0 0
    %1872 = vmatpush2.bf16.msra.mxu0 %v1763
    %1873 = vmatprep.subr.bf16.mxu0 0
    %1874 = vmatpush2.bf16.msra.mxu0 %v1762
    %1875 = vmatprep.subr.bf16.mxu0 0
    %1876 = vmatpush2.bf16.msra.mxu0 %v1761
    %1877 = vmatprep.subr.bf16.mxu0 0
    %1878 = vmatpush2.bf16.msra.mxu0 %v1760
    %1879 = vmatprep.subr.bf16.mxu0 0
    %1880 = vmatpush2.bf16.msra.mxu0 %v1759
    %1881 = vmatprep.subr.bf16.mxu0 0
    %1882 = vmatpush2.bf16.msra.mxu0 %v1758
    %1883 = vmatprep.subr.bf16.mxu0 0
    %1884 = vmatpush2.bf16.msra.mxu0 %v1757
    %1885 = vmatprep.mubr.bf16.mxu0 %v1490
    %1886 = vmatmul.mubr.bf16.gmra.mxu0 %v1489
    %v1887 = vpop.f32.mrf.mxu0
    %v1888 = vadd.f32 %v1848, %v1887
    %v1889 = vpop.f32.mrf.mxu0
    %v1890 = vpop.f32.mrf.mxu0
    %v1891 = vpop.f32.mrf.mxu0
    %1892 = vdwg.mxu0
    %1893 = vmatprep.subr.bf16.mxu0 0
    %1894 = vmatpush1.bf16.msra.mxu0 %v1772
    %1895 = vmatprep.subr.bf16.mxu0 0
    %1896 = vmatpush1.bf16.msra.mxu0 %v1771
    %1897 = vmatprep.subr.bf16.mxu0 0
    %1898 = vmatpush1.bf16.msra.mxu0 %v1770
    %1899 = vmatprep.subr.bf16.mxu0 0
    %1900 = vmatpush1.bf16.msra.mxu0 %v1769
    %1901 = vmatprep.subr.bf16.mxu0 0
    %1902 = vmatpush1.bf16.msra.mxu0 %v1768
    %1903 = vmatprep.subr.bf16.mxu0 0
    %1904 = vmatpush1.bf16.msra.mxu0 %v1767
    %1905 = vmatprep.subr.bf16.mxu0 0
    %1906 = vmatpush1.bf16.msra.mxu0 %v1766
    %1907 = vmatprep.subr.bf16.mxu0 0
    %1908 = vmatpush1.bf16.msra.mxu0 %v1765
    %1909 = vmatprep.subr.bf16.mxu0 0
    %1910 = vmatpush2.bf16.msra.mxu0 0
    %1911 = vmatprep.subr.bf16.mxu0 0
    %1912 = vmatpush2.bf16.msra.mxu0 0
    %1913 = vmatprep.subr.bf16.mxu0 0
    %1914 = vmatpush2.bf16.msra.mxu0 0
    %1915 = vmatprep.subr.bf16.mxu0 0
    %1916 = vmatpush2.bf16.msra.mxu0 0
    %1917 = vmatprep.subr.bf16.mxu0 0
    %1918 = vmatpush2.bf16.msra.mxu0 0
    %1919 = vmatprep.subr.bf16.mxu0 0
    %1920 = vmatpush2.bf16.msra.mxu0 0
    %1921 = vmatprep.subr.bf16.mxu0 0
    %1922 = vmatpush2.bf16.msra.mxu0 0
    %1923 = vmatprep.subr.bf16.mxu0 0
    %1924 = vmatpush2.bf16.msra.mxu0 0
    %1925 = vmatprep.mubr.bf16.mxu0 0
    %1926 = vmatmul.mubr.bf16.gmra.mxu0 %v1491
    %v1927 = vpop.f32.mrf.mxu0
    %v1928 = vadd.f32 %v1888, %v1927
    %v1929 = vpop.f32.mrf.mxu0
    %v1930 = vpop.f32.mrf.mxu0
    %v1931 = vpop.f32.mrf.mxu0
    %1932 = vdwg.mxu0
    %v1933 = vmax.f32 %v1928, 0.0
    %v1934 = vpack.c.bf16 %v1933, %v1933
    %v1935 = vld [vmem:[#allocation14] sm:$0xf]
    %v1936 = vld [vmem:[#allocation14 + $0x4] sm:$0xf]
    %v1937 = vld [vmem:[#allocation14 + $0x8] sm:$0xf]
    %v1938 = vld [vmem:[#allocation14 + $0xc] sm:$0xf]
    %v1939 = vld [vmem:[#allocation14 + $0x10] sm:$0xf]
    %v1940 = vld [vmem:[#allocation14 + $0x14] sm:$0xf]
    %v1941 = vld [vmem:[#allocation14 + $0x18] sm:$0xf]
    %v1942 = vld [vmem:[#allocation14 + $0x1c] sm:$0xf]
    %v1943 = vld [vmem:[#allocation14 + $0x20] sm:$0xf]
    %v1944 = vld [vmem:[#allocation14 + $0x24] sm:$0xf]
    %v1945 = vld [vmem:[#allocation14 + $0x28] sm:$0xf]
    %v1946 = vld [vmem:[#allocation14 + $0x2c] sm:$0xf]
    %v1947 = vld [vmem:[#allocation14 + $0x30] sm:$0xf]
    %v1948 = vld [vmem:[#allocation14 + $0x34] sm:$0xf]
    %v1949 = vld [vmem:[#allocation14 + $0x38] sm:$0xf]
    %v1950 = vld [vmem:[#allocation14 + $0x3c] sm:$0xf]
    %v1951 = vld [vmem:[%s10] sm:$0x1]
    %v1968 = vunpack.c.l.b16 %v1935
    %v1969 = vunpack.c.l.b16 %v1936
    %v1970 = vunpack.c.l.b16 %v1937
    %v1971 = vunpack.c.l.b16 %v1938
    %v1972 = vunpack.c.l.b16 %v1939
    %v1973 = vunpack.c.l.b16 %v1940
    %v1974 = vunpack.c.l.b16 %v1941
    %v1975 = vunpack.c.l.b16 %v1942
    %v1976 = vunpack.c.l.b16 %v1943
    %v1977 = vunpack.c.l.b16 %v1944
    %v1978 = vunpack.c.l.b16 %v1945
    %v1979 = vunpack.c.l.b16 %v1946
    %v1980 = vunpack.c.l.b16 %v1947
    %v1981 = vunpack.c.l.b16 %v1948
    %v1982 = vunpack.c.l.b16 %v1949
    %v1983 = vunpack.c.l.b16 %v1950
    %v1984 = vpack.c.b16 %v1969, %v1968
    %v1985 = vpack.c.b16 %v1971, %v1970
    %v1986 = vpack.c.b16 %v1973, %v1972
    %v1987 = vpack.c.b16 %v1975, %v1974
    %v1988 = vpack.c.b16 %v1977, %v1976
    %v1989 = vpack.c.b16 %v1979, %v1978
    %v1990 = vpack.c.b16 %v1981, %v1980
    %v1991 = vpack.c.b16 %v1983, %v1982
    %2000 = vmatprep.subr.bf16.mxu0 0
    %2001 = vmatpush1.bf16.msra.mxu0 %v1991
    %2002 = vmatprep.subr.bf16.mxu0 0
    %2003 = vmatpush1.bf16.msra.mxu0 %v1990
    %2004 = vmatprep.subr.bf16.mxu0 0
    %2005 = vmatpush1.bf16.msra.mxu0 %v1989
    %2006 = vmatprep.subr.bf16.mxu0 0
    %2007 = vmatpush1.bf16.msra.mxu0 %v1988
    %2008 = vmatprep.subr.bf16.mxu0 0
    %2009 = vmatpush1.bf16.msra.mxu0 %v1987
    %2010 = vmatprep.subr.bf16.mxu0 0
    %2011 = vmatpush1.bf16.msra.mxu0 %v1986
    %2012 = vmatprep.subr.bf16.mxu0 0
    %2013 = vmatpush1.bf16.msra.mxu0 %v1985
    %2014 = vmatprep.subr.bf16.mxu0 0
    %2015 = vmatpush1.bf16.msra.mxu0 %v1984
    %2016 = vmatprep.subr.bf16.mxu0 0
    %2017 = vmatpush2.bf16.msra.mxu0 0
    %2018 = vmatprep.subr.bf16.mxu0 0
    %2019 = vmatpush2.bf16.msra.mxu0 0
    %2020 = vmatprep.subr.bf16.mxu0 0
    %2021 = vmatpush2.bf16.msra.mxu0 0
    %2022 = vmatprep.subr.bf16.mxu0 0
    %2023 = vmatpush2.bf16.msra.mxu0 0
    %2024 = vmatprep.subr.bf16.mxu0 0
    %2025 = vmatpush2.bf16.msra.mxu0 0
    %2026 = vmatprep.subr.bf16.mxu0 0
    %2027 = vmatpush2.bf16.msra.mxu0 0
    %2028 = vmatprep.subr.bf16.mxu0 0
    %2029 = vmatpush2.bf16.msra.mxu0 0
    %2030 = vmatprep.subr.bf16.mxu0 0
    %2031 = vmatpush2.bf16.msra.mxu0 0
    %2032 = vmatprep.mubr.bf16.mxu0 0
    %2033 = vmatmul.mubr.bf16.gmra.mxu0 %v1934
    %v2034 = vpop.f32.mrf.mxu0
    %v2035 = vadd.f32 %v1951, %v2034
    %v2036 = vpop.f32.mrf.mxu0
    %v2037 = vpop.f32.mrf.mxu0
    %v2038 = vpop.f32.mrf.mxu0
    %2039 = vdwg.mxu0
    %v2040 = vmax.f32 %v2035, 0.0
    %v2041 = vld [vmem:[#allocation15] sm:$0xff]
    %v2042 = vld [vmem:[#allocation15 + $0x8] sm:$0xff]
    %v2043 = vld [vmem:[#allocation15 + $0x10] sm:$0xff]
    %v2044 = vld [vmem:[#allocation15 + $0x18] sm:$0xff]
    %v2045 = vld [vmem:[#allocation15 + $0x20] sm:$0xff]
    %v2046 = vld [vmem:[#allocation15 + $0x28] sm:$0xff]
    %v2047 = vld [vmem:[#allocation15 + $0x30] sm:$0xff]
    %v2048 = vld [vmem:[#allocation15 + $0x38] sm:$0xff]
    %v2049 = vld [vmem:[#allocation15 + $0x40] sm:$0xff]
    %v2050 = vld [vmem:[#allocation15 + $0x48] sm:$0xff]
    %v2051 = vld [vmem:[#allocation15 + $0x50] sm:$0xff]
    %v2052 = vld [vmem:[#allocation15 + $0x58] sm:$0xff]
    %v2053 = vld [vmem:[#allocation15 + $0x60] sm:$0xff]
    %v2054 = vld [vmem:[#allocation15 + $0x68] sm:$0xff]
    %v2055 = vld [vmem:[#allocation15 + $0x70] sm:$0xff]
    %v2056 = vld [vmem:[#allocation15 + $0x78] sm:$0xff]
    %v2057 = vld [vmem:[%s12] sm:$0x1]
    %2058 = vmatprep.subr.mxu0 0.0
    %2059 = vmatpush1.msra.mxu0 %v2056
    %2060 = vmatprep.subr.mxu0 0.0
    %2061 = vmatpush1.msra.mxu0 %v2055
    %2062 = vmatprep.subr.mxu0 0.0
    %2063 = vmatpush1.msra.mxu0 %v2054
    %2064 = vmatprep.subr.mxu0 0.0
    %2065 = vmatpush1.msra.mxu0 %v2053
    %2066 = vmatprep.subr.mxu0 0.0
    %2067 = vmatpush1.msra.mxu0 %v2052
    %2068 = vmatprep.subr.mxu0 0.0
    %2069 = vmatpush1.msra.mxu0 %v2051
    %2070 = vmatprep.subr.mxu0 0.0
    %2071 = vmatpush1.msra.mxu0 %v2050
    %2072 = vmatprep.subr.mxu0 0.0
    %2073 = vmatpush1.msra.mxu0 %v2049
    %2074 = vmatprep.subr.mxu0 0.0
    %2075 = vmatpush1.msra.mxu0 %v2048
    %2076 = vmatprep.subr.mxu0 0.0
    %2077 = vmatpush1.msra.mxu0 %v2047
    %2078 = vmatprep.subr.mxu0 0.0
    %2079 = vmatpush1.msra.mxu0 %v2046
    %2080 = vmatprep.subr.mxu0 0.0
    %2081 = vmatpush1.msra.mxu0 %v2045
    %2082 = vmatprep.subr.mxu0 0.0
    %2083 = vmatpush1.msra.mxu0 %v2044
    %2084 = vmatprep.subr.mxu0 0.0
    %2085 = vmatpush1.msra.mxu0 %v2043
    %2086 = vmatprep.subr.mxu0 0.0
    %2087 = vmatpush1.msra.mxu0 %v2042
    %2088 = vmatprep.subr.mxu0 0.0
    %2089 = vmatpush1.msra.mxu0 %v2041
    %2090 = vmatprep.subr.mxu0 0.0
    %2091 = vmatpush2.msra.mxu0 0.0
    %2092 = vmatprep.subr.mxu0 0.0
    %2093 = vmatpush2.msra.mxu0 0.0
    %2094 = vmatprep.subr.mxu0 0.0
    %2095 = vmatpush2.msra.mxu0 0.0
    %2096 = vmatprep.subr.mxu0 0.0
    %2097 = vmatpush2.msra.mxu0 0.0
    %2098 = vmatprep.subr.mxu0 0.0
    %2099 = vmatpush2.msra.mxu0 0.0
    %2100 = vmatprep.subr.mxu0 0.0
    %2101 = vmatpush2.msra.mxu0 0.0
    %2102 = vmatprep.subr.mxu0 0.0
    %2103 = vmatpush2.msra.mxu0 0.0
    %2104 = vmatprep.subr.mxu0 0.0
    %2105 = vmatpush2.msra.mxu0 0.0
    %2106 = vmatprep.subr.mxu0 0.0
    %2107 = vmatpush2.msra.mxu0 0.0
    %2108 = vmatprep.subr.mxu0 0.0
    %2109 = vmatpush2.msra.mxu0 0.0
    %2110 = vmatprep.subr.mxu0 0.0
    %2111 = vmatpush2.msra.mxu0 0.0
    %2112 = vmatprep.subr.mxu0 0.0
    %2113 = vmatpush2.msra.mxu0 0.0
    %2114 = vmatprep.subr.mxu0 0.0
    %2115 = vmatpush2.msra.mxu0 0.0
    %2116 = vmatprep.subr.mxu0 0.0
    %2117 = vmatpush2.msra.mxu0 0.0
    %2118 = vmatprep.subr.mxu0 0.0
    %2119 = vmatpush2.msra.mxu0 0.0
    %2120 = vmatprep.subr.mxu0 0.0
    %2121 = vmatpush2.msra.mxu0 0.0
    %2122 = vmatprep.mubr.f32.mxu0 0.0
    %2123 = vmatmul.mubr.f32.gmra.mxu0 %v2040
    %v2124 = vpop.f32.mrf.mxu0
    %v2125 = vadd.f32 %v2057, %v2124
    %v2126 = vpop.f32.mrf.mxu0
    %2127 = vdwg.mxu0
    %2128 = vst [vmem:[#allocation17] sm:$0x1] %v2125
    %s2129 = scalar_lea.vmem [#allocation3], 32
    %v2130 = vld [vmem:[%s2129] sm:$0xff]
    %v2131 = vld [vmem:[%s2129 + $0x8] sm:$0xff]
    %v2132 = vld [vmem:[%s2129 + $0x10] sm:$0xff]
    %v2133 = vld [vmem:[%s2129 + $0x18] sm:$0xf]
    %v2134 = vpack.c.bf16 %v2131, %v2130
    %v2135 = vpack.c.bf16 %v2133, %v2132
    %v2136 = vld [vmem:[#allocation6] sm:$0xff]
    %v2137 = vld [vmem:[#allocation6 + $0x8] sm:$0xff]
    %v2138 = vld [vmem:[#allocation6 + $0x10] sm:$0xff]
    %v2139 = vld [vmem:[#allocation6 + $0x18] sm:$0xff]
    %v2140 = vld [vmem:[%s2129 + $0x1] sm:$0xff]
    %v2141 = vld [vmem:[%s2129 + $0x9] sm:$0xff]
    %v2142 = vld [vmem:[%s2129 + $0x11] sm:$0xff]
    %v2143 = vld [vmem:[%s2129 + $0x19] sm:$0xf]
    %v2144 = vpack.c.bf16 %v2141, %v2140
    %v2145 = vpack.c.bf16 %v2143, %v2142
    %v2146 = vld [vmem:[%s171] sm:$0xff]
    %v2147 = vld [vmem:[%s171 + $0x8] sm:$0xff]
    %v2148 = vld [vmem:[%s171 + $0x10] sm:$0xff]
    %v2149 = vld [vmem:[%s171 + $0x18] sm:$0xff]
    %v2154 = vunpack.c.l.b16 %v2146
    %v2155 = vunpack.c.h.b16 %v2146
    %v2156 = vunpack.c.l.b16 %v2147
    %v2157 = vunpack.c.h.b16 %v2147
    %v2158 = vunpack.c.l.b16 %v2148
    %v2159 = vunpack.c.h.b16 %v2148
    %v2160 = vunpack.c.l.b16 %v2149
    %v2161 = vunpack.c.h.b16 %v2149
    %v2162 = vpack.c.b16 %v2156, %v2154
    %v2163 = vpack.c.b16 %v2157, %v2155
    %v2164 = vpack.c.b16 %v2160, %v2158
    %v2165 = vpack.c.b16 %v2161, %v2159
    %v2171 = vsel %vm196, %v2144, 0
    %v2174 = vsel %vm196, %v2145, 0
    %2176 = vmatprep.subr.bf16.mxu0 0
    %2177 = vmatpush1.bf16.msra.mxu0 0
    %2178 = vmatprep.subr.bf16.mxu0 0
    %2179 = vmatpush1.bf16.msra.mxu0 0
    %2180 = vmatprep.subr.bf16.mxu0 0
    %2181 = vmatpush1.bf16.msra.mxu0 0
    %2182 = vmatprep.subr.bf16.mxu0 0
    %2183 = vmatpush1.bf16.msra.mxu0 0
    %2184 = vmatprep.subr.bf16.mxu0 0
    %2185 = vmatpush1.bf16.msra.mxu0 0
    %2186 = vmatprep.subr.bf16.mxu0 0
    %2187 = vmatpush1.bf16.msra.mxu0 0
    %2188 = vmatprep.subr.bf16.mxu0 %v2165
    %2189 = vmatpush1.bf16.msra.mxu0 %v2164
    %2190 = vmatprep.subr.bf16.mxu0 %v2163
    %2191 = vmatpush1.bf16.msra.mxu0 %v2162
    %2192 = vmatprep.subr.bf16.mxu0 0
    %2193 = vmatpush2.bf16.msra.mxu0 0
    %2194 = vmatprep.subr.bf16.mxu0 0
    %2195 = vmatpush2.bf16.msra.mxu0 0
    %2196 = vmatprep.subr.bf16.mxu0 0
    %2197 = vmatpush2.bf16.msra.mxu0 0
    %2198 = vmatprep.subr.bf16.mxu0 0
    %2199 = vmatpush2.bf16.msra.mxu0 0
    %2200 = vmatprep.subr.bf16.mxu0 0
    %2201 = vmatpush2.bf16.msra.mxu0 0
    %2202 = vmatprep.subr.bf16.mxu0 0
    %2203 = vmatpush2.bf16.msra.mxu0 0
    %2204 = vmatprep.subr.bf16.mxu0 0
    %2205 = vmatpush2.bf16.msra.mxu0 0
    %2206 = vmatprep.subr.bf16.mxu0 0
    %2207 = vmatpush2.bf16.msra.mxu0 0
    %2208 = vmatprep.mubr.bf16.mxu0 0
    %2209 = vmatmul.mubr.bf16.gmra.mxu0 %v2171
    %v2210 = vpop.f32.mrf.mxu0
    %v2211 = vadd.f32 0.0, %v2210
    %v2212 = vpop.f32.mrf.mxu0
    %v2213 = vadd.f32 0.0, %v2212
    %v2214 = vpop.f32.mrf.mxu0
    %v2215 = vadd.f32 0.0, %v2214
    %v2216 = vpop.f32.mrf.mxu0
    %v2217 = vadd.f32 0.0, %v2216
    %2218 = vmatprep.mubr.bf16.mxu0 0
    %2219 = vmatmul.mubr.bf16.gmra.mxu0 %v2174
    %v2220 = vpop.f32.mrf.mxu0
    %v2221 = vadd.f32 0.0, %v2220
    %v2222 = vpop.f32.mrf.mxu0
    %v2223 = vadd.f32 0.0, %v2222
    %v2224 = vpop.f32.mrf.mxu0
    %v2225 = vadd.f32 0.0, %v2224
    %v2226 = vpop.f32.mrf.mxu0
    %v2227 = vadd.f32 0.0, %v2226
    %2228 = vdwg.mxu0
    %v2233 = vunpack.c.l.b16 %v2136
    %v2234 = vunpack.c.h.b16 %v2136
    %v2235 = vunpack.c.l.b16 %v2137
    %v2236 = vunpack.c.h.b16 %v2137
    %v2237 = vunpack.c.l.b16 %v2138
    %v2238 = vunpack.c.h.b16 %v2138
    %v2239 = vunpack.c.l.b16 %v2139
    %v2240 = vunpack.c.h.b16 %v2139
    %v2241 = vpack.c.b16 %v2235, %v2233
    %v2242 = vpack.c.b16 %v2236, %v2234
    %v2243 = vpack.c.b16 %v2239, %v2237
    %v2244 = vpack.c.b16 %v2240, %v2238
    %v2250 = vsel %vm196, %v2134, 0
    %v2253 = vsel %vm196, %v2135, 0
    %2255 = vmatprep.subr.bf16.mxu0 0
    %2256 = vmatpush1.bf16.msra.mxu0 0
    %2257 = vmatprep.subr.bf16.mxu0 0
    %2258 = vmatpush1.bf16.msra.mxu0 0
    %2259 = vmatprep.subr.bf16.mxu0 0
    %2260 = vmatpush1.bf16.msra.mxu0 0
    %2261 = vmatprep.subr.bf16.mxu0 0
    %2262 = vmatpush1.bf16.msra.mxu0 0
    %2263 = vmatprep.subr.bf16.mxu0 0
    %2264 = vmatpush1.bf16.msra.mxu0 0
    %2265 = vmatprep.subr.bf16.mxu0 0
    %2266 = vmatpush1.bf16.msra.mxu0 0
    %2267 = vmatprep.subr.bf16.mxu0 %v2244
    %2268 = vmatpush1.bf16.msra.mxu0 %v2243
    %2269 = vmatprep.subr.bf16.mxu0 %v2242
    %2270 = vmatpush1.bf16.msra.mxu0 %v2241
    %2271 = vmatprep.subr.bf16.mxu0 0
    %2272 = vmatpush2.bf16.msra.mxu0 0
    %2273 = vmatprep.subr.bf16.mxu0 0
    %2274 = vmatpush2.bf16.msra.mxu0 0
    %2275 = vmatprep.subr.bf16.mxu0 0
    %2276 = vmatpush2.bf16.msra.mxu0 0
    %2277 = vmatprep.subr.bf16.mxu0 0
    %2278 = vmatpush2.bf16.msra.mxu0 0
    %2279 = vmatprep.subr.bf16.mxu0 0
    %2280 = vmatpush2.bf16.msra.mxu0 0
    %2281 = vmatprep.subr.bf16.mxu0 0
    %2282 = vmatpush2.bf16.msra.mxu0 0
    %2283 = vmatprep.subr.bf16.mxu0 0
    %2284 = vmatpush2.bf16.msra.mxu0 0
    %2285 = vmatprep.subr.bf16.mxu0 0
    %2286 = vmatpush2.bf16.msra.mxu0 0
    %2287 = vmatprep.mubr.bf16.mxu0 0
    %2288 = vmatmul.mubr.bf16.gmra.mxu0 %v2250
    %v2289 = vpop.f32.mrf.mxu0
    %v2290 = vadd.f32 %v2211, %v2289
    %v2291 = vpop.f32.mrf.mxu0
    %v2292 = vadd.f32 %v2213, %v2291
    %v2293 = vpop.f32.mrf.mxu0
    %v2294 = vadd.f32 %v2215, %v2293
    %v2295 = vpop.f32.mrf.mxu0
    %v2296 = vadd.f32 %v2217, %v2295
    %2297 = vmatprep.mubr.bf16.mxu0 0
    %2298 = vmatmul.mubr.bf16.gmra.mxu0 %v2253
    %v2299 = vpop.f32.mrf.mxu0
    %v2300 = vadd.f32 %v2221, %v2299
    %v2301 = vpop.f32.mrf.mxu0
    %v2302 = vadd.f32 %v2223, %v2301
    %v2303 = vpop.f32.mrf.mxu0
    %v2304 = vadd.f32 %v2225, %v2303
    %v2305 = vpop.f32.mrf.mxu0
    %v2306 = vadd.f32 %v2227, %v2305
    %2307 = vdwg.mxu0
    %v2308 = vld [vmem:[%s2129 + $0x2] sm:$0xff]
    %v2309 = vld [vmem:[%s2129 + $0xa] sm:$0xff]
    %v2310 = vld [vmem:[%s2129 + $0x12] sm:$0xff]
    %v2311 = vld [vmem:[%s2129 + $0x1a] sm:$0xf]
    %v2312 = vpack.c.bf16 %v2309, %v2308
    %v2313 = vpack.c.bf16 %v2311, %v2310
    %v2314 = vld [vmem:[%s341] sm:$0xff]
    %v2315 = vld [vmem:[%s341 + $0x8] sm:$0xff]
    %v2316 = vld [vmem:[%s341 + $0x10] sm:$0xff]
    %v2317 = vld [vmem:[%s341 + $0x18] sm:$0xff]
    %v2322 = vunpack.c.l.b16 %v2314
    %v2323 = vunpack.c.h.b16 %v2314
    %v2324 = vunpack.c.l.b16 %v2315
    %v2325 = vunpack.c.h.b16 %v2315
    %v2326 = vunpack.c.l.b16 %v2316
    %v2327 = vunpack.c.h.b16 %v2316
    %v2328 = vunpack.c.l.b16 %v2317
    %v2329 = vunpack.c.h.b16 %v2317
    %v2330 = vpack.c.b16 %v2324, %v2322
    %v2331 = vpack.c.b16 %v2325, %v2323
    %v2332 = vpack.c.b16 %v2328, %v2326
    %v2333 = vpack.c.b16 %v2329, %v2327
    %v2339 = vsel %vm196, %v2312, 0
    %v2342 = vsel %vm196, %v2313, 0
    %2344 = vmatprep.subr.bf16.mxu0 0
    %2345 = vmatpush1.bf16.msra.mxu0 0
    %2346 = vmatprep.subr.bf16.mxu0 0
    %2347 = vmatpush1.bf16.msra.mxu0 0
    %2348 = vmatprep.subr.bf16.mxu0 0
    %2349 = vmatpush1.bf16.msra.mxu0 0
    %2350 = vmatprep.subr.bf16.mxu0 0
    %2351 = vmatpush1.bf16.msra.mxu0 0
    %2352 = vmatprep.subr.bf16.mxu0 0
    %2353 = vmatpush1.bf16.msra.mxu0 0
    %2354 = vmatprep.subr.bf16.mxu0 0
    %2355 = vmatpush1.bf16.msra.mxu0 0
    %2356 = vmatprep.subr.bf16.mxu0 %v2333
    %2357 = vmatpush1.bf16.msra.mxu0 %v2332
    %2358 = vmatprep.subr.bf16.mxu0 %v2331
    %2359 = vmatpush1.bf16.msra.mxu0 %v2330
    %2360 = vmatprep.subr.bf16.mxu0 0
    %2361 = vmatpush2.bf16.msra.mxu0 0
    %2362 = vmatprep.subr.bf16.mxu0 0
    %2363 = vmatpush2.bf16.msra.mxu0 0
    %2364 = vmatprep.subr.bf16.mxu0 0
    %2365 = vmatpush2.bf16.msra.mxu0 0
    %2366 = vmatprep.subr.bf16.mxu0 0
    %2367 = vmatpush2.bf16.msra.mxu0 0
    %2368 = vmatprep.subr.bf16.mxu0 0
    %2369 = vmatpush2.bf16.msra.mxu0 0
    %2370 = vmatprep.subr.bf16.mxu0 0
    %2371 = vmatpush2.bf16.msra.mxu0 0
    %2372 = vmatprep.subr.bf16.mxu0 0
    %2373 = vmatpush2.bf16.msra.mxu0 0
    %2374 = vmatprep.subr.bf16.mxu0 0
    %2375 = vmatpush2.bf16.msra.mxu0 0
    %2376 = vmatprep.mubr.bf16.mxu0 0
    %2377 = vmatmul.mubr.bf16.gmra.mxu0 %v2339
    %v2378 = vpop.f32.mrf.mxu0
    %v2379 = vadd.f32 0.0, %v2378
    %v2380 = vpop.f32.mrf.mxu0
    %v2381 = vadd.f32 0.0, %v2380
    %v2382 = vpop.f32.mrf.mxu0
    %v2383 = vadd.f32 0.0, %v2382
    %v2384 = vpop.f32.mrf.mxu0
    %v2385 = vadd.f32 0.0, %v2384
    %2386 = vmatprep.mubr.bf16.mxu0 0
    %2387 = vmatmul.mubr.bf16.gmra.mxu0 %v2342
    %v2388 = vpop.f32.mrf.mxu0
    %v2389 = vadd.f32 0.0, %v2388
    %v2390 = vpop.f32.mrf.mxu0
    %v2391 = vadd.f32 0.0, %v2390
    %v2392 = vpop.f32.mrf.mxu0
    %v2393 = vadd.f32 0.0, %v2392
    %v2394 = vpop.f32.mrf.mxu0
    %v2395 = vadd.f32 0.0, %v2394
    %2396 = vdwg.mxu0
    %v2397 = vadd.f32 %v2290, %v2379
    %v2398 = vadd.f32 %v2292, %v2381
    %v2399 = vadd.f32 %v2294, %v2383
    %v2400 = vadd.f32 %v2296, %v2385
    %v2401 = vadd.f32 %v2300, %v2389
    %v2402 = vadd.f32 %v2302, %v2391
    %v2403 = vadd.f32 %v2304, %v2393
    %v2404 = vadd.f32 %v2306, %v2395
    %v2405 = vld [vmem:[%s2129 + $0x3] sm:$0xff]
    %v2406 = vld [vmem:[%s2129 + $0xb] sm:$0xff]
    %v2407 = vld [vmem:[%s2129 + $0x13] sm:$0xff]
    %v2408 = vld [vmem:[%s2129 + $0x1b] sm:$0xf]
    %v2409 = vpack.c.bf16 %v2406, %v2405
    %v2410 = vpack.c.bf16 %v2408, %v2407
    %v2411 = vld [vmem:[%s439] sm:$0xff]
    %v2412 = vld [vmem:[%s439 + $0x8] sm:$0xff]
    %v2413 = vld [vmem:[%s439 + $0x10] sm:$0xff]
    %v2414 = vld [vmem:[%s439 + $0x18] sm:$0xff]
    %v2419 = vunpack.c.l.b16 %v2411
    %v2420 = vunpack.c.h.b16 %v2411
    %v2421 = vunpack.c.l.b16 %v2412
    %v2422 = vunpack.c.h.b16 %v2412
    %v2423 = vunpack.c.l.b16 %v2413
    %v2424 = vunpack.c.h.b16 %v2413
    %v2425 = vunpack.c.l.b16 %v2414
    %v2426 = vunpack.c.h.b16 %v2414
    %v2427 = vpack.c.b16 %v2421, %v2419
    %v2428 = vpack.c.b16 %v2422, %v2420
    %v2429 = vpack.c.b16 %v2425, %v2423
    %v2430 = vpack.c.b16 %v2426, %v2424
    %v2436 = vsel %vm196, %v2409, 0
    %v2439 = vsel %vm196, %v2410, 0
    %2441 = vmatprep.subr.bf16.mxu0 0
    %2442 = vmatpush1.bf16.msra.mxu0 0
    %2443 = vmatprep.subr.bf16.mxu0 0
    %2444 = vmatpush1.bf16.msra.mxu0 0
    %2445 = vmatprep.subr.bf16.mxu0 0
    %2446 = vmatpush1.bf16.msra.mxu0 0
    %2447 = vmatprep.subr.bf16.mxu0 0
    %2448 = vmatpush1.bf16.msra.mxu0 0
    %2449 = vmatprep.subr.bf16.mxu0 0
    %2450 = vmatpush1.bf16.msra.mxu0 0
    %2451 = vmatprep.subr.bf16.mxu0 0
    %2452 = vmatpush1.bf16.msra.mxu0 0
    %2453 = vmatprep.subr.bf16.mxu0 %v2430
    %2454 = vmatpush1.bf16.msra.mxu0 %v2429
    %2455 = vmatprep.subr.bf16.mxu0 %v2428
    %2456 = vmatpush1.bf16.msra.mxu0 %v2427
    %2457 = vmatprep.subr.bf16.mxu0 0
    %2458 = vmatpush2.bf16.msra.mxu0 0
    %2459 = vmatprep.subr.bf16.mxu0 0
    %2460 = vmatpush2.bf16.msra.mxu0 0
    %2461 = vmatprep.subr.bf16.mxu0 0
    %2462 = vmatpush2.bf16.msra.mxu0 0
    %2463 = vmatprep.subr.bf16.mxu0 0
    %2464 = vmatpush2.bf16.msra.mxu0 0
    %2465 = vmatprep.subr.bf16.mxu0 0
    %2466 = vmatpush2.bf16.msra.mxu0 0
    %2467 = vmatprep.subr.bf16.mxu0 0
    %2468 = vmatpush2.bf16.msra.mxu0 0
    %2469 = vmatprep.subr.bf16.mxu0 0
    %2470 = vmatpush2.bf16.msra.mxu0 0
    %2471 = vmatprep.subr.bf16.mxu0 0
    %2472 = vmatpush2.bf16.msra.mxu0 0
    %2473 = vmatprep.mubr.bf16.mxu0 0
    %2474 = vmatmul.mubr.bf16.gmra.mxu0 %v2436
    %v2475 = vpop.f32.mrf.mxu0
    %v2476 = vadd.f32 0.0, %v2475
    %v2477 = vpop.f32.mrf.mxu0
    %v2478 = vadd.f32 0.0, %v2477
    %v2479 = vpop.f32.mrf.mxu0
    %v2480 = vadd.f32 0.0, %v2479
    %v2481 = vpop.f32.mrf.mxu0
    %v2482 = vadd.f32 0.0, %v2481
    %2483 = vmatprep.mubr.bf16.mxu0 0
    %2484 = vmatmul.mubr.bf16.gmra.mxu0 %v2439
    %v2485 = vpop.f32.mrf.mxu0
    %v2486 = vadd.f32 0.0, %v2485
    %v2487 = vpop.f32.mrf.mxu0
    %v2488 = vadd.f32 0.0, %v2487
    %v2489 = vpop.f32.mrf.mxu0
    %v2490 = vadd.f32 0.0, %v2489
    %v2491 = vpop.f32.mrf.mxu0
    %v2492 = vadd.f32 0.0, %v2491
    %2493 = vdwg.mxu0
    %v2494 = vadd.f32 %v2397, %v2476
    %v2495 = vadd.f32 %v2398, %v2478
    %v2496 = vadd.f32 %v2399, %v2480
    %v2497 = vadd.f32 %v2400, %v2482
    %v2498 = vadd.f32 %v2401, %v2486
    %v2499 = vadd.f32 %v2402, %v2488
    %v2500 = vadd.f32 %v2403, %v2490
    %v2501 = vadd.f32 %v2404, %v2492
    %v2502 = vld [vmem:[%s2129 + $0x4] sm:$0xff]
    %v2503 = vld [vmem:[%s2129 + $0xc] sm:$0xff]
    %v2504 = vld [vmem:[%s2129 + $0x14] sm:$0xff]
    %v2505 = vld [vmem:[%s2129 + $0x1c] sm:$0xf]
    %v2506 = vpack.c.bf16 %v2503, %v2502
    %v2507 = vpack.c.bf16 %v2505, %v2504
    %v2508 = vld [vmem:[%s537] sm:$0xff]
    %v2509 = vld [vmem:[%s537 + $0x8] sm:$0xff]
    %v2510 = vld [vmem:[%s537 + $0x10] sm:$0xff]
    %v2511 = vld [vmem:[%s537 + $0x18] sm:$0xff]
    %v2516 = vunpack.c.l.b16 %v2508
    %v2517 = vunpack.c.h.b16 %v2508
    %v2518 = vunpack.c.l.b16 %v2509
    %v2519 = vunpack.c.h.b16 %v2509
    %v2520 = vunpack.c.l.b16 %v2510
    %v2521 = vunpack.c.h.b16 %v2510
    %v2522 = vunpack.c.l.b16 %v2511
    %v2523 = vunpack.c.h.b16 %v2511
    %v2524 = vpack.c.b16 %v2518, %v2516
    %v2525 = vpack.c.b16 %v2519, %v2517
    %v2526 = vpack.c.b16 %v2522, %v2520
    %v2527 = vpack.c.b16 %v2523, %v2521
    %v2533 = vsel %vm196, %v2506, 0
    %v2536 = vsel %vm196, %v2507, 0
    %2538 = vmatprep.subr.bf16.mxu0 0
    %2539 = vmatpush1.bf16.msra.mxu0 0
    %2540 = vmatprep.subr.bf16.mxu0 0
    %2541 = vmatpush1.bf16.msra.mxu0 0
    %2542 = vmatprep.subr.bf16.mxu0 0
    %2543 = vmatpush1.bf16.msra.mxu0 0
    %2544 = vmatprep.subr.bf16.mxu0 0
    %2545 = vmatpush1.bf16.msra.mxu0 0
    %2546 = vmatprep.subr.bf16.mxu0 0
    %2547 = vmatpush1.bf16.msra.mxu0 0
    %2548 = vmatprep.subr.bf16.mxu0 0
    %2549 = vmatpush1.bf16.msra.mxu0 0
    %2550 = vmatprep.subr.bf16.mxu0 %v2527
    %2551 = vmatpush1.bf16.msra.mxu0 %v2526
    %2552 = vmatprep.subr.bf16.mxu0 %v2525
    %2553 = vmatpush1.bf16.msra.mxu0 %v2524
    %2554 = vmatprep.subr.bf16.mxu0 0
    %2555 = vmatpush2.bf16.msra.mxu0 0
    %2556 = vmatprep.subr.bf16.mxu0 0
    %2557 = vmatpush2.bf16.msra.mxu0 0
    %2558 = vmatprep.subr.bf16.mxu0 0
    %2559 = vmatpush2.bf16.msra.mxu0 0
    %2560 = vmatprep.subr.bf16.mxu0 0
    %2561 = vmatpush2.bf16.msra.mxu0 0
    %2562 = vmatprep.subr.bf16.mxu0 0
    %2563 = vmatpush2.bf16.msra.mxu0 0
    %2564 = vmatprep.subr.bf16.mxu0 0
    %2565 = vmatpush2.bf16.msra.mxu0 0
    %2566 = vmatprep.subr.bf16.mxu0 0
    %2567 = vmatpush2.bf16.msra.mxu0 0
    %2568 = vmatprep.subr.bf16.mxu0 0
    %2569 = vmatpush2.bf16.msra.mxu0 0
    %2570 = vmatprep.mubr.bf16.mxu0 0
    %2571 = vmatmul.mubr.bf16.gmra.mxu0 %v2533
    %v2572 = vpop.f32.mrf.mxu0
    %v2573 = vadd.f32 0.0, %v2572
    %v2574 = vpop.f32.mrf.mxu0
    %v2575 = vadd.f32 0.0, %v2574
    %v2576 = vpop.f32.mrf.mxu0
    %v2577 = vadd.f32 0.0, %v2576
    %v2578 = vpop.f32.mrf.mxu0
    %v2579 = vadd.f32 0.0, %v2578
    %2580 = vmatprep.mubr.bf16.mxu0 0
    %2581 = vmatmul.mubr.bf16.gmra.mxu0 %v2536
    %v2582 = vpop.f32.mrf.mxu0
    %v2583 = vadd.f32 0.0, %v2582
    %v2584 = vpop.f32.mrf.mxu0
    %v2585 = vadd.f32 0.0, %v2584
    %v2586 = vpop.f32.mrf.mxu0
    %v2587 = vadd.f32 0.0, %v2586
    %v2588 = vpop.f32.mrf.mxu0
    %v2589 = vadd.f32 0.0, %v2588
    %2590 = vdwg.mxu0
    %v2591 = vadd.f32 %v2494, %v2573
    %v2592 = vadd.f32 %v2495, %v2575
    %v2593 = vadd.f32 %v2496, %v2577
    %v2594 = vadd.f32 %v2497, %v2579
    %v2595 = vadd.f32 %v2498, %v2583
    %v2596 = vadd.f32 %v2499, %v2585
    %v2597 = vadd.f32 %v2500, %v2587
    %v2598 = vadd.f32 %v2501, %v2589
    %v2599 = vmax.f32 %v2591, %v2592
    %v2600 = vmax.f32 %v2593, %v2594
    %v2601 = vmax.f32 %v2595, %v2596
    %v2602 = vmax.f32 %v2597, %v2598
    %v2603 = vld [vmem:[#allocation8] sm:$0xff]
    %v2604 = vld [vmem:[#allocation8 + $0x8] sm:$0xff]
    %v2605 = vld [vmem:[#allocation8 + $0x10] sm:$0xff]
    %v2606 = vld [vmem:[#allocation8 + $0x18] sm:$0xff]
    %v2608 = vsel %vm637, %v2603, 0
    %v2611 = vsel %vm637, %v2604, 0
    %v2614 = vsel %vm637, %v2605, 0
    %v2617 = vsel %vm637, %v2606, 0
    %v2620 = vsel %vm650, %v2602, 0
    %2622 = vmatprep.subr.mxu0 0.0
    %2623 = vmatpush1.msra.mxu0 0.0
    %2624 = vmatprep.subr.mxu0 0.0
    %2625 = vmatpush1.msra.mxu0 0.0
    %2626 = vmatprep.subr.mxu0 0.0
    %2627 = vmatpush1.msra.mxu0 0.0
    %2628 = vmatprep.subr.mxu0 0.0
    %2629 = vmatpush1.msra.mxu0 0.0
    %2630 = vmatprep.subr.mxu0 0.0
    %2631 = vmatpush1.msra.mxu0 0.0
    %2632 = vmatprep.subr.mxu0 0.0
    %2633 = vmatpush1.msra.mxu0 0.0
    %2634 = vmatprep.subr.mxu0 0.0
    %2635 = vmatpush1.msra.mxu0 0.0
    %2636 = vmatprep.subr.mxu0 0.0
    %2637 = vmatpush1.msra.mxu0 0.0
    %2638 = vmatprep.subr.mxu0 0.0
    %2639 = vmatpush1.msra.mxu0 0.0
    %2640 = vmatprep.subr.mxu0 0.0
    %2641 = vmatpush1.msra.mxu0 0.0
    %2642 = vmatprep.subr.mxu0 0.0
    %2643 = vmatpush1.msra.mxu0 0.0
    %2644 = vmatprep.subr.mxu0 0.0
    %2645 = vmatpush1.msra.mxu0 0.0
    %2646 = vmatprep.subr.mxu0 0.0
    %2647 = vmatpush1.msra.mxu0 %v2620
    %2648 = vmatprep.subr.mxu0 0.0
    %2649 = vmatpush1.msra.mxu0 %v2601
    %2650 = vmatprep.subr.mxu0 0.0
    %2651 = vmatpush1.msra.mxu0 %v2600
    %2652 = vmatprep.subr.mxu0 0.0
    %2653 = vmatpush1.msra.mxu0 %v2599
    %2654 = vmatprep.subr.mxu0 0.0
    %2655 = vmatpush2.msra.mxu0 0.0
    %2656 = vmatprep.subr.mxu0 0.0
    %2657 = vmatpush2.msra.mxu0 0.0
    %2658 = vmatprep.subr.mxu0 0.0
    %2659 = vmatpush2.msra.mxu0 0.0
    %2660 = vmatprep.subr.mxu0 0.0
    %2661 = vmatpush2.msra.mxu0 0.0
    %2662 = vmatprep.subr.mxu0 0.0
    %2663 = vmatpush2.msra.mxu0 0.0
    %2664 = vmatprep.subr.mxu0 0.0
    %2665 = vmatpush2.msra.mxu0 0.0
    %2666 = vmatprep.subr.mxu0 0.0
    %2667 = vmatpush2.msra.mxu0 0.0
    %2668 = vmatprep.subr.mxu0 0.0
    %2669 = vmatpush2.msra.mxu0 0.0
    %2670 = vmatprep.subr.mxu0 0.0
    %2671 = vmatpush2.msra.mxu0 0.0
    %2672 = vmatprep.subr.mxu0 0.0
    %2673 = vmatpush2.msra.mxu0 0.0
    %2674 = vmatprep.subr.mxu0 0.0
    %2675 = vmatpush2.msra.mxu0 0.0
    %2676 = vmatprep.subr.mxu0 0.0
    %2677 = vmatpush2.msra.mxu0 0.0
    %2678 = vmatprep.subr.mxu0 0.0
    %2679 = vmatpush2.msra.mxu0 0.0
    %2680 = vmatprep.subr.mxu0 0.0
    %2681 = vmatpush2.msra.mxu0 0.0
    %2682 = vmatprep.subr.mxu0 0.0
    %2683 = vmatpush2.msra.mxu0 0.0
    %2684 = vmatprep.subr.mxu0 0.0
    %2685 = vmatpush2.msra.mxu0 0.0
    %2686 = vmatprep.mubr.f32.mxu0 0.0
    %2687 = vmatmul.mubr.f32.gmra.mxu0 %v2608
    %v2688 = vpop.f32.mrf.mxu0
    %v2689 = vadd.f32 0.0, %v2688
    %v2690 = vpop.f32.mrf.mxu0
    %2691 = vmatprep.mubr.f32.mxu0 0.0
    %2692 = vmatmul.mubr.f32.gmra.mxu0 %v2611
    %v2693 = vpop.f32.mrf.mxu0
    %v2694 = vadd.f32 0.0, %v2693
    %v2695 = vpop.f32.mrf.mxu0
    %2696 = vmatprep.mubr.f32.mxu0 0.0
    %2697 = vmatmul.mubr.f32.gmra.mxu0 %v2614
    %v2698 = vpop.f32.mrf.mxu0
    %v2699 = vadd.f32 0.0, %v2698
    %v2700 = vpop.f32.mrf.mxu0
    %2701 = vmatprep.mubr.f32.mxu0 0.0
    %2702 = vmatmul.mubr.f32.gmra.mxu0 %v2617
    %v2703 = vpop.f32.mrf.mxu0
    %v2704 = vadd.f32 0.0, %v2703
    %v2705 = vpop.f32.mrf.mxu0
    %2706 = vdwg.mxu0
    %v2707 = vmax.f32 %v2689, %v2699
    %v2708 = vmax.f32 %v2694, %v2704
    %v2709 = vld [vmem:[%s3] sm:$0x1]
    %v2711 = vlaneseq
    %v2712 = vshrl.u32 %v2711, 7
    %v2713 = vsub.s32 0, %v2712
    %v2714 = vrot.slane %v2709, %v2713
    %v2716 = vadd.f32 %v2707, %v2714
    %v2717 = vadd.f32 %v2708, %v2714
    %v2718 = vmax.f32 %v2716, 0.0
    %v2719 = vmax.f32 %v2717, 0.0
    %s2720 = scalar_lea.vmem [#allocation2], 16
    %2721 = vst [vmem:[%s2720] sm:$0xff] %v2718
    %2722 = vst [vmem:[%s2720 + $0x8] sm:$0xff] %v2719
    %v2723 = vld [vmem:[%s2720] sm:$0xff]
    %v2724 = vld [vmem:[%s2720 + $0x8] sm:$0x3]
    %v2725 = vld [vmem:[%s2720 + $0x1] sm:$0xff]
    %v2726 = vld [vmem:[%s2720 + $0x9] sm:$0x3]
    %v2727 = vld [vmem:[%s2720 + $0x2] sm:$0xff]
    %v2728 = vld [vmem:[%s2720 + $0xa] sm:$0x3]
    %v2729 = vld [vmem:[%s2720 + $0x3] sm:$0xff]
    %v2730 = vld [vmem:[%s2720 + $0xb] sm:$0x3]
    %v2731 = vld [vmem:[%s2720 + $0x4] sm:$0xff]
    %v2732 = vld [vmem:[%s2720 + $0xc] sm:$0x3]
    %v2733 = vpack.c.bf16 %v2724, %v2723
    %v2734 = vpack.c.bf16 %v2726, %v2725
    %v2735 = vpack.c.bf16 %v2728, %v2727
    %v2736 = vpack.c.bf16 %v2730, %v2729
    %v2737 = vpack.c.bf16 %v2732, %v2731
    %v2738 = vld [vmem:[#allocation9] sm:$0xff]
    %v2739 = vld [vmem:[#allocation9 + $0x8] sm:$0xff]
    %v2740 = vld [vmem:[#allocation9 + $0x10] sm:$0xff]
    %v2741 = vld [vmem:[#allocation9 + $0x18] sm:$0xff]
    %v2742 = vld [vmem:[#allocation9 + $0x20] sm:$0xff]
    %v2743 = vld [vmem:[#allocation9 + $0x28] sm:$0xff]
    %v2744 = vld [vmem:[#allocation9 + $0x30] sm:$0xff]
    %v2745 = vld [vmem:[#allocation9 + $0x38] sm:$0xff]
    %v2746 = vld [vmem:[#allocation9 + $0x40] sm:$0xff]
    %v2747 = vld [vmem:[#allocation9 + $0x48] sm:$0xff]
    %v2748 = vld [vmem:[#allocation9 + $0x50] sm:$0xff]
    %v2749 = vld [vmem:[#allocation9 + $0x58] sm:$0xff]
    %v2750 = vld [vmem:[#allocation9 + $0x60] sm:$0xff]
    %v2751 = vld [vmem:[#allocation9 + $0x68] sm:$0xff]
    %v2752 = vld [vmem:[#allocation9 + $0x70] sm:$0xff]
    %v2753 = vld [vmem:[#allocation9 + $0x78] sm:$0xff]
    %v2754 = vld [vmem:[#allocation9 + $0x80] sm:$0xff]
    %v2755 = vld [vmem:[#allocation9 + $0x88] sm:$0xff]
    %v2756 = vld [vmem:[#allocation9 + $0x90] sm:$0xff]
    %v2757 = vld [vmem:[#allocation9 + $0x98] sm:$0xff]
    %v2758 = vld [vmem:[#allocation9 + $0xa0] sm:$0xff]
    %v2759 = vld [vmem:[#allocation9 + $0xa8] sm:$0xff]
    %v2760 = vld [vmem:[#allocation9 + $0xb0] sm:$0xff]
    %v2761 = vld [vmem:[#allocation9 + $0xb8] sm:$0xff]
    %v2762 = vld [vmem:[#allocation9 + $0xc0] sm:$0xff]
    %v2763 = vld [vmem:[#allocation9 + $0xc8] sm:$0xff]
    %v2764 = vld [vmem:[#allocation9 + $0xd0] sm:$0xff]
    %v2765 = vld [vmem:[#allocation9 + $0xd8] sm:$0xff]
    %v2766 = vld [vmem:[#allocation9 + $0xe0] sm:$0xff]
    %v2767 = vld [vmem:[#allocation9 + $0xe8] sm:$0xff]
    %v2768 = vld [vmem:[#allocation9 + $0xf0] sm:$0xff]
    %v2769 = vld [vmem:[#allocation9 + $0xf8] sm:$0xff]
    %v2770 = vld [vmem:[#allocation9 + $0x100] sm:$0xff]
    %v2771 = vld [vmem:[#allocation9 + $0x108] sm:$0xff]
    %v2772 = vld [vmem:[#allocation9 + $0x110] sm:$0xff]
    %v2773 = vld [vmem:[#allocation9 + $0x118] sm:$0xff]
    %v2774 = vld [vmem:[#allocation9 + $0x120] sm:$0xff]
    %v2775 = vld [vmem:[#allocation9 + $0x128] sm:$0xff]
    %v2776 = vld [vmem:[#allocation9 + $0x130] sm:$0xff]
    %v2777 = vld [vmem:[#allocation9 + $0x138] sm:$0xff]
    %v2778 = vld [vmem:[#allocation9 + $0x140] sm:$0xff]
    %v2779 = vld [vmem:[#allocation9 + $0x148] sm:$0xff]
    %v2780 = vld [vmem:[#allocation9 + $0x150] sm:$0xff]
    %v2781 = vld [vmem:[#allocation9 + $0x158] sm:$0xff]
    %v2782 = vld [vmem:[#allocation9 + $0x160] sm:$0xff]
    %v2783 = vld [vmem:[#allocation9 + $0x168] sm:$0xff]
    %v2784 = vld [vmem:[#allocation9 + $0x170] sm:$0xff]
    %v2785 = vld [vmem:[#allocation9 + $0x178] sm:$0xff]
    %v2786 = vld [vmem:[#allocation9 + $0x180] sm:$0xff]
    %v2787 = vld [vmem:[#allocation9 + $0x188] sm:$0xff]
    %v2788 = vld [vmem:[#allocation9 + $0x190] sm:$0xff]
    %v2789 = vld [vmem:[#allocation9 + $0x198] sm:$0xff]
    %v2790 = vld [vmem:[#allocation9 + $0x1a0] sm:$0xff]
    %v2791 = vld [vmem:[#allocation9 + $0x1a8] sm:$0xff]
    %v2792 = vld [vmem:[#allocation9 + $0x1b0] sm:$0xff]
    %v2793 = vld [vmem:[#allocation9 + $0x1b8] sm:$0xff]
    %v2794 = vld [vmem:[#allocation9 + $0x1c0] sm:$0xff]
    %v2795 = vld [vmem:[#allocation9 + $0x1c8] sm:$0xff]
    %v2796 = vld [vmem:[#allocation9 + $0x1d0] sm:$0xff]
    %v2797 = vld [vmem:[#allocation9 + $0x1d8] sm:$0xff]
    %v2798 = vld [vmem:[#allocation9 + $0x1e0] sm:$0xff]
    %v2799 = vld [vmem:[#allocation9 + $0x1e8] sm:$0xff]
    %v2800 = vld [vmem:[#allocation9 + $0x1f0] sm:$0xff]
    %v2801 = vld [vmem:[#allocation9 + $0x1f8] sm:$0xff]
    %v2802 = vld [vmem:[#allocation9 + $0x200] sm:$0xff]
    %v2803 = vld [vmem:[#allocation9 + $0x208] sm:$0xff]
    %v2804 = vld [vmem:[#allocation9 + $0x210] sm:$0xff]
    %v2805 = vld [vmem:[#allocation9 + $0x218] sm:$0xff]
    %v2806 = vld [vmem:[#allocation9 + $0x220] sm:$0xff]
    %v2807 = vld [vmem:[#allocation9 + $0x228] sm:$0xff]
    %v2808 = vld [vmem:[#allocation9 + $0x230] sm:$0xff]
    %v2809 = vld [vmem:[#allocation9 + $0x238] sm:$0xff]
    %v2810 = vld [vmem:[#allocation9 + $0x240] sm:$0xff]
    %v2811 = vld [vmem:[#allocation9 + $0x248] sm:$0xff]
    %v2812 = vld [vmem:[#allocation9 + $0x250] sm:$0xff]
    %v2813 = vld [vmem:[#allocation9 + $0x258] sm:$0xff]
    %v2814 = vld [vmem:[#allocation9 + $0x260] sm:$0xff]
    %v2815 = vld [vmem:[#allocation9 + $0x268] sm:$0xff]
    %v2816 = vld [vmem:[#allocation9 + $0x270] sm:$0xff]
    %v2817 = vld [vmem:[#allocation9 + $0x278] sm:$0xff]
    %v2898 = vunpack.c.l.b16 %v2738
    %v2899 = vunpack.c.h.b16 %v2738
    %v2900 = vunpack.c.l.b16 %v2739
    %v2901 = vunpack.c.h.b16 %v2739
    %v2902 = vunpack.c.l.b16 %v2740
    %v2903 = vunpack.c.h.b16 %v2740
    %v2904 = vunpack.c.l.b16 %v2741
    %v2905 = vunpack.c.h.b16 %v2741
    %v2906 = vunpack.c.l.b16 %v2742
    %v2907 = vunpack.c.h.b16 %v2742
    %v2908 = vunpack.c.l.b16 %v2743
    %v2909 = vunpack.c.h.b16 %v2743
    %v2910 = vunpack.c.l.b16 %v2744
    %v2911 = vunpack.c.h.b16 %v2744
    %v2912 = vunpack.c.l.b16 %v2745
    %v2913 = vunpack.c.h.b16 %v2745
    %v2914 = vunpack.c.l.b16 %v2746
    %v2915 = vunpack.c.h.b16 %v2746
    %v2916 = vunpack.c.l.b16 %v2747
    %v2917 = vunpack.c.h.b16 %v2747
    %v2918 = vunpack.c.l.b16 %v2748
    %v2919 = vunpack.c.h.b16 %v2748
    %v2920 = vunpack.c.l.b16 %v2749
    %v2921 = vunpack.c.h.b16 %v2749
    %v2922 = vunpack.c.l.b16 %v2750
    %v2923 = vunpack.c.h.b16 %v2750
    %v2924 = vunpack.c.l.b16 %v2751
    %v2925 = vunpack.c.h.b16 %v2751
    %v2926 = vunpack.c.l.b16 %v2752
    %v2927 = vunpack.c.h.b16 %v2752
    %v2928 = vunpack.c.l.b16 %v2753
    %v2929 = vunpack.c.h.b16 %v2753
    %v2930 = vunpack.c.l.b16 %v2754
    %v2931 = vunpack.c.h.b16 %v2754
    %v2932 = vunpack.c.l.b16 %v2755
    %v2933 = vunpack.c.h.b16 %v2755
    %v2934 = vunpack.c.l.b16 %v2756
    %v2935 = vunpack.c.h.b16 %v2756
    %v2936 = vunpack.c.l.b16 %v2757
    %v2937 = vunpack.c.h.b16 %v2757
    %v2938 = vunpack.c.l.b16 %v2758
    %v2939 = vunpack.c.h.b16 %v2758
    %v2940 = vunpack.c.l.b16 %v2759
    %v2941 = vunpack.c.h.b16 %v2759
    %v2942 = vunpack.c.l.b16 %v2760
    %v2943 = vunpack.c.h.b16 %v2760
    %v2944 = vunpack.c.l.b16 %v2761
    %v2945 = vunpack.c.h.b16 %v2761
    %v2946 = vunpack.c.l.b16 %v2762
    %v2947 = vunpack.c.h.b16 %v2762
    %v2948 = vunpack.c.l.b16 %v2763
    %v2949 = vunpack.c.h.b16 %v2763
    %v2950 = vunpack.c.l.b16 %v2764
    %v2951 = vunpack.c.h.b16 %v2764
    %v2952 = vunpack.c.l.b16 %v2765
    %v2953 = vunpack.c.h.b16 %v2765
    %v2954 = vunpack.c.l.b16 %v2766
    %v2955 = vunpack.c.h.b16 %v2766
    %v2956 = vunpack.c.l.b16 %v2767
    %v2957 = vunpack.c.h.b16 %v2767
    %v2958 = vunpack.c.l.b16 %v2768
    %v2959 = vunpack.c.h.b16 %v2768
    %v2960 = vunpack.c.l.b16 %v2769
    %v2961 = vunpack.c.h.b16 %v2769
    %v2962 = vunpack.c.l.b16 %v2770
    %v2963 = vunpack.c.h.b16 %v2770
    %v2964 = vunpack.c.l.b16 %v2771
    %v2965 = vunpack.c.h.b16 %v2771
    %v2966 = vunpack.c.l.b16 %v2772
    %v2967 = vunpack.c.h.b16 %v2772
    %v2968 = vunpack.c.l.b16 %v2773
    %v2969 = vunpack.c.h.b16 %v2773
    %v2970 = vunpack.c.l.b16 %v2774
    %v2971 = vunpack.c.h.b16 %v2774
    %v2972 = vunpack.c.l.b16 %v2775
    %v2973 = vunpack.c.h.b16 %v2775
    %v2974 = vunpack.c.l.b16 %v2776
    %v2975 = vunpack.c.h.b16 %v2776
    %v2976 = vunpack.c.l.b16 %v2777
    %v2977 = vunpack.c.h.b16 %v2777
    %v2978 = vunpack.c.l.b16 %v2778
    %v2979 = vunpack.c.h.b16 %v2778
    %v2980 = vunpack.c.l.b16 %v2779
    %v2981 = vunpack.c.h.b16 %v2779
    %v2982 = vunpack.c.l.b16 %v2780
    %v2983 = vunpack.c.h.b16 %v2780
    %v2984 = vunpack.c.l.b16 %v2781
    %v2985 = vunpack.c.h.b16 %v2781
    %v2986 = vunpack.c.l.b16 %v2782
    %v2987 = vunpack.c.h.b16 %v2782
    %v2988 = vunpack.c.l.b16 %v2783
    %v2989 = vunpack.c.h.b16 %v2783
    %v2990 = vunpack.c.l.b16 %v2784
    %v2991 = vunpack.c.h.b16 %v2784
    %v2992 = vunpack.c.l.b16 %v2785
    %v2993 = vunpack.c.h.b16 %v2785
    %v2994 = vunpack.c.l.b16 %v2786
    %v2995 = vunpack.c.h.b16 %v2786
    %v2996 = vunpack.c.l.b16 %v2787
    %v2997 = vunpack.c.h.b16 %v2787
    %v2998 = vunpack.c.l.b16 %v2788
    %v2999 = vunpack.c.h.b16 %v2788
    %v3000 = vunpack.c.l.b16 %v2789
    %v3001 = vunpack.c.h.b16 %v2789
    %v3002 = vunpack.c.l.b16 %v2790
    %v3003 = vunpack.c.h.b16 %v2790
    %v3004 = vunpack.c.l.b16 %v2791
    %v3005 = vunpack.c.h.b16 %v2791
    %v3006 = vunpack.c.l.b16 %v2792
    %v3007 = vunpack.c.h.b16 %v2792
    %v3008 = vunpack.c.l.b16 %v2793
    %v3009 = vunpack.c.h.b16 %v2793
    %v3010 = vunpack.c.l.b16 %v2794
    %v3011 = vunpack.c.h.b16 %v2794
    %v3012 = vunpack.c.l.b16 %v2795
    %v3013 = vunpack.c.h.b16 %v2795
    %v3014 = vunpack.c.l.b16 %v2796
    %v3015 = vunpack.c.h.b16 %v2796
    %v3016 = vunpack.c.l.b16 %v2797
    %v3017 = vunpack.c.h.b16 %v2797
    %v3018 = vunpack.c.l.b16 %v2798
    %v3019 = vunpack.c.h.b16 %v2798
    %v3020 = vunpack.c.l.b16 %v2799
    %v3021 = vunpack.c.h.b16 %v2799
    %v3022 = vunpack.c.l.b16 %v2800
    %v3023 = vunpack.c.h.b16 %v2800
    %v3024 = vunpack.c.l.b16 %v2801
    %v3025 = vunpack.c.h.b16 %v2801
    %v3026 = vunpack.c.l.b16 %v2802
    %v3027 = vunpack.c.h.b16 %v2802
    %v3028 = vunpack.c.l.b16 %v2803
    %v3029 = vunpack.c.h.b16 %v2803
    %v3030 = vunpack.c.l.b16 %v2804
    %v3031 = vunpack.c.h.b16 %v2804
    %v3032 = vunpack.c.l.b16 %v2805
    %v3033 = vunpack.c.h.b16 %v2805
    %v3034 = vunpack.c.l.b16 %v2806
    %v3035 = vunpack.c.h.b16 %v2806
    %v3036 = vunpack.c.l.b16 %v2807
    %v3037 = vunpack.c.h.b16 %v2807
    %v3038 = vunpack.c.l.b16 %v2808
    %v3039 = vunpack.c.h.b16 %v2808
    %v3040 = vunpack.c.l.b16 %v2809
    %v3041 = vunpack.c.h.b16 %v2809
    %v3042 = vunpack.c.l.b16 %v2810
    %v3043 = vunpack.c.h.b16 %v2810
    %v3044 = vunpack.c.l.b16 %v2811
    %v3045 = vunpack.c.h.b16 %v2811
    %v3046 = vunpack.c.l.b16 %v2812
    %v3047 = vunpack.c.h.b16 %v2812
    %v3048 = vunpack.c.l.b16 %v2813
    %v3049 = vunpack.c.h.b16 %v2813
    %v3050 = vunpack.c.l.b16 %v2814
    %v3051 = vunpack.c.h.b16 %v2814
    %v3052 = vunpack.c.l.b16 %v2815
    %v3053 = vunpack.c.h.b16 %v2815
    %v3054 = vunpack.c.l.b16 %v2816
    %v3055 = vunpack.c.h.b16 %v2816
    %v3056 = vunpack.c.l.b16 %v2817
    %v3057 = vunpack.c.h.b16 %v2817
    %v3058 = vpack.c.b16 %v2900, %v2898
    %v3059 = vpack.c.b16 %v2901, %v2899
    %v3060 = vpack.c.b16 %v2904, %v2902
    %v3061 = vpack.c.b16 %v2905, %v2903
    %v3062 = vpack.c.b16 %v2908, %v2906
    %v3063 = vpack.c.b16 %v2909, %v2907
    %v3064 = vpack.c.b16 %v2912, %v2910
    %v3065 = vpack.c.b16 %v2913, %v2911
    %v3066 = vpack.c.b16 %v2916, %v2914
    %v3067 = vpack.c.b16 %v2917, %v2915
    %v3068 = vpack.c.b16 %v2920, %v2918
    %v3069 = vpack.c.b16 %v2921, %v2919
    %v3070 = vpack.c.b16 %v2924, %v2922
    %v3071 = vpack.c.b16 %v2925, %v2923
    %v3072 = vpack.c.b16 %v2928, %v2926
    %v3073 = vpack.c.b16 %v2929, %v2927
    %v3074 = vpack.c.b16 %v2932, %v2930
    %v3075 = vpack.c.b16 %v2933, %v2931
    %v3076 = vpack.c.b16 %v2936, %v2934
    %v3077 = vpack.c.b16 %v2937, %v2935
    %v3078 = vpack.c.b16 %v2940, %v2938
    %v3079 = vpack.c.b16 %v2941, %v2939
    %v3080 = vpack.c.b16 %v2944, %v2942
    %v3081 = vpack.c.b16 %v2945, %v2943
    %v3082 = vpack.c.b16 %v2948, %v2946
    %v3083 = vpack.c.b16 %v2949, %v2947
    %v3084 = vpack.c.b16 %v2952, %v2950
    %v3085 = vpack.c.b16 %v2953, %v2951
    %v3086 = vpack.c.b16 %v2956, %v2954
    %v3087 = vpack.c.b16 %v2957, %v2955
    %v3088 = vpack.c.b16 %v2960, %v2958
    %v3089 = vpack.c.b16 %v2961, %v2959
    %v3090 = vpack.c.b16 %v2964, %v2962
    %v3091 = vpack.c.b16 %v2965, %v2963
    %v3092 = vpack.c.b16 %v2968, %v2966
    %v3093 = vpack.c.b16 %v2969, %v2967
    %v3094 = vpack.c.b16 %v2972, %v2970
    %v3095 = vpack.c.b16 %v2973, %v2971
    %v3096 = vpack.c.b16 %v2976, %v2974
    %v3097 = vpack.c.b16 %v2977, %v2975
    %v3098 = vpack.c.b16 %v2980, %v2978
    %v3099 = vpack.c.b16 %v2981, %v2979
    %v3100 = vpack.c.b16 %v2984, %v2982
    %v3101 = vpack.c.b16 %v2985, %v2983
    %v3102 = vpack.c.b16 %v2988, %v2986
    %v3103 = vpack.c.b16 %v2989, %v2987
    %v3104 = vpack.c.b16 %v2992, %v2990
    %v3105 = vpack.c.b16 %v2993, %v2991
    %v3106 = vpack.c.b16 %v2996, %v2994
    %v3107 = vpack.c.b16 %v2997, %v2995
    %v3108 = vpack.c.b16 %v3000, %v2998
    %v3109 = vpack.c.b16 %v3001, %v2999
    %v3110 = vpack.c.b16 %v3004, %v3002
    %v3111 = vpack.c.b16 %v3005, %v3003
    %v3112 = vpack.c.b16 %v3008, %v3006
    %v3113 = vpack.c.b16 %v3009, %v3007
    %v3114 = vpack.c.b16 %v3012, %v3010
    %v3115 = vpack.c.b16 %v3013, %v3011
    %v3116 = vpack.c.b16 %v3016, %v3014
    %v3117 = vpack.c.b16 %v3017, %v3015
    %v3118 = vpack.c.b16 %v3020, %v3018
    %v3119 = vpack.c.b16 %v3021, %v3019
    %v3120 = vpack.c.b16 %v3024, %v3022
    %v3121 = vpack.c.b16 %v3025, %v3023
    %v3122 = vpack.c.b16 %v3028, %v3026
    %v3123 = vpack.c.b16 %v3029, %v3027
    %v3124 = vpack.c.b16 %v3032, %v3030
    %v3125 = vpack.c.b16 %v3033, %v3031
    %v3126 = vpack.c.b16 %v3036, %v3034
    %v3127 = vpack.c.b16 %v3037, %v3035
    %v3128 = vpack.c.b16 %v3040, %v3038
    %v3129 = vpack.c.b16 %v3041, %v3039
    %v3130 = vpack.c.b16 %v3044, %v3042
    %v3131 = vpack.c.b16 %v3045, %v3043
    %v3132 = vpack.c.b16 %v3048, %v3046
    %v3133 = vpack.c.b16 %v3049, %v3047
    %v3134 = vpack.c.b16 %v3052, %v3050
    %v3135 = vpack.c.b16 %v3053, %v3051
    %v3136 = vpack.c.b16 %v3056, %v3054
    %v3137 = vpack.c.b16 %v3057, %v3055
    %3218 = vmatprep.subr.bf16.mxu0 %v3073
    %3219 = vmatpush1.bf16.msra.mxu0 %v3072
    %3220 = vmatprep.subr.bf16.mxu0 %v3071
    %3221 = vmatpush1.bf16.msra.mxu0 %v3070
    %3222 = vmatprep.subr.bf16.mxu0 %v3069
    %3223 = vmatpush1.bf16.msra.mxu0 %v3068
    %3224 = vmatprep.subr.bf16.mxu0 %v3067
    %3225 = vmatpush1.bf16.msra.mxu0 %v3066
    %3226 = vmatprep.subr.bf16.mxu0 %v3065
    %3227 = vmatpush1.bf16.msra.mxu0 %v3064
    %3228 = vmatprep.subr.bf16.mxu0 %v3063
    %3229 = vmatpush1.bf16.msra.mxu0 %v3062
    %3230 = vmatprep.subr.bf16.mxu0 %v3061
    %3231 = vmatpush1.bf16.msra.mxu0 %v3060
    %3232 = vmatprep.subr.bf16.mxu0 %v3059
    %3233 = vmatpush1.bf16.msra.mxu0 %v3058
    %3234 = vmatprep.subr.bf16.mxu0 %v3089
    %3235 = vmatpush2.bf16.msra.mxu0 %v3088
    %3236 = vmatprep.subr.bf16.mxu0 %v3087
    %3237 = vmatpush2.bf16.msra.mxu0 %v3086
    %3238 = vmatprep.subr.bf16.mxu0 %v3085
    %3239 = vmatpush2.bf16.msra.mxu0 %v3084
    %3240 = vmatprep.subr.bf16.mxu0 %v3083
    %3241 = vmatpush2.bf16.msra.mxu0 %v3082
    %3242 = vmatprep.subr.bf16.mxu0 %v3081
    %3243 = vmatpush2.bf16.msra.mxu0 %v3080
    %3244 = vmatprep.subr.bf16.mxu0 %v3079
    %3245 = vmatpush2.bf16.msra.mxu0 %v3078
    %3246 = vmatprep.subr.bf16.mxu0 %v3077
    %3247 = vmatpush2.bf16.msra.mxu0 %v3076
    %3248 = vmatprep.subr.bf16.mxu0 %v3075
    %3249 = vmatpush2.bf16.msra.mxu0 %v3074
    %3250 = vmatprep.mubr.bf16.mxu0 %v2734
    %3251 = vmatmul.mubr.bf16.gmra.mxu0 %v2733
    %v3252 = vpop.f32.mrf.mxu0
    %v3253 = vadd.f32 0.0, %v3252
    %v3254 = vpop.f32.mrf.mxu0
    %v3255 = vadd.f32 0.0, %v3254
    %v3256 = vpop.f32.mrf.mxu0
    %v3257 = vadd.f32 0.0, %v3256
    %v3258 = vpop.f32.mrf.mxu0
    %v3259 = vadd.f32 0.0, %v3258
    %3260 = vdwg.mxu0
    %3261 = vmatprep.subr.bf16.mxu0 %v3105
    %3262 = vmatpush1.bf16.msra.mxu0 %v3104
    %3263 = vmatprep.subr.bf16.mxu0 %v3103
    %3264 = vmatpush1.bf16.msra.mxu0 %v3102
    %3265 = vmatprep.subr.bf16.mxu0 %v3101
    %3266 = vmatpush1.bf16.msra.mxu0 %v3100
    %3267 = vmatprep.subr.bf16.mxu0 %v3099
    %3268 = vmatpush1.bf16.msra.mxu0 %v3098
    %3269 = vmatprep.subr.bf16.mxu0 %v3097
    %3270 = vmatpush1.bf16.msra.mxu0 %v3096
    %3271 = vmatprep.subr.bf16.mxu0 %v3095
    %3272 = vmatpush1.bf16.msra.mxu0 %v3094
    %3273 = vmatprep.subr.bf16.mxu0 %v3093
    %3274 = vmatpush1.bf16.msra.mxu0 %v3092
    %3275 = vmatprep.subr.bf16.mxu0 %v3091
    %3276 = vmatpush1.bf16.msra.mxu0 %v3090
    %3277 = vmatprep.subr.bf16.mxu0 %v3121
    %3278 = vmatpush2.bf16.msra.mxu0 %v3120
    %3279 = vmatprep.subr.bf16.mxu0 %v3119
    %3280 = vmatpush2.bf16.msra.mxu0 %v3118
    %3281 = vmatprep.subr.bf16.mxu0 %v3117
    %3282 = vmatpush2.bf16.msra.mxu0 %v3116
    %3283 = vmatprep.subr.bf16.mxu0 %v3115
    %3284 = vmatpush2.bf16.msra.mxu0 %v3114
    %3285 = vmatprep.subr.bf16.mxu0 %v3113
    %3286 = vmatpush2.bf16.msra.mxu0 %v3112
    %3287 = vmatprep.subr.bf16.mxu0 %v3111
    %3288 = vmatpush2.bf16.msra.mxu0 %v3110
    %3289 = vmatprep.subr.bf16.mxu0 %v3109
    %3290 = vmatpush2.bf16.msra.mxu0 %v3108
    %3291 = vmatprep.subr.bf16.mxu0 %v3107
    %3292 = vmatpush2.bf16.msra.mxu0 %v3106
    %3293 = vmatprep.mubr.bf16.mxu0 %v2736
    %3294 = vmatmul.mubr.bf16.gmra.mxu0 %v2735
    %v3295 = vpop.f32.mrf.mxu0
    %v3296 = vadd.f32 %v3253, %v3295
    %v3297 = vpop.f32.mrf.mxu0
    %v3298 = vadd.f32 %v3255, %v3297
    %v3299 = vpop.f32.mrf.mxu0
    %v3300 = vadd.f32 %v3257, %v3299
    %v3301 = vpop.f32.mrf.mxu0
    %v3302 = vadd.f32 %v3259, %v3301
    %3303 = vdwg.mxu0
    %3304 = vmatprep.subr.bf16.mxu0 %v3137
    %3305 = vmatpush1.bf16.msra.mxu0 %v3136
    %3306 = vmatprep.subr.bf16.mxu0 %v3135
    %3307 = vmatpush1.bf16.msra.mxu0 %v3134
    %3308 = vmatprep.subr.bf16.mxu0 %v3133
    %3309 = vmatpush1.bf16.msra.mxu0 %v3132
    %3310 = vmatprep.subr.bf16.mxu0 %v3131
    %3311 = vmatpush1.bf16.msra.mxu0 %v3130
    %3312 = vmatprep.subr.bf16.mxu0 %v3129
    %3313 = vmatpush1.bf16.msra.mxu0 %v3128
    %3314 = vmatprep.subr.bf16.mxu0 %v3127
    %3315 = vmatpush1.bf16.msra.mxu0 %v3126
    %3316 = vmatprep.subr.bf16.mxu0 %v3125
    %3317 = vmatpush1.bf16.msra.mxu0 %v3124
    %3318 = vmatprep.subr.bf16.mxu0 %v3123
    %3319 = vmatpush1.bf16.msra.mxu0 %v3122
    %3320 = vmatprep.subr.bf16.mxu0 0
    %3321 = vmatpush2.bf16.msra.mxu0 0
    %3322 = vmatprep.subr.bf16.mxu0 0
    %3323 = vmatpush2.bf16.msra.mxu0 0
    %3324 = vmatprep.subr.bf16.mxu0 0
    %3325 = vmatpush2.bf16.msra.mxu0 0
    %3326 = vmatprep.subr.bf16.mxu0 0
    %3327 = vmatpush2.bf16.msra.mxu0 0
    %3328 = vmatprep.subr.bf16.mxu0 0
    %3329 = vmatpush2.bf16.msra.mxu0 0
    %3330 = vmatprep.subr.bf16.mxu0 0
    %3331 = vmatpush2.bf16.msra.mxu0 0
    %3332 = vmatprep.subr.bf16.mxu0 0
    %3333 = vmatpush2.bf16.msra.mxu0 0
    %3334 = vmatprep.subr.bf16.mxu0 0
    %3335 = vmatpush2.bf16.msra.mxu0 0
    %3336 = vmatprep.mubr.bf16.mxu0 0
    %3337 = vmatmul.mubr.bf16.gmra.mxu0 %v2737
    %v3338 = vpop.f32.mrf.mxu0
    %v3339 = vadd.f32 %v3296, %v3338
    %v3340 = vpop.f32.mrf.mxu0
    %v3341 = vadd.f32 %v3298, %v3340
    %v3342 = vpop.f32.mrf.mxu0
    %v3343 = vadd.f32 %v3300, %v3342
    %v3344 = vpop.f32.mrf.mxu0
    %v3345 = vadd.f32 %v3302, %v3344
    %3346 = vdwg.mxu0
    %v3347 = vmax.f32 %v3339, %v3341
    %v3348 = vmax.f32 %v3343, %v3345
    %v3349 = vld [vmem:[#allocation11] sm:$0xff]
    %v3350 = vld [vmem:[#allocation11 + $0x8] sm:$0xff]
    %v3352 = vsel %vm1382, %v3349, 0
    %v3355 = vsel %vm1382, %v3350, 0
    %v3358 = vsel %vm1389, %v3348, 0
    %3360 = vmatprep.subr.mxu0 0.0
    %3361 = vmatpush1.msra.mxu0 0.0
    %3362 = vmatprep.subr.mxu0 0.0
    %3363 = vmatpush1.msra.mxu0 0.0
    %3364 = vmatprep.subr.mxu0 0.0
    %3365 = vmatpush1.msra.mxu0 0.0
    %3366 = vmatprep.subr.mxu0 0.0
    %3367 = vmatpush1.msra.mxu0 0.0
    %3368 = vmatprep.subr.mxu0 0.0
    %3369 = vmatpush1.msra.mxu0 0.0
    %3370 = vmatprep.subr.mxu0 0.0
    %3371 = vmatpush1.msra.mxu0 0.0
    %3372 = vmatprep.subr.mxu0 0.0
    %3373 = vmatpush1.msra.mxu0 0.0
    %3374 = vmatprep.subr.mxu0 0.0
    %3375 = vmatpush1.msra.mxu0 0.0
    %3376 = vmatprep.subr.mxu0 0.0
    %3377 = vmatpush1.msra.mxu0 0.0
    %3378 = vmatprep.subr.mxu0 0.0
    %3379 = vmatpush1.msra.mxu0 0.0
    %3380 = vmatprep.subr.mxu0 0.0
    %3381 = vmatpush1.msra.mxu0 0.0
    %3382 = vmatprep.subr.mxu0 0.0
    %3383 = vmatpush1.msra.mxu0 0.0
    %3384 = vmatprep.subr.mxu0 0.0
    %3385 = vmatpush1.msra.mxu0 0.0
    %3386 = vmatprep.subr.mxu0 0.0
    %3387 = vmatpush1.msra.mxu0 0.0
    %3388 = vmatprep.subr.mxu0 0.0
    %3389 = vmatpush1.msra.mxu0 %v3358
    %3390 = vmatprep.subr.mxu0 0.0
    %3391 = vmatpush1.msra.mxu0 %v3347
    %3392 = vmatprep.subr.mxu0 0.0
    %3393 = vmatpush2.msra.mxu0 0.0
    %3394 = vmatprep.subr.mxu0 0.0
    %3395 = vmatpush2.msra.mxu0 0.0
    %3396 = vmatprep.subr.mxu0 0.0
    %3397 = vmatpush2.msra.mxu0 0.0
    %3398 = vmatprep.subr.mxu0 0.0
    %3399 = vmatpush2.msra.mxu0 0.0
    %3400 = vmatprep.subr.mxu0 0.0
    %3401 = vmatpush2.msra.mxu0 0.0
    %3402 = vmatprep.subr.mxu0 0.0
    %3403 = vmatpush2.msra.mxu0 0.0
    %3404 = vmatprep.subr.mxu0 0.0
    %3405 = vmatpush2.msra.mxu0 0.0
    %3406 = vmatprep.subr.mxu0 0.0
    %3407 = vmatpush2.msra.mxu0 0.0
    %3408 = vmatprep.subr.mxu0 0.0
    %3409 = vmatpush2.msra.mxu0 0.0
    %3410 = vmatprep.subr.mxu0 0.0
    %3411 = vmatpush2.msra.mxu0 0.0
    %3412 = vmatprep.subr.mxu0 0.0
    %3413 = vmatpush2.msra.mxu0 0.0
    %3414 = vmatprep.subr.mxu0 0.0
    %3415 = vmatpush2.msra.mxu0 0.0
    %3416 = vmatprep.subr.mxu0 0.0
    %3417 = vmatpush2.msra.mxu0 0.0
    %3418 = vmatprep.subr.mxu0 0.0
    %3419 = vmatpush2.msra.mxu0 0.0
    %3420 = vmatprep.subr.mxu0 0.0
    %3421 = vmatpush2.msra.mxu0 0.0
    %3422 = vmatprep.subr.mxu0 0.0
    %3423 = vmatpush2.msra.mxu0 0.0
    %3424 = vmatprep.mubr.f32.mxu0 0.0
    %3425 = vmatmul.mubr.f32.gmra.mxu0 %v3352
    %v3426 = vpop.f32.mrf.mxu0
    %v3427 = vadd.f32 0.0, %v3426
    %v3428 = vpop.f32.mrf.mxu0
    %3429 = vmatprep.mubr.f32.mxu0 0.0
    %3430 = vmatmul.mubr.f32.gmra.mxu0 %v3355
    %v3431 = vpop.f32.mrf.mxu0
    %v3432 = vadd.f32 0.0, %v3431
    %v3433 = vpop.f32.mrf.mxu0
    %3434 = vdwg.mxu0
    %v3435 = vmax.f32 %v3427, %v3432
    %v3436 = vld [vmem:[%s6] sm:$0x1]
    %v3438 = vlaneseq
    %v3439 = vshrl.u32 %v3438, 7
    %v3440 = vsub.s32 0, %v3439
    %v3441 = vrot.slane %v3436, %v3440
    %v3443 = vadd.f32 %v3435, %v3441
    %v3444 = vmax.f32 %v3443, 0.0
    %v3446 = vrot.slane %v3444, 1
    %v3448 = vrot.slane %v3444, 2
    %v3450 = vrot.slane %v3444, 3
    %v3452 = vrot.slane %v3444, 4
    %v3454 = vpack.c.bf16 %v3444, %v3444
    %v3455 = vpack.c.bf16 %v3446, %v3446
    %v3456 = vpack.c.bf16 %v3448, %v3448
    %v3457 = vpack.c.bf16 %v3450, %v3450
    %v3458 = vpack.c.bf16 %v3452, %v3452
    %v3459 = vld [vmem:[#allocation12] sm:$0xf]
    %v3460 = vld [vmem:[#allocation12 + $0x4] sm:$0xf]
    %v3461 = vld [vmem:[#allocation12 + $0x8] sm:$0xf]
    %v3462 = vld [vmem:[#allocation12 + $0xc] sm:$0xf]
    %v3463 = vld [vmem:[#allocation12 + $0x10] sm:$0xf]
    %v3464 = vld [vmem:[#allocation12 + $0x14] sm:$0xf]
    %v3465 = vld [vmem:[#allocation12 + $0x18] sm:$0xf]
    %v3466 = vld [vmem:[#allocation12 + $0x1c] sm:$0xf]
    %v3467 = vld [vmem:[#allocation12 + $0x20] sm:$0xf]
    %v3468 = vld [vmem:[#allocation12 + $0x24] sm:$0xf]
    %v3469 = vld [vmem:[#allocation12 + $0x28] sm:$0xf]
    %v3470 = vld [vmem:[#allocation12 + $0x2c] sm:$0xf]
    %v3471 = vld [vmem:[#allocation12 + $0x30] sm:$0xf]
    %v3472 = vld [vmem:[#allocation12 + $0x34] sm:$0xf]
    %v3473 = vld [vmem:[#allocation12 + $0x38] sm:$0xf]
    %v3474 = vld [vmem:[#allocation12 + $0x3c] sm:$0xf]
    %v3475 = vld [vmem:[#allocation12 + $0x40] sm:$0xf]
    %v3476 = vld [vmem:[#allocation12 + $0x44] sm:$0xf]
    %v3477 = vld [vmem:[#allocation12 + $0x48] sm:$0xf]
    %v3478 = vld [vmem:[#allocation12 + $0x4c] sm:$0xf]
    %v3479 = vld [vmem:[#allocation12 + $0x50] sm:$0xf]
    %v3480 = vld [vmem:[#allocation12 + $0x54] sm:$0xf]
    %v3481 = vld [vmem:[#allocation12 + $0x58] sm:$0xf]
    %v3482 = vld [vmem:[#allocation12 + $0x5c] sm:$0xf]
    %v3483 = vld [vmem:[#allocation12 + $0x60] sm:$0xf]
    %v3484 = vld [vmem:[#allocation12 + $0x64] sm:$0xf]
    %v3485 = vld [vmem:[#allocation12 + $0x68] sm:$0xf]
    %v3486 = vld [vmem:[#allocation12 + $0x6c] sm:$0xf]
    %v3487 = vld [vmem:[#allocation12 + $0x70] sm:$0xf]
    %v3488 = vld [vmem:[#allocation12 + $0x74] sm:$0xf]
    %v3489 = vld [vmem:[#allocation12 + $0x78] sm:$0xf]
    %v3490 = vld [vmem:[#allocation12 + $0x7c] sm:$0xf]
    %v3491 = vld [vmem:[#allocation12 + $0x80] sm:$0xf]
    %v3492 = vld [vmem:[#allocation12 + $0x84] sm:$0xf]
    %v3493 = vld [vmem:[#allocation12 + $0x88] sm:$0xf]
    %v3494 = vld [vmem:[#allocation12 + $0x8c] sm:$0xf]
    %v3495 = vld [vmem:[#allocation12 + $0x90] sm:$0xf]
    %v3496 = vld [vmem:[#allocation12 + $0x94] sm:$0xf]
    %v3497 = vld [vmem:[#allocation12 + $0x98] sm:$0xf]
    %v3498 = vld [vmem:[#allocation12 + $0x9c] sm:$0xf]
    %v3499 = vld [vmem:[#allocation12 + $0xa0] sm:$0xf]
    %v3500 = vld [vmem:[#allocation12 + $0xa4] sm:$0xf]
    %v3501 = vld [vmem:[#allocation12 + $0xa8] sm:$0xf]
    %v3502 = vld [vmem:[#allocation12 + $0xac] sm:$0xf]
    %v3503 = vld [vmem:[#allocation12 + $0xb0] sm:$0xf]
    %v3504 = vld [vmem:[#allocation12 + $0xb4] sm:$0xf]
    %v3505 = vld [vmem:[#allocation12 + $0xb8] sm:$0xf]
    %v3506 = vld [vmem:[#allocation12 + $0xbc] sm:$0xf]
    %v3507 = vld [vmem:[#allocation12 + $0xc0] sm:$0xf]
    %v3508 = vld [vmem:[#allocation12 + $0xc4] sm:$0xf]
    %v3509 = vld [vmem:[#allocation12 + $0xc8] sm:$0xf]
    %v3510 = vld [vmem:[#allocation12 + $0xcc] sm:$0xf]
    %v3511 = vld [vmem:[#allocation12 + $0xd0] sm:$0xf]
    %v3512 = vld [vmem:[#allocation12 + $0xd4] sm:$0xf]
    %v3513 = vld [vmem:[#allocation12 + $0xd8] sm:$0xf]
    %v3514 = vld [vmem:[#allocation12 + $0xdc] sm:$0xf]
    %v3515 = vld [vmem:[#allocation12 + $0xe0] sm:$0xf]
    %v3516 = vld [vmem:[#allocation12 + $0xe4] sm:$0xf]
    %v3517 = vld [vmem:[#allocation12 + $0xe8] sm:$0xf]
    %v3518 = vld [vmem:[#allocation12 + $0xec] sm:$0xf]
    %v3519 = vld [vmem:[#allocation12 + $0xf0] sm:$0xf]
    %v3520 = vld [vmem:[#allocation12 + $0xf4] sm:$0xf]
    %v3521 = vld [vmem:[#allocation12 + $0xf8] sm:$0xf]
    %v3522 = vld [vmem:[#allocation12 + $0xfc] sm:$0xf]
    %v3523 = vld [vmem:[#allocation12 + $0x100] sm:$0xf]
    %v3524 = vld [vmem:[#allocation12 + $0x104] sm:$0xf]
    %v3525 = vld [vmem:[#allocation12 + $0x108] sm:$0xf]
    %v3526 = vld [vmem:[#allocation12 + $0x10c] sm:$0xf]
    %v3527 = vld [vmem:[#allocation12 + $0x110] sm:$0xf]
    %v3528 = vld [vmem:[#allocation12 + $0x114] sm:$0xf]
    %v3529 = vld [vmem:[#allocation12 + $0x118] sm:$0xf]
    %v3530 = vld [vmem:[#allocation12 + $0x11c] sm:$0xf]
    %v3531 = vld [vmem:[#allocation12 + $0x120] sm:$0xf]
    %v3532 = vld [vmem:[#allocation12 + $0x124] sm:$0xf]
    %v3533 = vld [vmem:[#allocation12 + $0x128] sm:$0xf]
    %v3534 = vld [vmem:[#allocation12 + $0x12c] sm:$0xf]
    %v3535 = vld [vmem:[#allocation12 + $0x130] sm:$0xf]
    %v3536 = vld [vmem:[#allocation12 + $0x134] sm:$0xf]
    %v3537 = vld [vmem:[#allocation12 + $0x138] sm:$0xf]
    %v3538 = vld [vmem:[#allocation12 + $0x13c] sm:$0xf]
    %v3539 = vld [vmem:[%s8] sm:$0x1]
    %v3620 = vunpack.c.l.b16 %v3459
    %v3621 = vunpack.c.l.b16 %v3460
    %v3622 = vunpack.c.l.b16 %v3461
    %v3623 = vunpack.c.l.b16 %v3462
    %v3624 = vunpack.c.l.b16 %v3463
    %v3625 = vunpack.c.l.b16 %v3464
    %v3626 = vunpack.c.l.b16 %v3465
    %v3627 = vunpack.c.l.b16 %v3466
    %v3628 = vunpack.c.l.b16 %v3467
    %v3629 = vunpack.c.l.b16 %v3468
    %v3630 = vunpack.c.l.b16 %v3469
    %v3631 = vunpack.c.l.b16 %v3470
    %v3632 = vunpack.c.l.b16 %v3471
    %v3633 = vunpack.c.l.b16 %v3472
    %v3634 = vunpack.c.l.b16 %v3473
    %v3635 = vunpack.c.l.b16 %v3474
    %v3636 = vunpack.c.l.b16 %v3475
    %v3637 = vunpack.c.l.b16 %v3476
    %v3638 = vunpack.c.l.b16 %v3477
    %v3639 = vunpack.c.l.b16 %v3478
    %v3640 = vunpack.c.l.b16 %v3479
    %v3641 = vunpack.c.l.b16 %v3480
    %v3642 = vunpack.c.l.b16 %v3481
    %v3643 = vunpack.c.l.b16 %v3482
    %v3644 = vunpack.c.l.b16 %v3483
    %v3645 = vunpack.c.l.b16 %v3484
    %v3646 = vunpack.c.l.b16 %v3485
    %v3647 = vunpack.c.l.b16 %v3486
    %v3648 = vunpack.c.l.b16 %v3487
    %v3649 = vunpack.c.l.b16 %v3488
    %v3650 = vunpack.c.l.b16 %v3489
    %v3651 = vunpack.c.l.b16 %v3490
    %v3652 = vunpack.c.l.b16 %v3491
    %v3653 = vunpack.c.l.b16 %v3492
    %v3654 = vunpack.c.l.b16 %v3493
    %v3655 = vunpack.c.l.b16 %v3494
    %v3656 = vunpack.c.l.b16 %v3495
    %v3657 = vunpack.c.l.b16 %v3496
    %v3658 = vunpack.c.l.b16 %v3497
    %v3659 = vunpack.c.l.b16 %v3498
    %v3660 = vunpack.c.l.b16 %v3499
    %v3661 = vunpack.c.l.b16 %v3500
    %v3662 = vunpack.c.l.b16 %v3501
    %v3663 = vunpack.c.l.b16 %v3502
    %v3664 = vunpack.c.l.b16 %v3503
    %v3665 = vunpack.c.l.b16 %v3504
    %v3666 = vunpack.c.l.b16 %v3505
    %v3667 = vunpack.c.l.b16 %v3506
    %v3668 = vunpack.c.l.b16 %v3507
    %v3669 = vunpack.c.l.b16 %v3508
    %v3670 = vunpack.c.l.b16 %v3509
    %v3671 = vunpack.c.l.b16 %v3510
    %v3672 = vunpack.c.l.b16 %v3511
    %v3673 = vunpack.c.l.b16 %v3512
    %v3674 = vunpack.c.l.b16 %v3513
    %v3675 = vunpack.c.l.b16 %v3514
    %v3676 = vunpack.c.l.b16 %v3515
    %v3677 = vunpack.c.l.b16 %v3516
    %v3678 = vunpack.c.l.b16 %v3517
    %v3679 = vunpack.c.l.b16 %v3518
    %v3680 = vunpack.c.l.b16 %v3519
    %v3681 = vunpack.c.l.b16 %v3520
    %v3682 = vunpack.c.l.b16 %v3521
    %v3683 = vunpack.c.l.b16 %v3522
    %v3684 = vunpack.c.l.b16 %v3523
    %v3685 = vunpack.c.l.b16 %v3524
    %v3686 = vunpack.c.l.b16 %v3525
    %v3687 = vunpack.c.l.b16 %v3526
    %v3688 = vunpack.c.l.b16 %v3527
    %v3689 = vunpack.c.l.b16 %v3528
    %v3690 = vunpack.c.l.b16 %v3529
    %v3691 = vunpack.c.l.b16 %v3530
    %v3692 = vunpack.c.l.b16 %v3531
    %v3693 = vunpack.c.l.b16 %v3532
    %v3694 = vunpack.c.l.b16 %v3533
    %v3695 = vunpack.c.l.b16 %v3534
    %v3696 = vunpack.c.l.b16 %v3535
    %v3697 = vunpack.c.l.b16 %v3536
    %v3698 = vunpack.c.l.b16 %v3537
    %v3699 = vunpack.c.l.b16 %v3538
    %v3700 = vpack.c.b16 %v3621, %v3620
    %v3701 = vpack.c.b16 %v3623, %v3622
    %v3702 = vpack.c.b16 %v3625, %v3624
    %v3703 = vpack.c.b16 %v3627, %v3626
    %v3704 = vpack.c.b16 %v3629, %v3628
    %v3705 = vpack.c.b16 %v3631, %v3630
    %v3706 = vpack.c.b16 %v3633, %v3632
    %v3707 = vpack.c.b16 %v3635, %v3634
    %v3708 = vpack.c.b16 %v3637, %v3636
    %v3709 = vpack.c.b16 %v3639, %v3638
    %v3710 = vpack.c.b16 %v3641, %v3640
    %v3711 = vpack.c.b16 %v3643, %v3642
    %v3712 = vpack.c.b16 %v3645, %v3644
    %v3713 = vpack.c.b16 %v3647, %v3646
    %v3714 = vpack.c.b16 %v3649, %v3648
    %v3715 = vpack.c.b16 %v3651, %v3650
    %v3716 = vpack.c.b16 %v3653, %v3652
    %v3717 = vpack.c.b16 %v3655, %v3654
    %v3718 = vpack.c.b16 %v3657, %v3656
    %v3719 = vpack.c.b16 %v3659, %v3658
    %v3720 = vpack.c.b16 %v3661, %v3660
    %v3721 = vpack.c.b16 %v3663, %v3662
    %v3722 = vpack.c.b16 %v3665, %v3664
    %v3723 = vpack.c.b16 %v3667, %v3666
    %v3724 = vpack.c.b16 %v3669, %v3668
    %v3725 = vpack.c.b16 %v3671, %v3670
    %v3726 = vpack.c.b16 %v3673, %v3672
    %v3727 = vpack.c.b16 %v3675, %v3674
    %v3728 = vpack.c.b16 %v3677, %v3676
    %v3729 = vpack.c.b16 %v3679, %v3678
    %v3730 = vpack.c.b16 %v3681, %v3680
    %v3731 = vpack.c.b16 %v3683, %v3682
    %v3732 = vpack.c.b16 %v3685, %v3684
    %v3733 = vpack.c.b16 %v3687, %v3686
    %v3734 = vpack.c.b16 %v3689, %v3688
    %v3735 = vpack.c.b16 %v3691, %v3690
    %v3736 = vpack.c.b16 %v3693, %v3692
    %v3737 = vpack.c.b16 %v3695, %v3694
    %v3738 = vpack.c.b16 %v3697, %v3696
    %v3739 = vpack.c.b16 %v3699, %v3698
    %3780 = vmatprep.subr.bf16.mxu0 0
    %3781 = vmatpush1.bf16.msra.mxu0 %v3707
    %3782 = vmatprep.subr.bf16.mxu0 0
    %3783 = vmatpush1.bf16.msra.mxu0 %v3706
    %3784 = vmatprep.subr.bf16.mxu0 0
    %3785 = vmatpush1.bf16.msra.mxu0 %v3705
    %3786 = vmatprep.subr.bf16.mxu0 0
    %3787 = vmatpush1.bf16.msra.mxu0 %v3704
    %3788 = vmatprep.subr.bf16.mxu0 0
    %3789 = vmatpush1.bf16.msra.mxu0 %v3703
    %3790 = vmatprep.subr.bf16.mxu0 0
    %3791 = vmatpush1.bf16.msra.mxu0 %v3702
    %3792 = vmatprep.subr.bf16.mxu0 0
    %3793 = vmatpush1.bf16.msra.mxu0 %v3701
    %3794 = vmatprep.subr.bf16.mxu0 0
    %3795 = vmatpush1.bf16.msra.mxu0 %v3700
    %3796 = vmatprep.subr.bf16.mxu0 0
    %3797 = vmatpush2.bf16.msra.mxu0 %v3715
    %3798 = vmatprep.subr.bf16.mxu0 0
    %3799 = vmatpush2.bf16.msra.mxu0 %v3714
    %3800 = vmatprep.subr.bf16.mxu0 0
    %3801 = vmatpush2.bf16.msra.mxu0 %v3713
    %3802 = vmatprep.subr.bf16.mxu0 0
    %3803 = vmatpush2.bf16.msra.mxu0 %v3712
    %3804 = vmatprep.subr.bf16.mxu0 0
    %3805 = vmatpush2.bf16.msra.mxu0 %v3711
    %3806 = vmatprep.subr.bf16.mxu0 0
    %3807 = vmatpush2.bf16.msra.mxu0 %v3710
    %3808 = vmatprep.subr.bf16.mxu0 0
    %3809 = vmatpush2.bf16.msra.mxu0 %v3709
    %3810 = vmatprep.subr.bf16.mxu0 0
    %3811 = vmatpush2.bf16.msra.mxu0 %v3708
    %3812 = vmatprep.mubr.bf16.mxu0 %v3455
    %3813 = vmatmul.mubr.bf16.gmra.mxu0 %v3454
    %v3814 = vpop.f32.mrf.mxu0
    %v3815 = vadd.f32 %v3539, %v3814
    %v3816 = vpop.f32.mrf.mxu0
    %v3817 = vpop.f32.mrf.mxu0
    %v3818 = vpop.f32.mrf.mxu0
    %3819 = vdwg.mxu0
    %3820 = vmatprep.subr.bf16.mxu0 0
    %3821 = vmatpush1.bf16.msra.mxu0 %v3723
    %3822 = vmatprep.subr.bf16.mxu0 0
    %3823 = vmatpush1.bf16.msra.mxu0 %v3722
    %3824 = vmatprep.subr.bf16.mxu0 0
    %3825 = vmatpush1.bf16.msra.mxu0 %v3721
    %3826 = vmatprep.subr.bf16.mxu0 0
    %3827 = vmatpush1.bf16.msra.mxu0 %v3720
    %3828 = vmatprep.subr.bf16.mxu0 0
    %3829 = vmatpush1.bf16.msra.mxu0 %v3719
    %3830 = vmatprep.subr.bf16.mxu0 0
    %3831 = vmatpush1.bf16.msra.mxu0 %v3718
    %3832 = vmatprep.subr.bf16.mxu0 0
    %3833 = vmatpush1.bf16.msra.mxu0 %v3717
    %3834 = vmatprep.subr.bf16.mxu0 0
    %3835 = vmatpush1.bf16.msra.mxu0 %v3716
    %3836 = vmatprep.subr.bf16.mxu0 0
    %3837 = vmatpush2.bf16.msra.mxu0 %v3731
    %3838 = vmatprep.subr.bf16.mxu0 0
    %3839 = vmatpush2.bf16.msra.mxu0 %v3730
    %3840 = vmatprep.subr.bf16.mxu0 0
    %3841 = vmatpush2.bf16.msra.mxu0 %v3729
    %3842 = vmatprep.subr.bf16.mxu0 0
    %3843 = vmatpush2.bf16.msra.mxu0 %v3728
    %3844 = vmatprep.subr.bf16.mxu0 0
    %3845 = vmatpush2.bf16.msra.mxu0 %v3727
    %3846 = vmatprep.subr.bf16.mxu0 0
    %3847 = vmatpush2.bf16.msra.mxu0 %v3726
    %3848 = vmatprep.subr.bf16.mxu0 0
    %3849 = vmatpush2.bf16.msra.mxu0 %v3725
    %3850 = vmatprep.subr.bf16.mxu0 0
    %3851 = vmatpush2.bf16.msra.mxu0 %v3724
    %3852 = vmatprep.mubr.bf16.mxu0 %v3457
    %3853 = vmatmul.mubr.bf16.gmra.mxu0 %v3456
    %v3854 = vpop.f32.mrf.mxu0
    %v3855 = vadd.f32 %v3815, %v3854
    %v3856 = vpop.f32.mrf.mxu0
    %v3857 = vpop.f32.mrf.mxu0
    %v3858 = vpop.f32.mrf.mxu0
    %3859 = vdwg.mxu0
    %3860 = vmatprep.subr.bf16.mxu0 0
    %3861 = vmatpush1.bf16.msra.mxu0 %v3739
    %3862 = vmatprep.subr.bf16.mxu0 0
    %3863 = vmatpush1.bf16.msra.mxu0 %v3738
    %3864 = vmatprep.subr.bf16.mxu0 0
    %3865 = vmatpush1.bf16.msra.mxu0 %v3737
    %3866 = vmatprep.subr.bf16.mxu0 0
    %3867 = vmatpush1.bf16.msra.mxu0 %v3736
    %3868 = vmatprep.subr.bf16.mxu0 0
    %3869 = vmatpush1.bf16.msra.mxu0 %v3735
    %3870 = vmatprep.subr.bf16.mxu0 0
    %3871 = vmatpush1.bf16.msra.mxu0 %v3734
    %3872 = vmatprep.subr.bf16.mxu0 0
    %3873 = vmatpush1.bf16.msra.mxu0 %v3733
    %3874 = vmatprep.subr.bf16.mxu0 0
    %3875 = vmatpush1.bf16.msra.mxu0 %v3732
    %3876 = vmatprep.subr.bf16.mxu0 0
    %3877 = vmatpush2.bf16.msra.mxu0 0
    %3878 = vmatprep.subr.bf16.mxu0 0
    %3879 = vmatpush2.bf16.msra.mxu0 0
    %3880 = vmatprep.subr.bf16.mxu0 0
    %3881 = vmatpush2.bf16.msra.mxu0 0
    %3882 = vmatprep.subr.bf16.mxu0 0
    %3883 = vmatpush2.bf16.msra.mxu0 0
    %3884 = vmatprep.subr.bf16.mxu0 0
    %3885 = vmatpush2.bf16.msra.mxu0 0
    %3886 = vmatprep.subr.bf16.mxu0 0
    %3887 = vmatpush2.bf16.msra.mxu0 0
    %3888 = vmatprep.subr.bf16.mxu0 0
    %3889 = vmatpush2.bf16.msra.mxu0 0
    %3890 = vmatprep.subr.bf16.mxu0 0
    %3891 = vmatpush2.bf16.msra.mxu0 0
    %3892 = vmatprep.mubr.bf16.mxu0 0
    %3893 = vmatmul.mubr.bf16.gmra.mxu0 %v3458
    %v3894 = vpop.f32.mrf.mxu0
    %v3895 = vadd.f32 %v3855, %v3894
    %v3896 = vpop.f32.mrf.mxu0
    %v3897 = vpop.f32.mrf.mxu0
    %v3898 = vpop.f32.mrf.mxu0
    %3899 = vdwg.mxu0
    %v3900 = vmax.f32 %v3895, 0.0
    %v3901 = vpack.c.bf16 %v3900, %v3900
    %v3902 = vld [vmem:[#allocation14] sm:$0xf]
    %v3903 = vld [vmem:[#allocation14 + $0x4] sm:$0xf]
    %v3904 = vld [vmem:[#allocation14 + $0x8] sm:$0xf]
    %v3905 = vld [vmem:[#allocation14 + $0xc] sm:$0xf]
    %v3906 = vld [vmem:[#allocation14 + $0x10] sm:$0xf]
    %v3907 = vld [vmem:[#allocation14 + $0x14] sm:$0xf]
    %v3908 = vld [vmem:[#allocation14 + $0x18] sm:$0xf]
    %v3909 = vld [vmem:[#allocation14 + $0x1c] sm:$0xf]
    %v3910 = vld [vmem:[#allocation14 + $0x20] sm:$0xf]
    %v3911 = vld [vmem:[#allocation14 + $0x24] sm:$0xf]
    %v3912 = vld [vmem:[#allocation14 + $0x28] sm:$0xf]
    %v3913 = vld [vmem:[#allocation14 + $0x2c] sm:$0xf]
    %v3914 = vld [vmem:[#allocation14 + $0x30] sm:$0xf]
    %v3915 = vld [vmem:[#allocation14 + $0x34] sm:$0xf]
    %v3916 = vld [vmem:[#allocation14 + $0x38] sm:$0xf]
    %v3917 = vld [vmem:[#allocation14 + $0x3c] sm:$0xf]
    %v3918 = vld [vmem:[%s10] sm:$0x1]
    %v3935 = vunpack.c.l.b16 %v3902
    %v3936 = vunpack.c.l.b16 %v3903
    %v3937 = vunpack.c.l.b16 %v3904
    %v3938 = vunpack.c.l.b16 %v3905
    %v3939 = vunpack.c.l.b16 %v3906
    %v3940 = vunpack.c.l.b16 %v3907
    %v3941 = vunpack.c.l.b16 %v3908
    %v3942 = vunpack.c.l.b16 %v3909
    %v3943 = vunpack.c.l.b16 %v3910
    %v3944 = vunpack.c.l.b16 %v3911
    %v3945 = vunpack.c.l.b16 %v3912
    %v3946 = vunpack.c.l.b16 %v3913
    %v3947 = vunpack.c.l.b16 %v3914
    %v3948 = vunpack.c.l.b16 %v3915
    %v3949 = vunpack.c.l.b16 %v3916
    %v3950 = vunpack.c.l.b16 %v3917
    %v3951 = vpack.c.b16 %v3936, %v3935
    %v3952 = vpack.c.b16 %v3938, %v3937
    %v3953 = vpack.c.b16 %v3940, %v3939
    %v3954 = vpack.c.b16 %v3942, %v3941
    %v3955 = vpack.c.b16 %v3944, %v3943
    %v3956 = vpack.c.b16 %v3946, %v3945
    %v3957 = vpack.c.b16 %v3948, %v3947
    %v3958 = vpack.c.b16 %v3950, %v3949
    %3967 = vmatprep.subr.bf16.mxu0 0
    %3968 = vmatpush1.bf16.msra.mxu0 %v3958
    %3969 = vmatprep.subr.bf16.mxu0 0
    %3970 = vmatpush1.bf16.msra.mxu0 %v3957
    %3971 = vmatprep.subr.bf16.mxu0 0
    %3972 = vmatpush1.bf16.msra.mxu0 %v3956
    %3973 = vmatprep.subr.bf16.mxu0 0
    %3974 = vmatpush1.bf16.msra.mxu0 %v3955
    %3975 = vmatprep.subr.bf16.mxu0 0
    %3976 = vmatpush1.bf16.msra.mxu0 %v3954
    %3977 = vmatprep.subr.bf16.mxu0 0
    %3978 = vmatpush1.bf16.msra.mxu0 %v3953
    %3979 = vmatprep.subr.bf16.mxu0 0
    %3980 = vmatpush1.bf16.msra.mxu0 %v3952
    %3981 = vmatprep.subr.bf16.mxu0 0
    %3982 = vmatpush1.bf16.msra.mxu0 %v3951
    %3983 = vmatprep.subr.bf16.mxu0 0
    %3984 = vmatpush2.bf16.msra.mxu0 0
    %3985 = vmatprep.subr.bf16.mxu0 0
    %3986 = vmatpush2.bf16.msra.mxu0 0
    %3987 = vmatprep.subr.bf16.mxu0 0
    %3988 = vmatpush2.bf16.msra.mxu0 0
    %3989 = vmatprep.subr.bf16.mxu0 0
    %3990 = vmatpush2.bf16.msra.mxu0 0
    %3991 = vmatprep.subr.bf16.mxu0 0
    %3992 = vmatpush2.bf16.msra.mxu0 0
    %3993 = vmatprep.subr.bf16.mxu0 0
    %3994 = vmatpush2.bf16.msra.mxu0 0
    %3995 = vmatprep.subr.bf16.mxu0 0
    %3996 = vmatpush2.bf16.msra.mxu0 0
    %3997 = vmatprep.subr.bf16.mxu0 0
    %3998 = vmatpush2.bf16.msra.mxu0 0
    %3999 = vmatprep.mubr.bf16.mxu0 0
    %4000 = vmatmul.mubr.bf16.gmra.mxu0 %v3901
    %v4001 = vpop.f32.mrf.mxu0
    %v4002 = vadd.f32 %v3918, %v4001
    %v4003 = vpop.f32.mrf.mxu0
    %v4004 = vpop.f32.mrf.mxu0
    %v4005 = vpop.f32.mrf.mxu0
    %4006 = vdwg.mxu0
    %v4007 = vmax.f32 %v4002, 0.0
    %v4008 = vld [vmem:[#allocation15] sm:$0xff]
    %v4009 = vld [vmem:[#allocation15 + $0x8] sm:$0xff]
    %v4010 = vld [vmem:[#allocation15 + $0x10] sm:$0xff]
    %v4011 = vld [vmem:[#allocation15 + $0x18] sm:$0xff]
    %v4012 = vld [vmem:[#allocation15 + $0x20] sm:$0xff]
    %v4013 = vld [vmem:[#allocation15 + $0x28] sm:$0xff]
    %v4014 = vld [vmem:[#allocation15 + $0x30] sm:$0xff]
    %v4015 = vld [vmem:[#allocation15 + $0x38] sm:$0xff]
    %v4016 = vld [vmem:[#allocation15 + $0x40] sm:$0xff]
    %v4017 = vld [vmem:[#allocation15 + $0x48] sm:$0xff]
    %v4018 = vld [vmem:[#allocation15 + $0x50] sm:$0xff]
    %v4019 = vld [vmem:[#allocation15 + $0x58] sm:$0xff]
    %v4020 = vld [vmem:[#allocation15 + $0x60] sm:$0xff]
    %v4021 = vld [vmem:[#allocation15 + $0x68] sm:$0xff]
    %v4022 = vld [vmem:[#allocation15 + $0x70] sm:$0xff]
    %v4023 = vld [vmem:[#allocation15 + $0x78] sm:$0xff]
    %v4024 = vld [vmem:[%s12] sm:$0x1]
    %4025 = vmatprep.subr.mxu0 0.0
    %4026 = vmatpush1.msra.mxu0 %v4023
    %4027 = vmatprep.subr.mxu0 0.0
    %4028 = vmatpush1.msra.mxu0 %v4022
    %4029 = vmatprep.subr.mxu0 0.0
    %4030 = vmatpush1.msra.mxu0 %v4021
    %4031 = vmatprep.subr.mxu0 0.0
    %4032 = vmatpush1.msra.mxu0 %v4020
    %4033 = vmatprep.subr.mxu0 0.0
    %4034 = vmatpush1.msra.mxu0 %v4019
    %4035 = vmatprep.subr.mxu0 0.0
    %4036 = vmatpush1.msra.mxu0 %v4018
    %4037 = vmatprep.subr.mxu0 0.0
    %4038 = vmatpush1.msra.mxu0 %v4017
    %4039 = vmatprep.subr.mxu0 0.0
    %4040 = vmatpush1.msra.mxu0 %v4016
    %4041 = vmatprep.subr.mxu0 0.0
    %4042 = vmatpush1.msra.mxu0 %v4015
    %4043 = vmatprep.subr.mxu0 0.0
    %4044 = vmatpush1.msra.mxu0 %v4014
    %4045 = vmatprep.subr.mxu0 0.0
    %4046 = vmatpush1.msra.mxu0 %v4013
    %4047 = vmatprep.subr.mxu0 0.0
    %4048 = vmatpush1.msra.mxu0 %v4012
    %4049 = vmatprep.subr.mxu0 0.0
    %4050 = vmatpush1.msra.mxu0 %v4011
    %4051 = vmatprep.subr.mxu0 0.0
    %4052 = vmatpush1.msra.mxu0 %v4010
    %4053 = vmatprep.subr.mxu0 0.0
    %4054 = vmatpush1.msra.mxu0 %v4009
    %4055 = vmatprep.subr.mxu0 0.0
    %4056 = vmatpush1.msra.mxu0 %v4008
    %4057 = vmatprep.subr.mxu0 0.0
    %4058 = vmatpush2.msra.mxu0 0.0
    %4059 = vmatprep.subr.mxu0 0.0
    %4060 = vmatpush2.msra.mxu0 0.0
    %4061 = vmatprep.subr.mxu0 0.0
    %4062 = vmatpush2.msra.mxu0 0.0
    %4063 = vmatprep.subr.mxu0 0.0
    %4064 = vmatpush2.msra.mxu0 0.0
    %4065 = vmatprep.subr.mxu0 0.0
    %4066 = vmatpush2.msra.mxu0 0.0
    %4067 = vmatprep.subr.mxu0 0.0
    %4068 = vmatpush2.msra.mxu0 0.0
    %4069 = vmatprep.subr.mxu0 0.0
    %4070 = vmatpush2.msra.mxu0 0.0
    %4071 = vmatprep.subr.mxu0 0.0
    %4072 = vmatpush2.msra.mxu0 0.0
    %4073 = vmatprep.subr.mxu0 0.0
    %4074 = vmatpush2.msra.mxu0 0.0
    %4075 = vmatprep.subr.mxu0 0.0
    %4076 = vmatpush2.msra.mxu0 0.0
    %4077 = vmatprep.subr.mxu0 0.0
    %4078 = vmatpush2.msra.mxu0 0.0
    %4079 = vmatprep.subr.mxu0 0.0
    %4080 = vmatpush2.msra.mxu0 0.0
    %4081 = vmatprep.subr.mxu0 0.0
    %4082 = vmatpush2.msra.mxu0 0.0
    %4083 = vmatprep.subr.mxu0 0.0
    %4084 = vmatpush2.msra.mxu0 0.0
    %4085 = vmatprep.subr.mxu0 0.0
    %4086 = vmatpush2.msra.mxu0 0.0
    %4087 = vmatprep.subr.mxu0 0.0
    %4088 = vmatpush2.msra.mxu0 0.0
    %4089 = vmatprep.mubr.f32.mxu0 0.0
    %4090 = vmatmul.mubr.f32.gmra.mxu0 %v4007
    %v4091 = vpop.f32.mrf.mxu0
    %v4092 = vadd.f32 %v4024, %v4091
    %v4093 = vpop.f32.mrf.mxu0
    %4094 = vdwg.mxu0
    %4095 = vst [vmem:[#allocation17 + $0x1] sm:$0x1] %v4092
    // Predicated region
    $region86: #{lenet_forward.1} parent=1 // pred_check
      _
    $region87: #{lenet_forward.1} parent=1 // pred_check_branch
      %4097 = sbr.rel (0) target = $region89
    $region88: #{lenet_forward.1} parent=1 // pred_region
      %s4099 = ssub.s32 32, 32
      %4100 = vsyncadd [#allocation5], %s4099
      %s4102 = sshll.u32 [#allocation17], 4
      %s4103 = int_to_ptr.vmem [resolvable:$true] %s4102
      %4105 = dma.vmem_to_hbm [thread:$0]  %s4103, 32, %s13, [#allocation5]
    $region89: #{lenet_forward.1} parent=1 // pred_fallthru
      _
    // Predicated region
    $region90: #{lenet_forward.1} parent=1 // pred_check
      _
    $region91: #{lenet_forward.1} parent=1 // pred_check_branch
      %4107 = sbr.rel (0) target = $region93
    $region92: #{lenet_forward.1} parent=1 // pred_region
      %4108 = dma.done [#allocation5], 32
    $region93: #{lenet_forward.1} parent=1 // pred_fallthru
      _
    %4109 = vsyncpa [#allocation4], 1
    %4110 = vsyncpa [#allocation7], 1
    %4111 = vsyncpa [#allocation10], 1
    %4112 = vsyncpa [#allocation13], 1
    %4113 = vsyncpa [#allocation16], 1
    %4114 = vsyncpa [#allocation5], 1

</llo_original>
